<compile_context>
chip_gen: v5e
topology: v5e:2x2
jax: 0.10.0
libtpu: 0.0.40
codegen_flags: <defaults>
</compile_context>

<pallas_src>
import numpy as np

import jax
import jax.numpy as jnp
from jax import lax
from jax.experimental import pallas as pl
from jax.experimental.pallas import tpu as pltpu

KSIZE = 4  # every conv / conv-transpose in the module is 4x4, stride 2, pad 1


# ---------------------------------------------------------------------------
# Host-side, one-time weight expansion (layout + stride folded into weights).
# ---------------------------------------------------------------------------
def _conv_sel_m(wgt, hin, win):
    """nn.Conv2d(cin, cout, 4, stride=2, padding=1); wgt: (cout, cin, 4, 4)."""
    cout, cin, k, _ = wgt.shape
    oh, ow = hin // 2, win // 2
    sel = np.zeros((k, oh, hin), np.float32)
    for ki in range(k):
        for o in range(oh):
            ih = 2 * o - 1 + ki
            if 0 <= ih < hin:
                sel[ki, o, ih] = 1.0
    m = np.zeros((k, win * cin, ow * cout), np.float32)
    for ki in range(k):
        for o in range(ow):
            for kj in range(k):
                iw = 2 * o - 1 + kj
                if 0 <= iw < win:
                    m[ki, iw * cin:(iw + 1) * cin, o * cout:(o + 1) * cout] += \
                        wgt[:, :, ki, kj].T
    return sel, m, ow, cout


def _convT_sel_m(wgt, hin, win):
    """nn.ConvTranspose2d(cin, cout, 4, stride=2, padding=1); wgt: (cin, cout, 4, 4)."""
    cin, cout, k, _ = wgt.shape
    hout, wout = 2 * hin, 2 * win
    sel = np.zeros((k, hout, hin), np.float32)
    for ky in range(k):
        for ih in range(hin):
            y = 2 * ih - 1 + ky
            if 0 <= y < hout:
                sel[ky, y, ih] = 1.0
    m = np.zeros((k, win * cin, wout * cout), np.float32)
    for ky in range(k):
        for iw in range(win):
            for kx in range(k):
                x = 2 * iw - 1 + kx
                if 0 <= x < wout:
                    m[ky, iw * cin:(iw + 1) * cin, x * cout:(x + 1) * cout] += \
                        wgt[:, :, ky, kx]
    return sel, m, wout, cout


def build_kernel_params(params, height=32, width=32):
    """Expand PyTorch-layout conv/convT weights into MXU-friendly matrices."""
    layers = [
        ("conv1", False), ("conv2", False), ("conv3", False),
        ("deconv1", True), ("deconv2", True), ("deconv3", True),
    ]
    hh, ww = height, width
    sels, ms, bias_rows = [], [], []
    for name, is_t in layers:
        wgt = np.asarray(params[name + "_w"], np.float32)
        b = np.asarray(params[name + "_b"], np.float32)
        if is_t:
            sel, m, w_out, cout = _convT_sel_m(wgt, hh, ww)
            hh, ww = 2 * hh, 2 * ww
        else:
            sel, m, w_out, cout = _conv_sel_m(wgt, hh, ww)
            hh, ww = hh // 2, ww // 2
        sels.append(jnp.asarray(sel, jnp.bfloat16))      # 0/1 -> exact in bf16
        ms.append(jnp.asarray(m, jnp.bfloat16))          # bf16 MXU operands
        bias_rows.append(jnp.asarray(np.tile(b, w_out)[None, :], jnp.float32))
    return {"sel": tuple(sels), "m": tuple(ms), "bias": tuple(bias_rows)}


# ---------------------------------------------------------------------------
# Fused Pallas kernel
# ---------------------------------------------------------------------------
def _layer(x_f32, sel_ref, m_ref, bias_ref):
    """bias + sum_k (Sel_k @ X) @ M_k   (bf16 matmuls, f32 accumulation)."""
    xb = x_f32.astype(jnp.bfloat16)
    acc = bias_ref[...]                                            # (1, N) f32
    for k in range(KSIZE):
        rows = jnp.dot(sel_ref[k], xb,
                       preferred_element_type=jnp.float32)         # row gather
        acc = acc + jnp.dot(rows.astype(jnp.bfloat16), m_ref[k],
                            preferred_element_type=jnp.float32)
    return acc


def _aucifar_kernel(x_ref,
                    s1, m1, b1, s2, m2, b2, s3, m3, b3,
                    s4, m4, b4, s5, m5, b5, s6, m6, b6,
                    enc_ref, dec_ref):
    h = x_ref[0].astype(jnp.float32)                      # (H,   W*3)
    h = jnp.maximum(_layer(h, s1, m1, b1), 0.0)           # (H/2, W/2*12)
    h = jnp.maximum(_layer(h, s2, m2, b2), 0.0)           # (H/4, W/4*24)
    enc = jnp.maximum(_layer(h, s3, m3, b3), 0.0)         # (H/8, W/8*48)
    enc_ref[0] = enc.astype(enc_ref.dtype)
    h = jnp.maximum(_layer(enc, s4, m4, b4), 0.0)         # (H/4, W/4*24)
    h = jnp.maximum(_layer(h, s5, m5, b5), 0.0)           # (H/2, W/2*12)
    dec_ref[0] = jnp.tanh(_layer(h, s6, m6, b6)).astype(dec_ref.dtype)


def aucifar_forward(x_nchw, kparams):
    B, C, H, W = x_nchw.shape
    # NCHW -> row layout (H, W*C): only remaining plain-XLA glue.
    x_rows = jnp.transpose(x_nchw, (0, 2, 3, 1)).reshape(B, H, W * C)
    x_rows = x_rows.astype(jnp.float32)

    sels, ms, biases = kparams["sel"], kparams["m"], kparams["bias"]

    in_specs = [pl.BlockSpec((1, H, W * C), lambda b: (b, 0, 0))]
    args = [x_rows]
    for l in range(6):
        in_specs += [
            pl.BlockSpec(sels[l].shape, lambda b: (0, 0, 0)),
            pl.BlockSpec(ms[l].shape, lambda b: (0, 0, 0)),
            pl.BlockSpec(biases[l].shape, lambda b: (0, 0)),
        ]
        args += [sels[l], ms[l], biases[l]]

    Henc, Wenc, Cenc = H // 8, W // 8, 48
    enc_rows, dec_rows = pl.pallas_call(
        _aucifar_kernel,
        out_shape=(
            jax.ShapeDtypeStruct((B, Henc, Wenc * Cenc), jnp.float32),
            jax.ShapeDtypeStruct((B, H, W * C), jnp.float32),
        ),
        grid=(B,),
        in_specs=in_specs,
        out_specs=(
            pl.BlockSpec((1, Henc, Wenc * Cenc), lambda b: (b, 0, 0)),
            pl.BlockSpec((1, H, W * C), lambda b: (b, 0, 0)),
        ),
        compiler_params=pltpu.CompilerParams(
            dimension_semantics=("parallel",),     # batch across TCs on v7x
            vmem_limit_bytes=32 * 1024 * 1024,     # explicit, ample headroom
        ),
    )(*args)

    encoded = jnp.transpose(enc_rows.reshape(B, Henc, Wenc, Cenc), (0, 3, 1, 2))
    decoded = jnp.transpose(dec_rows.reshape(B, H, W, C), (0, 3, 1, 2))
    return encoded, decoded


# ---------------------------------------------------------------------------
# Pure-JAX (XLA conv) reference for correctness, with matching bf16 rounding.
# ---------------------------------------------------------------------------
def _round_bf16(a):
    return a.astype(jnp.bfloat16).astype(jnp.float32)


def aucifar_reference(x, params):
    def conv(h, w, b):
        y = lax.conv_general_dilated(
            _round_bf16(h), _round_bf16(w), window_strides=(2, 2),
            padding=((1, 1), (1, 1)),
            dimension_numbers=("NCHW", "OIHW", "NCHW"))
        return y + b[None, :, None, None]

    def convT(h, w, b):
        wr = jnp.flip(w, axis=(2, 3)).transpose(1, 0, 2, 3)   # (Cout,Cin,k,k)
        y = lax.conv_general_dilated(
            _round_bf16(h), _round_bf16(wr), window_strides=(1, 1),
            padding=((2, 2), (2, 2)), lhs_dilation=(2, 2),
            dimension_numbers=("NCHW", "OIHW", "NCHW"))
        return y + b[None, :, None, None]

    h = jax.nn.relu(conv(x, params["conv1_w"], params["conv1_b"]))
    h = jax.nn.relu(conv(h, params["conv2_w"], params["conv2_b"]))
    enc = jax.nn.relu(conv(h, params["conv3_w"], params["conv3_b"]))
    h = jax.nn.relu(convT(enc, params["deconv1_w"], params["deconv1_b"]))
    h = jax.nn.relu(convT(h, params["deconv2_w"], params["deconv2_b"]))
    dec = jnp.tanh(convT(h, params["deconv3_w"], params["deconv3_b"]))
    return enc, dec


# ---------------------------------------------------------------------------
# Synthetic parameters with the nn.Module's shapes.
# ---------------------------------------------------------------------------
def init_params(key):
    ks = jax.random.split(key, 12)

    def w(k, shape, fan_in):
        return jax.random.normal(k, shape, jnp.float32) / np.sqrt(fan_in)

    def b(k, n):
        return 0.1 * jax.random.normal(k, (n,), jnp.float32)

    return {
        "conv1_w": w(ks[0], (12, 3, 4, 4), 3 * 16),    "conv1_b": b(ks[1], 12),
        "conv2_w": w(ks[2], (24, 12, 4, 4), 12 * 16),  "conv2_b": b(ks[3], 24),
        "conv3_w": w(ks[4], (48, 24, 4, 4), 24 * 16),  "conv3_b": b(ks[5], 48),
        "deconv1_w": w(ks[6], (48, 24, 4, 4), 48 * 4), "deconv1_b": b(ks[7], 24),
        "deconv2_w": w(ks[8], (24, 12, 4, 4), 24 * 4), "deconv2_b": b(ks[9], 12),
        "deconv3_w": w(ks[10], (12, 3, 4, 4), 12 * 4), "deconv3_b": b(ks[11], 3),
    }


if __name__ == "__main__":
    key = jax.random.PRNGKey(0)
    k_params, k_x = jax.random.split(key)
    params = init_params(k_params)
    x = jax.random.normal(k_x, (2, 3, 32, 32), jnp.float32)   # CIFAR-shaped

    kparams = build_kernel_params(params, height=32, width=32)
    encoded, decoded = jax.jit(aucifar_forward)(x, kparams)
    jax.block_until_ready((encoded, decoded))

    assert encoded.shape == (2, 48, 4, 4) and encoded.dtype == jnp.float32
    assert decoded.shape == (2, 3, 32, 32) and decoded.dtype == jnp.float32

    enc_ref, dec_ref = jax.jit(aucifar_reference)(x, params)
    enc_err = float(jnp.max(jnp.abs(encoded - enc_ref)))
    dec_err = float(jnp.max(jnp.abs(decoded - dec_ref)))
    assert enc_err < 1e-2 and dec_err < 1e-2, (enc_err, dec_err)

    print("KERNEL_OK")
</pallas_src>

<mosaic_0001>
module attributes {stable_mosaic.version = 11 : i64} {
  func.func @_aucifar_kernel(%arg0: i32, %arg1: memref<1x32x96xf32, #tpu.memory_space<vmem>>, %arg2: memref<4x16x32xbf16, #tpu.memory_space<vmem>>, %arg3: memref<4x96x192xbf16, #tpu.memory_space<vmem>>, %arg4: memref<1x192xf32, #tpu.memory_space<vmem>>, %arg5: memref<4x8x16xbf16, #tpu.memory_space<vmem>>, %arg6: memref<4x192x192xbf16, #tpu.memory_space<vmem>>, %arg7: memref<1x192xf32, #tpu.memory_space<vmem>>, %arg8: memref<4x4x8xbf16, #tpu.memory_space<vmem>>, %arg9: memref<4x192x192xbf16, #tpu.memory_space<vmem>>, %arg10: memref<1x192xf32, #tpu.memory_space<vmem>>, %arg11: memref<4x8x4xbf16, #tpu.memory_space<vmem>>, %arg12: memref<4x192x192xbf16, #tpu.memory_space<vmem>>, %arg13: memref<1x192xf32, #tpu.memory_space<vmem>>, %arg14: memref<4x16x8xbf16, #tpu.memory_space<vmem>>, %arg15: memref<4x192x192xbf16, #tpu.memory_space<vmem>>, %arg16: memref<1x192xf32, #tpu.memory_space<vmem>>, %arg17: memref<4x32x16xbf16, #tpu.memory_space<vmem>>, %arg18: memref<4x192x96xbf16, #tpu.memory_space<vmem>>, %arg19: memref<1x96xf32, #tpu.memory_space<vmem>>, %arg20: memref<1x4x192xf32, #tpu.memory_space<vmem>>, %arg21: memref<1x32x96xf32, #tpu.memory_space<vmem>>) attributes {dimension_semantics = [#tpu.dimension_semantics<parallel>], iteration_bounds = array<i64: 2>, scalar_prefetch = 0 : i64, scratch_operands = 0 : i64, tpu.core_type = #tpu.core_type<tc>, window_params = [{transform_indices = @transform_0, window_bounds = array<i64: 1, 32, 96>}, {pipeline_mode = #tpu.pipeline_mode<synchronous>, transform_indices = @transform_1, window_bounds = array<i64: 4, 16, 32>}, {pipeline_mode = #tpu.pipeline_mode<synchronous>, transform_indices = @transform_2, window_bounds = array<i64: 4, 96, 192>}, {pipeline_mode = #tpu.pipeline_mode<synchronous>, transform_indices = @transform_3, window_bounds = array<i64: 1, 192>}, {pipeline_mode = #tpu.pipeline_mode<synchronous>, transform_indices = @transform_4, window_bounds = array<i64: 4, 8, 16>}, {pipeline_mode = #tpu.pipeline_mode<synchronous>, transform_indices = @transform_5, window_bounds = array<i64: 4, 192, 192>}, {pipeline_mode = #tpu.pipeline_mode<synchronous>, transform_indices = @transform_6, window_bounds = array<i64: 1, 192>}, {pipeline_mode = #tpu.pipeline_mode<synchronous>, transform_indices = @transform_7, window_bounds = array<i64: 4, 4, 8>}, {pipeline_mode = #tpu.pipeline_mode<synchronous>, transform_indices = @transform_8, window_bounds = array<i64: 4, 192, 192>}, {pipeline_mode = #tpu.pipeline_mode<synchronous>, transform_indices = @transform_9, window_bounds = array<i64: 1, 192>}, {pipeline_mode = #tpu.pipeline_mode<synchronous>, transform_indices = @transform_10, window_bounds = array<i64: 4, 8, 4>}, {pipeline_mode = #tpu.pipeline_mode<synchronous>, transform_indices = @transform_11, window_bounds = array<i64: 4, 192, 192>}, {pipeline_mode = #tpu.pipeline_mode<synchronous>, transform_indices = @transform_12, window_bounds = array<i64: 1, 192>}, {pipeline_mode = #tpu.pipeline_mode<synchronous>, transform_indices = @transform_13, window_bounds = array<i64: 4, 16, 8>}, {pipeline_mode = #tpu.pipeline_mode<synchronous>, transform_indices = @transform_14, window_bounds = array<i64: 4, 192, 192>}, {pipeline_mode = #tpu.pipeline_mode<synchronous>, transform_indices = @transform_15, window_bounds = array<i64: 1, 192>}, {pipeline_mode = #tpu.pipeline_mode<synchronous>, transform_indices = @transform_16, window_bounds = array<i64: 4, 32, 16>}, {pipeline_mode = #tpu.pipeline_mode<synchronous>, transform_indices = @transform_17, window_bounds = array<i64: 4, 192, 96>}, {pipeline_mode = #tpu.pipeline_mode<synchronous>, transform_indices = @transform_18, window_bounds = array<i64: 1, 96>}, {transform_indices = @transform_19, window_bounds = array<i64: 1, 4, 192>}, {transform_indices = @transform_20, window_bounds = array<i64: 1, 32, 96>}]} {
    %c0 = arith.constant 0 : index
    %c0_0 = arith.constant 0 : index
    %c0_1 = arith.constant 0 : index
    %0 = vector.load %arg1[%c0, %c0_0, %c0_1] : memref<1x32x96xf32, #tpu.memory_space<vmem>>, vector<1x32x96xf32>
    %1 = vector.shape_cast %0 : vector<1x32x96xf32> to vector<32x96xf32>
    %2 = arith.truncf %1 : vector<32x96xf32> to vector<32x96xbf16>
    %c0_2 = arith.constant 0 : index
    %c0_3 = arith.constant 0 : index
    %3 = vector.load %arg4[%c0_2, %c0_3] : memref<1x192xf32, #tpu.memory_space<vmem>>, vector<1x192xf32>
    %c0_4 = arith.constant 0 : index
    %c0_5 = arith.constant 0 : index
    %c0_6 = arith.constant 0 : index
    %4 = vector.load %arg2[%c0_4, %c0_5, %c0_6] : memref<4x16x32xbf16, #tpu.memory_space<vmem>>, vector<1x16x32xbf16>
    %5 = vector.shape_cast %4 : vector<1x16x32xbf16> to vector<16x32xbf16>
    %cst = arith.constant dense<0.000000e+00> : vector<16x96xf32>
    %6 = tpu.matmul %5, %2, %cst {dimension_numbers = #tpu.dot_dimension_numbers<[1], [0], [0], [1], [0, 0, 1, 1], [], []>} : vector<16x32xbf16>, vector<32x96xbf16>, vector<16x96xf32> -> vector<16x96xf32>
    %7 = arith.truncf %6 : vector<16x96xf32> to vector<16x96xbf16>
    %c0_7 = arith.constant 0 : index
    %c0_8 = arith.constant 0 : index
    %c0_9 = arith.constant 0 : index
    %8 = vector.load %arg3[%c0_7, %c0_8, %c0_9] : memref<4x96x192xbf16, #tpu.memory_space<vmem>>, vector<1x96x192xbf16>
    %9 = vector.shape_cast %8 : vector<1x96x192xbf16> to vector<96x192xbf16>
    %cst_10 = arith.constant dense<0.000000e+00> : vector<16x192xf32>
    %10 = tpu.matmul %7, %9, %cst_10 {dimension_numbers = #tpu.dot_dimension_numbers<[1], [0], [0], [1], [0, 0, 1, 1], [], []>} : vector<16x96xbf16>, vector<96x192xbf16>, vector<16x192xf32> -> vector<16x192xf32>
    %11 = vector.broadcast %3 : vector<1x192xf32> to vector<16x192xf32>
    %12 = arith.addf %11, %10 : vector<16x192xf32>
    %c1 = arith.constant 1 : index
    %c0_11 = arith.constant 0 : index
    %c0_12 = arith.constant 0 : index
    %13 = vector.load %arg2[%c1, %c0_11, %c0_12] : memref<4x16x32xbf16, #tpu.memory_space<vmem>>, vector<1x16x32xbf16>
    %14 = vector.shape_cast %13 : vector<1x16x32xbf16> to vector<16x32xbf16>
    %cst_13 = arith.constant dense<0.000000e+00> : vector<16x96xf32>
    %15 = tpu.matmul %14, %2, %cst_13 {dimension_numbers = #tpu.dot_dimension_numbers<[1], [0], [0], [1], [0, 0, 1, 1], [], []>} : vector<16x32xbf16>, vector<32x96xbf16>, vector<16x96xf32> -> vector<16x96xf32>
    %16 = arith.truncf %15 : vector<16x96xf32> to vector<16x96xbf16>
    %c1_14 = arith.constant 1 : index
    %c0_15 = arith.constant 0 : index
    %c0_16 = arith.constant 0 : index
    %17 = vector.load %arg3[%c1_14, %c0_15, %c0_16] : memref<4x96x192xbf16, #tpu.memory_space<vmem>>, vector<1x96x192xbf16>
    %18 = vector.shape_cast %17 : vector<1x96x192xbf16> to vector<96x192xbf16>
    %cst_17 = arith.constant dense<0.000000e+00> : vector<16x192xf32>
    %19 = tpu.matmul %16, %18, %cst_17 {dimension_numbers = #tpu.dot_dimension_numbers<[1], [0], [0], [1], [0, 0, 1, 1], [], []>} : vector<16x96xbf16>, vector<96x192xbf16>, vector<16x192xf32> -> vector<16x192xf32>
    %20 = arith.addf %12, %19 : vector<16x192xf32>
    %c2 = arith.constant 2 : index
    %c0_18 = arith.constant 0 : index
    %c0_19 = arith.constant 0 : index
    %21 = vector.load %arg2[%c2, %c0_18, %c0_19] : memref<4x16x32xbf16, #tpu.memory_space<vmem>>, vector<1x16x32xbf16>
    %22 = vector.shape_cast %21 : vector<1x16x32xbf16> to vector<16x32xbf16>
    %cst_20 = arith.constant dense<0.000000e+00> : vector<16x96xf32>
    %23 = tpu.matmul %22, %2, %cst_20 {dimension_numbers = #tpu.dot_dimension_numbers<[1], [0], [0], [1], [0, 0, 1, 1], [], []>} : vector<16x32xbf16>, vector<32x96xbf16>, vector<16x96xf32> -> vector<16x96xf32>
    %24 = arith.truncf %23 : vector<16x96xf32> to vector<16x96xbf16>
    %c2_21 = arith.constant 2 : index
    %c0_22 = arith.constant 0 : index
    %c0_23 = arith.constant 0 : index
    %25 = vector.load %arg3[%c2_21, %c0_22, %c0_23] : memref<4x96x192xbf16, #tpu.memory_space<vmem>>, vector<1x96x192xbf16>
    %26 = vector.shape_cast %25 : vector<1x96x192xbf16> to vector<96x192xbf16>
    %cst_24 = arith.constant dense<0.000000e+00> : vector<16x192xf32>
    %27 = tpu.matmul %24, %26, %cst_24 {dimension_numbers = #tpu.dot_dimension_numbers<[1], [0], [0], [1], [0, 0, 1, 1], [], []>} : vector<16x96xbf16>, vector<96x192xbf16>, vector<16x192xf32> -> vector<16x192xf32>
    %28 = arith.addf %20, %27 : vector<16x192xf32>
    %c3 = arith.constant 3 : index
    %c0_25 = arith.constant 0 : index
    %c0_26 = arith.constant 0 : index
    %29 = vector.load %arg2[%c3, %c0_25, %c0_26] : memref<4x16x32xbf16, #tpu.memory_space<vmem>>, vector<1x16x32xbf16>
    %30 = vector.shape_cast %29 : vector<1x16x32xbf16> to vector<16x32xbf16>
    %cst_27 = arith.constant dense<0.000000e+00> : vector<16x96xf32>
    %31 = tpu.matmul %30, %2, %cst_27 {dimension_numbers = #tpu.dot_dimension_numbers<[1], [0], [0], [1], [0, 0, 1, 1], [], []>} : vector<16x32xbf16>, vector<32x96xbf16>, vector<16x96xf32> -> vector<16x96xf32>
    %32 = arith.truncf %31 : vector<16x96xf32> to vector<16x96xbf16>
    %c3_28 = arith.constant 3 : index
    %c0_29 = arith.constant 0 : index
    %c0_30 = arith.constant 0 : index
    %33 = vector.load %arg3[%c3_28, %c0_29, %c0_30] : memref<4x96x192xbf16, #tpu.memory_space<vmem>>, vector<1x96x192xbf16>
    %34 = vector.shape_cast %33 : vector<1x96x192xbf16> to vector<96x192xbf16>
    %cst_31 = arith.constant dense<0.000000e+00> : vector<16x192xf32>
    %35 = tpu.matmul %32, %34, %cst_31 {dimension_numbers = #tpu.dot_dimension_numbers<[1], [0], [0], [1], [0, 0, 1, 1], [], []>} : vector<16x96xbf16>, vector<96x192xbf16>, vector<16x192xf32> -> vector<16x192xf32>
    %36 = arith.addf %28, %35 : vector<16x192xf32>
    %cst_32 = arith.constant 0.000000e+00 : f32
    %37 = vector.broadcast %cst_32 : f32 to vector<16x192xf32>
    %38 = arith.maximumf %36, %37 : vector<16x192xf32>
    %39 = arith.truncf %38 : vector<16x192xf32> to vector<16x192xbf16>
    %c0_33 = arith.constant 0 : index
    %c0_34 = arith.constant 0 : index
    %40 = vector.load %arg7[%c0_33, %c0_34] : memref<1x192xf32, #tpu.memory_space<vmem>>, vector<1x192xf32>
    %c0_35 = arith.constant 0 : index
    %c0_36 = arith.constant 0 : index
    %c0_37 = arith.constant 0 : index
    %41 = vector.load %arg5[%c0_35, %c0_36, %c0_37] : memref<4x8x16xbf16, #tpu.memory_space<vmem>>, vector<1x8x16xbf16>
    %42 = vector.shape_cast %41 : vector<1x8x16xbf16> to vector<8x16xbf16>
    %cst_38 = arith.constant dense<0.000000e+00> : vector<8x192xf32>
    %43 = tpu.matmul %42, %39, %cst_38 {dimension_numbers = #tpu.dot_dimension_numbers<[1], [0], [0], [1], [0, 0, 1, 1], [], []>} : vector<8x16xbf16>, vector<16x192xbf16>, vector<8x192xf32> -> vector<8x192xf32>
    %44 = arith.truncf %43 : vector<8x192xf32> to vector<8x192xbf16>
    %c0_39 = arith.constant 0 : index
    %c0_40 = arith.constant 0 : index
    %c0_41 = arith.constant 0 : index
    %45 = vector.load %arg6[%c0_39, %c0_40, %c0_41] : memref<4x192x192xbf16, #tpu.memory_space<vmem>>, vector<1x192x192xbf16>
    %46 = vector.shape_cast %45 : vector<1x192x192xbf16> to vector<192x192xbf16>
    %cst_42 = arith.constant dense<0.000000e+00> : vector<8x192xf32>
    %47 = tpu.matmul %44, %46, %cst_42 {dimension_numbers = #tpu.dot_dimension_numbers<[1], [0], [0], [1], [0, 0, 1, 1], [], []>} : vector<8x192xbf16>, vector<192x192xbf16>, vector<8x192xf32> -> vector<8x192xf32>
    %48 = vector.broadcast %40 : vector<1x192xf32> to vector<8x192xf32>
    %49 = arith.addf %48, %47 : vector<8x192xf32>
    %c1_43 = arith.constant 1 : index
    %c0_44 = arith.constant 0 : index
    %c0_45 = arith.constant 0 : index
    %50 = vector.load %arg5[%c1_43, %c0_44, %c0_45] : memref<4x8x16xbf16, #tpu.memory_space<vmem>>, vector<1x8x16xbf16>
    %51 = vector.shape_cast %50 : vector<1x8x16xbf16> to vector<8x16xbf16>
    %cst_46 = arith.constant dense<0.000000e+00> : vector<8x192xf32>
    %52 = tpu.matmul %51, %39, %cst_46 {dimension_numbers = #tpu.dot_dimension_numbers<[1], [0], [0], [1], [0, 0, 1, 1], [], []>} : vector<8x16xbf16>, vector<16x192xbf16>, vector<8x192xf32> -> vector<8x192xf32>
    %53 = arith.truncf %52 : vector<8x192xf32> to vector<8x192xbf16>
    %c1_47 = arith.constant 1 : index
    %c0_48 = arith.constant 0 : index
    %c0_49 = arith.constant 0 : index
    %54 = vector.load %arg6[%c1_47, %c0_48, %c0_49] : memref<4x192x192xbf16, #tpu.memory_space<vmem>>, vector<1x192x192xbf16>
    %55 = vector.shape_cast %54 : vector<1x192x192xbf16> to vector<192x192xbf16>
    %cst_50 = arith.constant dense<0.000000e+00> : vector<8x192xf32>
    %56 = tpu.matmul %53, %55, %cst_50 {dimension_numbers = #tpu.dot_dimension_numbers<[1], [0], [0], [1], [0, 0, 1, 1], [], []>} : vector<8x192xbf16>, vector<192x192xbf16>, vector<8x192xf32> -> vector<8x192xf32>
    %57 = arith.addf %49, %56 : vector<8x192xf32>
    %c2_51 = arith.constant 2 : index
    %c0_52 = arith.constant 0 : index
    %c0_53 = arith.constant 0 : index
    %58 = vector.load %arg5[%c2_51, %c0_52, %c0_53] : memref<4x8x16xbf16, #tpu.memory_space<vmem>>, vector<1x8x16xbf16>
    %59 = vector.shape_cast %58 : vector<1x8x16xbf16> to vector<8x16xbf16>
    %cst_54 = arith.constant dense<0.000000e+00> : vector<8x192xf32>
    %60 = tpu.matmul %59, %39, %cst_54 {dimension_numbers = #tpu.dot_dimension_numbers<[1], [0], [0], [1], [0, 0, 1, 1], [], []>} : vector<8x16xbf16>, vector<16x192xbf16>, vector<8x192xf32> -> vector<8x192xf32>
    %61 = arith.truncf %60 : vector<8x192xf32> to vector<8x192xbf16>
    %c2_55 = arith.constant 2 : index
    %c0_56 = arith.constant 0 : index
    %c0_57 = arith.constant 0 : index
    %62 = vector.load %arg6[%c2_55, %c0_56, %c0_57] : memref<4x192x192xbf16, #tpu.memory_space<vmem>>, vector<1x192x192xbf16>
    %63 = vector.shape_cast %62 : vector<1x192x192xbf16> to vector<192x192xbf16>
    %cst_58 = arith.constant dense<0.000000e+00> : vector<8x192xf32>
    %64 = tpu.matmul %61, %63, %cst_58 {dimension_numbers = #tpu.dot_dimension_numbers<[1], [0], [0], [1], [0, 0, 1, 1], [], []>} : vector<8x192xbf16>, vector<192x192xbf16>, vector<8x192xf32> -> vector<8x192xf32>
    %65 = arith.addf %57, %64 : vector<8x192xf32>
    %c3_59 = arith.constant 3 : index
    %c0_60 = arith.constant 0 : index
    %c0_61 = arith.constant 0 : index
    %66 = vector.load %arg5[%c3_59, %c0_60, %c0_61] : memref<4x8x16xbf16, #tpu.memory_space<vmem>>, vector<1x8x16xbf16>
    %67 = vector.shape_cast %66 : vector<1x8x16xbf16> to vector<8x16xbf16>
    %cst_62 = arith.constant dense<0.000000e+00> : vector<8x192xf32>
    %68 = tpu.matmul %67, %39, %cst_62 {dimension_numbers = #tpu.dot_dimension_numbers<[1], [0], [0], [1], [0, 0, 1, 1], [], []>} : vector<8x16xbf16>, vector<16x192xbf16>, vector<8x192xf32> -> vector<8x192xf32>
    %69 = arith.truncf %68 : vector<8x192xf32> to vector<8x192xbf16>
    %c3_63 = arith.constant 3 : index
    %c0_64 = arith.constant 0 : index
    %c0_65 = arith.constant 0 : index
    %70 = vector.load %arg6[%c3_63, %c0_64, %c0_65] : memref<4x192x192xbf16, #tpu.memory_space<vmem>>, vector<1x192x192xbf16>
    %71 = vector.shape_cast %70 : vector<1x192x192xbf16> to vector<192x192xbf16>
    %cst_66 = arith.constant dense<0.000000e+00> : vector<8x192xf32>
    %72 = tpu.matmul %69, %71, %cst_66 {dimension_numbers = #tpu.dot_dimension_numbers<[1], [0], [0], [1], [0, 0, 1, 1], [], []>} : vector<8x192xbf16>, vector<192x192xbf16>, vector<8x192xf32> -> vector<8x192xf32>
    %73 = arith.addf %65, %72 : vector<8x192xf32>
    %cst_67 = arith.constant 0.000000e+00 : f32
    %74 = vector.broadcast %cst_67 : f32 to vector<8x192xf32>
    %75 = arith.maximumf %73, %74 : vector<8x192xf32>
    %76 = arith.truncf %75 : vector<8x192xf32> to vector<8x192xbf16>
    %c0_68 = arith.constant 0 : index
    %c0_69 = arith.constant 0 : index
    %77 = vector.load %arg10[%c0_68, %c0_69] : memref<1x192xf32, #tpu.memory_space<vmem>>, vector<1x192xf32>
    %c0_70 = arith.constant 0 : index
    %c0_71 = arith.constant 0 : index
    %c0_72 = arith.constant 0 : index
    %78 = vector.load %arg8[%c0_70, %c0_71, %c0_72] : memref<4x4x8xbf16, #tpu.memory_space<vmem>>, vector<1x4x8xbf16>
    %79 = vector.shape_cast %78 : vector<1x4x8xbf16> to vector<4x8xbf16>
    %cst_73 = arith.constant dense<0.000000e+00> : vector<4x192xf32>
    %80 = tpu.matmul %79, %76, %cst_73 {dimension_numbers = #tpu.dot_dimension_numbers<[1], [0], [0], [1], [0, 0, 1, 1], [], []>} : vector<4x8xbf16>, vector<8x192xbf16>, vector<4x192xf32> -> vector<4x192xf32>
    %81 = arith.truncf %80 : vector<4x192xf32> to vector<4x192xbf16>
    %c0_74 = arith.constant 0 : index
    %c0_75 = arith.constant 0 : index
    %c0_76 = arith.constant 0 : index
    %82 = vector.load %arg9[%c0_74, %c0_75, %c0_76] : memref<4x192x192xbf16, #tpu.memory_space<vmem>>, vector<1x192x192xbf16>
    %83 = vector.shape_cast %82 : vector<1x192x192xbf16> to vector<192x192xbf16>
    %cst_77 = arith.constant dense<0.000000e+00> : vector<4x192xf32>
    %84 = tpu.matmul %81, %83, %cst_77 {dimension_numbers = #tpu.dot_dimension_numbers<[1], [0], [0], [1], [0, 0, 1, 1], [], []>} : vector<4x192xbf16>, vector<192x192xbf16>, vector<4x192xf32> -> vector<4x192xf32>
    %85 = vector.broadcast %77 : vector<1x192xf32> to vector<4x192xf32>
    %86 = arith.addf %85, %84 : vector<4x192xf32>
    %c1_78 = arith.constant 1 : index
    %c0_79 = arith.constant 0 : index
    %c0_80 = arith.constant 0 : index
    %87 = vector.load %arg8[%c1_78, %c0_79, %c0_80] : memref<4x4x8xbf16, #tpu.memory_space<vmem>>, vector<1x4x8xbf16>
    %88 = vector.shape_cast %87 : vector<1x4x8xbf16> to vector<4x8xbf16>
    %cst_81 = arith.constant dense<0.000000e+00> : vector<4x192xf32>
    %89 = tpu.matmul %88, %76, %cst_81 {dimension_numbers = #tpu.dot_dimension_numbers<[1], [0], [0], [1], [0, 0, 1, 1], [], []>} : vector<4x8xbf16>, vector<8x192xbf16>, vector<4x192xf32> -> vector<4x192xf32>
    %90 = arith.truncf %89 : vector<4x192xf32> to vector<4x192xbf16>
    %c1_82 = arith.constant 1 : index
    %c0_83 = arith.constant 0 : index
    %c0_84 = arith.constant 0 : index
    %91 = vector.load %arg9[%c1_82, %c0_83, %c0_84] : memref<4x192x192xbf16, #tpu.memory_space<vmem>>, vector<1x192x192xbf16>
    %92 = vector.shape_cast %91 : vector<1x192x192xbf16> to vector<192x192xbf16>
    %cst_85 = arith.constant dense<0.000000e+00> : vector<4x192xf32>
    %93 = tpu.matmul %90, %92, %cst_85 {dimension_numbers = #tpu.dot_dimension_numbers<[1], [0], [0], [1], [0, 0, 1, 1], [], []>} : vector<4x192xbf16>, vector<192x192xbf16>, vector<4x192xf32> -> vector<4x192xf32>
    %94 = arith.addf %86, %93 : vector<4x192xf32>
    %c2_86 = arith.constant 2 : index
    %c0_87 = arith.constant 0 : index
    %c0_88 = arith.constant 0 : index
    %95 = vector.load %arg8[%c2_86, %c0_87, %c0_88] : memref<4x4x8xbf16, #tpu.memory_space<vmem>>, vector<1x4x8xbf16>
    %96 = vector.shape_cast %95 : vector<1x4x8xbf16> to vector<4x8xbf16>
    %cst_89 = arith.constant dense<0.000000e+00> : vector<4x192xf32>
    %97 = tpu.matmul %96, %76, %cst_89 {dimension_numbers = #tpu.dot_dimension_numbers<[1], [0], [0], [1], [0, 0, 1, 1], [], []>} : vector<4x8xbf16>, vector<8x192xbf16>, vector<4x192xf32> -> vector<4x192xf32>
    %98 = arith.truncf %97 : vector<4x192xf32> to vector<4x192xbf16>
    %c2_90 = arith.constant 2 : index
    %c0_91 = arith.constant 0 : index
    %c0_92 = arith.constant 0 : index
    %99 = vector.load %arg9[%c2_90, %c0_91, %c0_92] : memref<4x192x192xbf16, #tpu.memory_space<vmem>>, vector<1x192x192xbf16>
    %100 = vector.shape_cast %99 : vector<1x192x192xbf16> to vector<192x192xbf16>
    %cst_93 = arith.constant dense<0.000000e+00> : vector<4x192xf32>
    %101 = tpu.matmul %98, %100, %cst_93 {dimension_numbers = #tpu.dot_dimension_numbers<[1], [0], [0], [1], [0, 0, 1, 1], [], []>} : vector<4x192xbf16>, vector<192x192xbf16>, vector<4x192xf32> -> vector<4x192xf32>
    %102 = arith.addf %94, %101 : vector<4x192xf32>
    %c3_94 = arith.constant 3 : index
    %c0_95 = arith.constant 0 : index
    %c0_96 = arith.constant 0 : index
    %103 = vector.load %arg8[%c3_94, %c0_95, %c0_96] : memref<4x4x8xbf16, #tpu.memory_space<vmem>>, vector<1x4x8xbf16>
    %104 = vector.shape_cast %103 : vector<1x4x8xbf16> to vector<4x8xbf16>
    %cst_97 = arith.constant dense<0.000000e+00> : vector<4x192xf32>
    %105 = tpu.matmul %104, %76, %cst_97 {dimension_numbers = #tpu.dot_dimension_numbers<[1], [0], [0], [1], [0, 0, 1, 1], [], []>} : vector<4x8xbf16>, vector<8x192xbf16>, vector<4x192xf32> -> vector<4x192xf32>
    %106 = arith.truncf %105 : vector<4x192xf32> to vector<4x192xbf16>
    %c3_98 = arith.constant 3 : index
    %c0_99 = arith.constant 0 : index
    %c0_100 = arith.constant 0 : index
    %107 = vector.load %arg9[%c3_98, %c0_99, %c0_100] : memref<4x192x192xbf16, #tpu.memory_space<vmem>>, vector<1x192x192xbf16>
    %108 = vector.shape_cast %107 : vector<1x192x192xbf16> to vector<192x192xbf16>
    %cst_101 = arith.constant dense<0.000000e+00> : vector<4x192xf32>
    %109 = tpu.matmul %106, %108, %cst_101 {dimension_numbers = #tpu.dot_dimension_numbers<[1], [0], [0], [1], [0, 0, 1, 1], [], []>} : vector<4x192xbf16>, vector<192x192xbf16>, vector<4x192xf32> -> vector<4x192xf32>
    %110 = arith.addf %102, %109 : vector<4x192xf32>
    %cst_102 = arith.constant 0.000000e+00 : f32
    %111 = vector.broadcast %cst_102 : f32 to vector<4x192xf32>
    %112 = arith.maximumf %110, %111 : vector<4x192xf32>
    %c0_103 = arith.constant 0 : index
    %c0_104 = arith.constant 0 : index
    %c0_105 = arith.constant 0 : index
    %113 = vector.load %arg20[%c0_103, %c0_104, %c0_105] : memref<1x4x192xf32, #tpu.memory_space<vmem>>, vector<1x4x192xf32>
    %114 = vector.shape_cast %113 : vector<1x4x192xf32> to vector<4x192xf32>
    %115 = vector.shape_cast %112 : vector<4x192xf32> to vector<1x4x192xf32>
    tpu.vector_store %arg20[%c0_103, %c0_104, %c0_105], %115 {strides = array<i32>} : memref<1x4x192xf32, #tpu.memory_space<vmem>>, vector<1x4x192xf32>,
    %116 = arith.truncf %112 : vector<4x192xf32> to vector<4x192xbf16>
    %c0_106 = arith.constant 0 : index
    %c0_107 = arith.constant 0 : index
    %117 = vector.load %arg13[%c0_106, %c0_107] : memref<1x192xf32, #tpu.memory_space<vmem>>, vector<1x192xf32>
    %c0_108 = arith.constant 0 : index
    %c0_109 = arith.constant 0 : index
    %c0_110 = arith.constant 0 : index
    %118 = vector.load %arg11[%c0_108, %c0_109, %c0_110] : memref<4x8x4xbf16, #tpu.memory_space<vmem>>, vector<1x8x4xbf16>
    %119 = vector.shape_cast %118 : vector<1x8x4xbf16> to vector<8x4xbf16>
    %cst_111 = arith.constant dense<0.000000e+00> : vector<8x192xf32>
    %120 = tpu.matmul %119, %116, %cst_111 {dimension_numbers = #tpu.dot_dimension_numbers<[1], [0], [0], [1], [0, 0, 1, 1], [], []>} : vector<8x4xbf16>, vector<4x192xbf16>, vector<8x192xf32> -> vector<8x192xf32>
    %121 = arith.truncf %120 : vector<8x192xf32> to vector<8x192xbf16>
    %c0_112 = arith.constant 0 : index
    %c0_113 = arith.constant 0 : index
    %c0_114 = arith.constant 0 : index
    %122 = vector.load %arg12[%c0_112, %c0_113, %c0_114] : memref<4x192x192xbf16, #tpu.memory_space<vmem>>, vector<1x192x192xbf16>
    %123 = vector.shape_cast %122 : vector<1x192x192xbf16> to vector<192x192xbf16>
    %cst_115 = arith.constant dense<0.000000e+00> : vector<8x192xf32>
    %124 = tpu.matmul %121, %123, %cst_115 {dimension_numbers = #tpu.dot_dimension_numbers<[1], [0], [0], [1], [0, 0, 1, 1], [], []>} : vector<8x192xbf16>, vector<192x192xbf16>, vector<8x192xf32> -> vector<8x192xf32>
    %125 = vector.broadcast %117 : vector<1x192xf32> to vector<8x192xf32>
    %126 = arith.addf %125, %124 : vector<8x192xf32>
    %c1_116 = arith.constant 1 : index
    %c0_117 = arith.constant 0 : index
    %c0_118 = arith.constant 0 : index
    %127 = vector.load %arg11[%c1_116, %c0_117, %c0_118] : memref<4x8x4xbf16, #tpu.memory_space<vmem>>, vector<1x8x4xbf16>
    %128 = vector.shape_cast %127 : vector<1x8x4xbf16> to vector<8x4xbf16>
    %cst_119 = arith.constant dense<0.000000e+00> : vector<8x192xf32>
    %129 = tpu.matmul %128, %116, %cst_119 {dimension_numbers = #tpu.dot_dimension_numbers<[1], [0], [0], [1], [0, 0, 1, 1], [], []>} : vector<8x4xbf16>, vector<4x192xbf16>, vector<8x192xf32> -> vector<8x192xf32>
    %130 = arith.truncf %129 : vector<8x192xf32> to vector<8x192xbf16>
    %c1_120 = arith.constant 1 : index
    %c0_121 = arith.constant 0 : index
    %c0_122 = arith.constant 0 : index
    %131 = vector.load %arg12[%c1_120, %c0_121, %c0_122] : memref<4x192x192xbf16, #tpu.memory_space<vmem>>, vector<1x192x192xbf16>
    %132 = vector.shape_cast %131 : vector<1x192x192xbf16> to vector<192x192xbf16>
    %cst_123 = arith.constant dense<0.000000e+00> : vector<8x192xf32>
    %133 = tpu.matmul %130, %132, %cst_123 {dimension_numbers = #tpu.dot_dimension_numbers<[1], [0], [0], [1], [0, 0, 1, 1], [], []>} : vector<8x192xbf16>, vector<192x192xbf16>, vector<8x192xf32> -> vector<8x192xf32>
    %134 = arith.addf %126, %133 : vector<8x192xf32>
    %c2_124 = arith.constant 2 : index
    %c0_125 = arith.constant 0 : index
    %c0_126 = arith.constant 0 : index
    %135 = vector.load %arg11[%c2_124, %c0_125, %c0_126] : memref<4x8x4xbf16, #tpu.memory_space<vmem>>, vector<1x8x4xbf16>
    %136 = vector.shape_cast %135 : vector<1x8x4xbf16> to vector<8x4xbf16>
    %cst_127 = arith.constant dense<0.000000e+00> : vector<8x192xf32>
    %137 = tpu.matmul %136, %116, %cst_127 {dimension_numbers = #tpu.dot_dimension_numbers<[1], [0], [0], [1], [0, 0, 1, 1], [], []>} : vector<8x4xbf16>, vector<4x192xbf16>, vector<8x192xf32> -> vector<8x192xf32>
    %138 = arith.truncf %137 : vector<8x192xf32> to vector<8x192xbf16>
    %c2_128 = arith.constant 2 : index
    %c0_129 = arith.constant 0 : index
    %c0_130 = arith.constant 0 : index
    %139 = vector.load %arg12[%c2_128, %c0_129, %c0_130] : memref<4x192x192xbf16, #tpu.memory_space<vmem>>, vector<1x192x192xbf16>
    %140 = vector.shape_cast %139 : vector<1x192x192xbf16> to vector<192x192xbf16>
    %cst_131 = arith.constant dense<0.000000e+00> : vector<8x192xf32>
    %141 = tpu.matmul %138, %140, %cst_131 {dimension_numbers = #tpu.dot_dimension_numbers<[1], [0], [0], [1], [0, 0, 1, 1], [], []>} : vector<8x192xbf16>, vector<192x192xbf16>, vector<8x192xf32> -> vector<8x192xf32>
    %142 = arith.addf %134, %141 : vector<8x192xf32>
    %c3_132 = arith.constant 3 : index
    %c0_133 = arith.constant 0 : index
    %c0_134 = arith.constant 0 : index
    %143 = vector.load %arg11[%c3_132, %c0_133, %c0_134] : memref<4x8x4xbf16, #tpu.memory_space<vmem>>, vector<1x8x4xbf16>
    %144 = vector.shape_cast %143 : vector<1x8x4xbf16> to vector<8x4xbf16>
    %cst_135 = arith.constant dense<0.000000e+00> : vector<8x192xf32>
    %145 = tpu.matmul %144, %116, %cst_135 {dimension_numbers = #tpu.dot_dimension_numbers<[1], [0], [0], [1], [0, 0, 1, 1], [], []>} : vector<8x4xbf16>, vector<4x192xbf16>, vector<8x192xf32> -> vector<8x192xf32>
    %146 = arith.truncf %145 : vector<8x192xf32> to vector<8x192xbf16>
    %c3_136 = arith.constant 3 : index
    %c0_137 = arith.constant 0 : index
    %c0_138 = arith.constant 0 : index
    %147 = vector.load %arg12[%c3_136, %c0_137, %c0_138] : memref<4x192x192xbf16, #tpu.memory_space<vmem>>, vector<1x192x192xbf16>
    %148 = vector.shape_cast %147 : vector<1x192x192xbf16> to vector<192x192xbf16>
    %cst_139 = arith.constant dense<0.000000e+00> : vector<8x192xf32>
    %149 = tpu.matmul %146, %148, %cst_139 {dimension_numbers = #tpu.dot_dimension_numbers<[1], [0], [0], [1], [0, 0, 1, 1], [], []>} : vector<8x192xbf16>, vector<192x192xbf16>, vector<8x192xf32> -> vector<8x192xf32>
    %150 = arith.addf %142, %149 : vector<8x192xf32>
    %cst_140 = arith.constant 0.000000e+00 : f32
    %151 = vector.broadcast %cst_140 : f32 to vector<8x192xf32>
    %152 = arith.maximumf %150, %151 : vector<8x192xf32>
    %153 = arith.truncf %152 : vector<8x192xf32> to vector<8x192xbf16>
    %c0_141 = arith.constant 0 : index
    %c0_142 = arith.constant 0 : index
    %154 = vector.load %arg16[%c0_141, %c0_142] : memref<1x192xf32, #tpu.memory_space<vmem>>, vector<1x192xf32>
    %c0_143 = arith.constant 0 : index
    %c0_144 = arith.constant 0 : index
    %c0_145 = arith.constant 0 : index
    %155 = vector.load %arg14[%c0_143, %c0_144, %c0_145] : memref<4x16x8xbf16, #tpu.memory_space<vmem>>, vector<1x16x8xbf16>
    %156 = vector.shape_cast %155 : vector<1x16x8xbf16> to vector<16x8xbf16>
    %cst_146 = arith.constant dense<0.000000e+00> : vector<16x192xf32>
    %157 = tpu.matmul %156, %153, %cst_146 {dimension_numbers = #tpu.dot_dimension_numbers<[1], [0], [0], [1], [0, 0, 1, 1], [], []>} : vector<16x8xbf16>, vector<8x192xbf16>, vector<16x192xf32> -> vector<16x192xf32>
    %158 = arith.truncf %157 : vector<16x192xf32> to vector<16x192xbf16>
    %c0_147 = arith.constant 0 : index
    %c0_148 = arith.constant 0 : index
    %c0_149 = arith.constant 0 : index
    %159 = vector.load %arg15[%c0_147, %c0_148, %c0_149] : memref<4x192x192xbf16, #tpu.memory_space<vmem>>, vector<1x192x192xbf16>
    %160 = vector.shape_cast %159 : vector<1x192x192xbf16> to vector<192x192xbf16>
    %cst_150 = arith.constant dense<0.000000e+00> : vector<16x192xf32>
    %161 = tpu.matmul %158, %160, %cst_150 {dimension_numbers = #tpu.dot_dimension_numbers<[1], [0], [0], [1], [0, 0, 1, 1], [], []>} : vector<16x192xbf16>, vector<192x192xbf16>, vector<16x192xf32> -> vector<16x192xf32>
    %162 = vector.broadcast %154 : vector<1x192xf32> to vector<16x192xf32>
    %163 = arith.addf %162, %161 : vector<16x192xf32>
    %c1_151 = arith.constant 1 : index
    %c0_152 = arith.constant 0 : index
    %c0_153 = arith.constant 0 : index
    %164 = vector.load %arg14[%c1_151, %c0_152, %c0_153] : memref<4x16x8xbf16, #tpu.memory_space<vmem>>, vector<1x16x8xbf16>
    %165 = vector.shape_cast %164 : vector<1x16x8xbf16> to vector<16x8xbf16>
    %cst_154 = arith.constant dense<0.000000e+00> : vector<16x192xf32>
    %166 = tpu.matmul %165, %153, %cst_154 {dimension_numbers = #tpu.dot_dimension_numbers<[1], [0], [0], [1], [0, 0, 1, 1], [], []>} : vector<16x8xbf16>, vector<8x192xbf16>, vector<16x192xf32> -> vector<16x192xf32>
    %167 = arith.truncf %166 : vector<16x192xf32> to vector<16x192xbf16>
    %c1_155 = arith.constant 1 : index
    %c0_156 = arith.constant 0 : index
    %c0_157 = arith.constant 0 : index
    %168 = vector.load %arg15[%c1_155, %c0_156, %c0_157] : memref<4x192x192xbf16, #tpu.memory_space<vmem>>, vector<1x192x192xbf16>
    %169 = vector.shape_cast %168 : vector<1x192x192xbf16> to vector<192x192xbf16>
    %cst_158 = arith.constant dense<0.000000e+00> : vector<16x192xf32>
    %170 = tpu.matmul %167, %169, %cst_158 {dimension_numbers = #tpu.dot_dimension_numbers<[1], [0], [0], [1], [0, 0, 1, 1], [], []>} : vector<16x192xbf16>, vector<192x192xbf16>, vector<16x192xf32> -> vector<16x192xf32>
    %171 = arith.addf %163, %170 : vector<16x192xf32>
    %c2_159 = arith.constant 2 : index
    %c0_160 = arith.constant 0 : index
    %c0_161 = arith.constant 0 : index
    %172 = vector.load %arg14[%c2_159, %c0_160, %c0_161] : memref<4x16x8xbf16, #tpu.memory_space<vmem>>, vector<1x16x8xbf16>
    %173 = vector.shape_cast %172 : vector<1x16x8xbf16> to vector<16x8xbf16>
    %cst_162 = arith.constant dense<0.000000e+00> : vector<16x192xf32>
    %174 = tpu.matmul %173, %153, %cst_162 {dimension_numbers = #tpu.dot_dimension_numbers<[1], [0], [0], [1], [0, 0, 1, 1], [], []>} : vector<16x8xbf16>, vector<8x192xbf16>, vector<16x192xf32> -> vector<16x192xf32>
    %175 = arith.truncf %174 : vector<16x192xf32> to vector<16x192xbf16>
    %c2_163 = arith.constant 2 : index
    %c0_164 = arith.constant 0 : index
    %c0_165 = arith.constant 0 : index
    %176 = vector.load %arg15[%c2_163, %c0_164, %c0_165] : memref<4x192x192xbf16, #tpu.memory_space<vmem>>, vector<1x192x192xbf16>
    %177 = vector.shape_cast %176 : vector<1x192x192xbf16> to vector<192x192xbf16>
    %cst_166 = arith.constant dense<0.000000e+00> : vector<16x192xf32>
    %178 = tpu.matmul %175, %177, %cst_166 {dimension_numbers = #tpu.dot_dimension_numbers<[1], [0], [0], [1], [0, 0, 1, 1], [], []>} : vector<16x192xbf16>, vector<192x192xbf16>, vector<16x192xf32> -> vector<16x192xf32>
    %179 = arith.addf %171, %178 : vector<16x192xf32>
    %c3_167 = arith.constant 3 : index
    %c0_168 = arith.constant 0 : index
    %c0_169 = arith.constant 0 : index
    %180 = vector.load %arg14[%c3_167, %c0_168, %c0_169] : memref<4x16x8xbf16, #tpu.memory_space<vmem>>, vector<1x16x8xbf16>
    %181 = vector.shape_cast %180 : vector<1x16x8xbf16> to vector<16x8xbf16>
    %cst_170 = arith.constant dense<0.000000e+00> : vector<16x192xf32>
    %182 = tpu.matmul %181, %153, %cst_170 {dimension_numbers = #tpu.dot_dimension_numbers<[1], [0], [0], [1], [0, 0, 1, 1], [], []>} : vector<16x8xbf16>, vector<8x192xbf16>, vector<16x192xf32> -> vector<16x192xf32>
    %183 = arith.truncf %182 : vector<16x192xf32> to vector<16x192xbf16>
    %c3_171 = arith.constant 3 : index
    %c0_172 = arith.constant 0 : index
    %c0_173 = arith.constant 0 : index
    %184 = vector.load %arg15[%c3_171, %c0_172, %c0_173] : memref<4x192x192xbf16, #tpu.memory_space<vmem>>, vector<1x192x192xbf16>
    %185 = vector.shape_cast %184 : vector<1x192x192xbf16> to vector<192x192xbf16>
    %cst_174 = arith.constant dense<0.000000e+00> : vector<16x192xf32>
    %186 = tpu.matmul %183, %185, %cst_174 {dimension_numbers = #tpu.dot_dimension_numbers<[1], [0], [0], [1], [0, 0, 1, 1], [], []>} : vector<16x192xbf16>, vector<192x192xbf16>, vector<16x192xf32> -> vector<16x192xf32>
    %187 = arith.addf %179, %186 : vector<16x192xf32>
    %cst_175 = arith.constant 0.000000e+00 : f32
    %188 = vector.broadcast %cst_175 : f32 to vector<16x192xf32>
    %189 = arith.maximumf %187, %188 : vector<16x192xf32>
    %190 = arith.truncf %189 : vector<16x192xf32> to vector<16x192xbf16>
    %c0_176 = arith.constant 0 : index
    %c0_177 = arith.constant 0 : index
    %191 = vector.load %arg19[%c0_176, %c0_177] : memref<1x96xf32, #tpu.memory_space<vmem>>, vector<1x96xf32>
    %c0_178 = arith.constant 0 : index
    %c0_179 = arith.constant 0 : index
    %c0_180 = arith.constant 0 : index
    %192 = vector.load %arg17[%c0_178, %c0_179, %c0_180] : memref<4x32x16xbf16, #tpu.memory_space<vmem>>, vector<1x32x16xbf16>
    %193 = vector.shape_cast %192 : vector<1x32x16xbf16> to vector<32x16xbf16>
    %cst_181 = arith.constant dense<0.000000e+00> : vector<32x192xf32>
    %194 = tpu.matmul %193, %190, %cst_181 {dimension_numbers = #tpu.dot_dimension_numbers<[1], [0], [0], [1], [0, 0, 1, 1], [], []>} : vector<32x16xbf16>, vector<16x192xbf16>, vector<32x192xf32> -> vector<32x192xf32>
    %195 = arith.truncf %194 : vector<32x192xf32> to vector<32x192xbf16>
    %c0_182 = arith.constant 0 : index
    %c0_183 = arith.constant 0 : index
    %c0_184 = arith.constant 0 : index
    %196 = vector.load %arg18[%c0_182, %c0_183, %c0_184] : memref<4x192x96xbf16, #tpu.memory_space<vmem>>, vector<1x192x96xbf16>
    %197 = vector.shape_cast %196 : vector<1x192x96xbf16> to vector<192x96xbf16>
    %cst_185 = arith.constant dense<0.000000e+00> : vector<32x96xf32>
    %198 = tpu.matmul %195, %197, %cst_185 {dimension_numbers = #tpu.dot_dimension_numbers<[1], [0], [0], [1], [0, 0, 1, 1], [], []>} : vector<32x192xbf16>, vector<192x96xbf16>, vector<32x96xf32> -> vector<32x96xf32>
    %199 = vector.broadcast %191 : vector<1x96xf32> to vector<32x96xf32>
    %200 = arith.addf %199, %198 : vector<32x96xf32>
    %c1_186 = arith.constant 1 : index
    %c0_187 = arith.constant 0 : index
    %c0_188 = arith.constant 0 : index
    %201 = vector.load %arg17[%c1_186, %c0_187, %c0_188] : memref<4x32x16xbf16, #tpu.memory_space<vmem>>, vector<1x32x16xbf16>
    %202 = vector.shape_cast %201 : vector<1x32x16xbf16> to vector<32x16xbf16>
    %cst_189 = arith.constant dense<0.000000e+00> : vector<32x192xf32>
    %203 = tpu.matmul %202, %190, %cst_189 {dimension_numbers = #tpu.dot_dimension_numbers<[1], [0], [0], [1], [0, 0, 1, 1], [], []>} : vector<32x16xbf16>, vector<16x192xbf16>, vector<32x192xf32> -> vector<32x192xf32>
    %204 = arith.truncf %203 : vector<32x192xf32> to vector<32x192xbf16>
    %c1_190 = arith.constant 1 : index
    %c0_191 = arith.constant 0 : index
    %c0_192 = arith.constant 0 : index
    %205 = vector.load %arg18[%c1_190, %c0_191, %c0_192] : memref<4x192x96xbf16, #tpu.memory_space<vmem>>, vector<1x192x96xbf16>
    %206 = vector.shape_cast %205 : vector<1x192x96xbf16> to vector<192x96xbf16>
    %cst_193 = arith.constant dense<0.000000e+00> : vector<32x96xf32>
    %207 = tpu.matmul %204, %206, %cst_193 {dimension_numbers = #tpu.dot_dimension_numbers<[1], [0], [0], [1], [0, 0, 1, 1], [], []>} : vector<32x192xbf16>, vector<192x96xbf16>, vector<32x96xf32> -> vector<32x96xf32>
    %208 = arith.addf %200, %207 : vector<32x96xf32>
    %c2_194 = arith.constant 2 : index
    %c0_195 = arith.constant 0 : index
    %c0_196 = arith.constant 0 : index
    %209 = vector.load %arg17[%c2_194, %c0_195, %c0_196] : memref<4x32x16xbf16, #tpu.memory_space<vmem>>, vector<1x32x16xbf16>
    %210 = vector.shape_cast %209 : vector<1x32x16xbf16> to vector<32x16xbf16>
    %cst_197 = arith.constant dense<0.000000e+00> : vector<32x192xf32>
    %211 = tpu.matmul %210, %190, %cst_197 {dimension_numbers = #tpu.dot_dimension_numbers<[1], [0], [0], [1], [0, 0, 1, 1], [], []>} : vector<32x16xbf16>, vector<16x192xbf16>, vector<32x192xf32> -> vector<32x192xf32>
    %212 = arith.truncf %211 : vector<32x192xf32> to vector<32x192xbf16>
    %c2_198 = arith.constant 2 : index
    %c0_199 = arith.constant 0 : index
    %c0_200 = arith.constant 0 : index
    %213 = vector.load %arg18[%c2_198, %c0_199, %c0_200] : memref<4x192x96xbf16, #tpu.memory_space<vmem>>, vector<1x192x96xbf16>
    %214 = vector.shape_cast %213 : vector<1x192x96xbf16> to vector<192x96xbf16>
    %cst_201 = arith.constant dense<0.000000e+00> : vector<32x96xf32>
    %215 = tpu.matmul %212, %214, %cst_201 {dimension_numbers = #tpu.dot_dimension_numbers<[1], [0], [0], [1], [0, 0, 1, 1], [], []>} : vector<32x192xbf16>, vector<192x96xbf16>, vector<32x96xf32> -> vector<32x96xf32>
    %216 = arith.addf %208, %215 : vector<32x96xf32>
    %c3_202 = arith.constant 3 : index
    %c0_203 = arith.constant 0 : index
    %c0_204 = arith.constant 0 : index
    %217 = vector.load %arg17[%c3_202, %c0_203, %c0_204] : memref<4x32x16xbf16, #tpu.memory_space<vmem>>, vector<1x32x16xbf16>
    %218 = vector.shape_cast %217 : vector<1x32x16xbf16> to vector<32x16xbf16>
    %cst_205 = arith.constant dense<0.000000e+00> : vector<32x192xf32>
    %219 = tpu.matmul %218, %190, %cst_205 {dimension_numbers = #tpu.dot_dimension_numbers<[1], [0], [0], [1], [0, 0, 1, 1], [], []>} : vector<32x16xbf16>, vector<16x192xbf16>, vector<32x192xf32> -> vector<32x192xf32>
    %220 = arith.truncf %219 : vector<32x192xf32> to vector<32x192xbf16>
    %c3_206 = arith.constant 3 : index
    %c0_207 = arith.constant 0 : index
    %c0_208 = arith.constant 0 : index
    %221 = vector.load %arg18[%c3_206, %c0_207, %c0_208] : memref<4x192x96xbf16, #tpu.memory_space<vmem>>, vector<1x192x96xbf16>
    %222 = vector.shape_cast %221 : vector<1x192x96xbf16> to vector<192x96xbf16>
    %cst_209 = arith.constant dense<0.000000e+00> : vector<32x96xf32>
    %223 = tpu.matmul %220, %222, %cst_209 {dimension_numbers = #tpu.dot_dimension_numbers<[1], [0], [0], [1], [0, 0, 1, 1], [], []>} : vector<32x192xbf16>, vector<192x96xbf16>, vector<32x96xf32> -> vector<32x96xf32>
    %224 = arith.addf %216, %223 : vector<32x96xf32>
    %225 = math.tanh %224 : vector<32x96xf32>
    %c0_210 = arith.constant 0 : index
    %c0_211 = arith.constant 0 : index
    %c0_212 = arith.constant 0 : index
    %226 = vector.load %arg21[%c0_210, %c0_211, %c0_212] : memref<1x32x96xf32, #tpu.memory_space<vmem>>, vector<1x32x96xf32>
    %227 = vector.shape_cast %226 : vector<1x32x96xf32> to vector<32x96xf32>
    %228 = vector.shape_cast %225 : vector<32x96xf32> to vector<1x32x96xf32>
    tpu.vector_store %arg21[%c0_210, %c0_211, %c0_212], %228 {strides = array<i32>} : memref<1x32x96xf32, #tpu.memory_space<vmem>>, vector<1x32x96xf32>,
    return
  }
  func.func @transform_0(%arg0: i32) -> (i32, i32, i32) {
    %c0_i32 = arith.constant 0 : i32
    %c0_i32_0 = arith.constant 0 : i32
    %c0_i32_1 = arith.constant 0 : i32
    return %arg0, %c0_i32, %c0_i32_0 : i32, i32, i32
  }
  func.func @transform_1(%arg0: i32) -> (i32, i32, i32) {
    %c0_i32 = arith.constant 0 : i32
    %c0_i32_0 = arith.constant 0 : i32
    %c0_i32_1 = arith.constant 0 : i32
    %c0_i32_2 = arith.constant 0 : i32
    return %c0_i32, %c0_i32_0, %c0_i32_1 : i32, i32, i32
  }
  func.func @transform_2(%arg0: i32) -> (i32, i32, i32) {
    %c0_i32 = arith.constant 0 : i32
    %c0_i32_0 = arith.constant 0 : i32
    %c0_i32_1 = arith.constant 0 : i32
    %c0_i32_2 = arith.constant 0 : i32
    return %c0_i32, %c0_i32_0, %c0_i32_1 : i32, i32, i32
  }
  func.func @transform_3(%arg0: i32) -> (i32, i32) {
    %c0_i32 = arith.constant 0 : i32
    %c0_i32_0 = arith.constant 0 : i32
    %c0_i32_1 = arith.constant 0 : i32
    return %c0_i32, %c0_i32_0 : i32, i32
  }
  func.func @transform_4(%arg0: i32) -> (i32, i32, i32) {
    %c0_i32 = arith.constant 0 : i32
    %c0_i32_0 = arith.constant 0 : i32
    %c0_i32_1 = arith.constant 0 : i32
    %c0_i32_2 = arith.constant 0 : i32
    return %c0_i32, %c0_i32_0, %c0_i32_1 : i32, i32, i32
  }
  func.func @transform_5(%arg0: i32) -> (i32, i32, i32) {
    %c0_i32 = arith.constant 0 : i32
    %c0_i32_0 = arith.constant 0 : i32
    %c0_i32_1 = arith.constant 0 : i32
    %c0_i32_2 = arith.constant 0 : i32
    return %c0_i32, %c0_i32_0, %c0_i32_1 : i32, i32, i32
  }
  func.func @transform_6(%arg0: i32) -> (i32, i32) {
    %c0_i32 = arith.constant 0 : i32
    %c0_i32_0 = arith.constant 0 : i32
    %c0_i32_1 = arith.constant 0 : i32
    return %c0_i32, %c0_i32_0 : i32, i32
  }
  func.func @transform_7(%arg0: i32) -> (i32, i32, i32) {
    %c0_i32 = arith.constant 0 : i32
    %c0_i32_0 = arith.constant 0 : i32
    %c0_i32_1 = arith.constant 0 : i32
    %c0_i32_2 = arith.constant 0 : i32
    return %c0_i32, %c0_i32_0, %c0_i32_1 : i32, i32, i32
  }
  func.func @transform_8(%arg0: i32) -> (i32, i32, i32) {
    %c0_i32 = arith.constant 0 : i32
    %c0_i32_0 = arith.constant 0 : i32
    %c0_i32_1 = arith.constant 0 : i32
    %c0_i32_2 = arith.constant 0 : i32
    return %c0_i32, %c0_i32_0, %c0_i32_1 : i32, i32, i32
  }
  func.func @transform_9(%arg0: i32) -> (i32, i32) {
    %c0_i32 = arith.constant 0 : i32
    %c0_i32_0 = arith.constant 0 : i32
    %c0_i32_1 = arith.constant 0 : i32
    return %c0_i32, %c0_i32_0 : i32, i32
  }
  func.func @transform_10(%arg0: i32) -> (i32, i32, i32) {
    %c0_i32 = arith.constant 0 : i32
    %c0_i32_0 = arith.constant 0 : i32
    %c0_i32_1 = arith.constant 0 : i32
    %c0_i32_2 = arith.constant 0 : i32
    return %c0_i32, %c0_i32_0, %c0_i32_1 : i32, i32, i32
  }
  func.func @transform_11(%arg0: i32) -> (i32, i32, i32) {
    %c0_i32 = arith.constant 0 : i32
    %c0_i32_0 = arith.constant 0 : i32
    %c0_i32_1 = arith.constant 0 : i32
    %c0_i32_2 = arith.constant 0 : i32
    return %c0_i32, %c0_i32_0, %c0_i32_1 : i32, i32, i32
  }
  func.func @transform_12(%arg0: i32) -> (i32, i32) {
    %c0_i32 = arith.constant 0 : i32
    %c0_i32_0 = arith.constant 0 : i32
    %c0_i32_1 = arith.constant 0 : i32
    return %c0_i32, %c0_i32_0 : i32, i32
  }
  func.func @transform_13(%arg0: i32) -> (i32, i32, i32) {
    %c0_i32 = arith.constant 0 : i32
    %c0_i32_0 = arith.constant 0 : i32
    %c0_i32_1 = arith.constant 0 : i32
    %c0_i32_2 = arith.constant 0 : i32
    return %c0_i32, %c0_i32_0, %c0_i32_1 : i32, i32, i32
  }
  func.func @transform_14(%arg0: i32) -> (i32, i32, i32) {
    %c0_i32 = arith.constant 0 : i32
    %c0_i32_0 = arith.constant 0 : i32
    %c0_i32_1 = arith.constant 0 : i32
    %c0_i32_2 = arith.constant 0 : i32
    return %c0_i32, %c0_i32_0, %c0_i32_1 : i32, i32, i32
  }
  func.func @transform_15(%arg0: i32) -> (i32, i32) {
    %c0_i32 = arith.constant 0 : i32
    %c0_i32_0 = arith.constant 0 : i32
    %c0_i32_1 = arith.constant 0 : i32
    return %c0_i32, %c0_i32_0 : i32, i32
  }
  func.func @transform_16(%arg0: i32) -> (i32, i32, i32) {
    %c0_i32 = arith.constant 0 : i32
    %c0_i32_0 = arith.constant 0 : i32
    %c0_i32_1 = arith.constant 0 : i32
    %c0_i32_2 = arith.constant 0 : i32
    return %c0_i32, %c0_i32_0, %c0_i32_1 : i32, i32, i32
  }
  func.func @transform_17(%arg0: i32) -> (i32, i32, i32) {
    %c0_i32 = arith.constant 0 : i32
    %c0_i32_0 = arith.constant 0 : i32
    %c0_i32_1 = arith.constant 0 : i32
    %c0_i32_2 = arith.constant 0 : i32
    return %c0_i32, %c0_i32_0, %c0_i32_1 : i32, i32, i32
  }
  func.func @transform_18(%arg0: i32) -> (i32, i32) {
    %c0_i32 = arith.constant 0 : i32
    %c0_i32_0 = arith.constant 0 : i32
    %c0_i32_1 = arith.constant 0 : i32
    return %c0_i32, %c0_i32_0 : i32, i32
  }
  func.func @transform_19(%arg0: i32) -> (i32, i32, i32) {
    %c0_i32 = arith.constant 0 : i32
    %c0_i32_0 = arith.constant 0 : i32
    %c0_i32_1 = arith.constant 0 : i32
    return %arg0, %c0_i32, %c0_i32_0 : i32, i32, i32
  }
  func.func @transform_20(%arg0: i32) -> (i32, i32, i32) {
    %c0_i32 = arith.constant 0 : i32
    %c0_i32_0 = arith.constant 0 : i32
    %c0_i32_1 = arith.constant 0 : i32
    return %arg0, %c0_i32, %c0_i32_0 : i32, i32, i32
  }
}

</mosaic_0001>

<llo_original>
// kernel: aucifar_forward.1
$region0: #{aucifar_forward.1}
  #allocation0 [shape = 'u32[]', space=smem, size = 0x4, offset = 0x4, fixed_abs, tag = 'smem constant byte address 0x4 - core index']
  #allocation1 [shape = 'u32[72,128]{1,0:T(1,128)}', space=vmem, size = 0x9000, scoped, tag = 'internal scratch']
  %s0 = inlined_call_operand.vmem [shape: f32[2,32,96], index: 0, kind: input, shape index: {}]
  %s1 = inlined_call_operand.vmem [shape: bf16[4,16,32], index: 1, kind: input, shape index: {}]
  %s2 = inlined_call_operand.vmem [shape: bf16[4,96,192], index: 2, kind: input, shape index: {}]
  %s3 = inlined_call_operand.vmem [shape: f32[1,192], index: 3, kind: input, shape index: {}]
  %s4 = inlined_call_operand.vmem [shape: bf16[4,8,16], index: 4, kind: input, shape index: {}]
  %s5 = inlined_call_operand.hbm [shape: bf16[4,192,192], index: 5, kind: input, shape index: {}]
  %s6 = inlined_call_operand.vmem [shape: f32[1,192], index: 6, kind: input, shape index: {}]
  %s7 = inlined_call_operand.vmem [shape: bf16[4,4,8], index: 7, kind: input, shape index: {}]
  %s8 = inlined_call_operand.hbm [shape: bf16[4,192,192], index: 8, kind: input, shape index: {}]
  %s9 = inlined_call_operand.vmem [shape: f32[1,192], index: 9, kind: input, shape index: {}]
  %s10 = inlined_call_operand.vmem [shape: bf16[4,8,4], index: 10, kind: input, shape index: {}]
  %s11 = inlined_call_operand.hbm [shape: bf16[4,192,192], index: 11, kind: input, shape index: {}]
  %s12 = inlined_call_operand.vmem [shape: f32[1,192], index: 12, kind: input, shape index: {}]
  %s13 = inlined_call_operand.vmem [shape: bf16[4,16,8], index: 13, kind: input, shape index: {}]
  %s14 = inlined_call_operand.hbm [shape: bf16[4,192,192], index: 14, kind: input, shape index: {}]
  %s15 = inlined_call_operand.vmem [shape: f32[1,192], index: 15, kind: input, shape index: {}]
  %s16 = inlined_call_operand.vmem [shape: bf16[4,32,16], index: 16, kind: input, shape index: {}]
  %s17 = inlined_call_operand.hbm [shape: bf16[4,192,96], index: 17, kind: input, shape index: {}]
  %s18 = inlined_call_operand.vmem [shape: f32[1,96], index: 18, kind: input, shape index: {}]
  %s19 = inlined_call_operand.vmem [shape: f32[2,4,192], index: 19, kind: output, shape index: {0}]
  %s20 = inlined_call_operand.vmem [shape: f32[2,32,96], index: 20, kind: output, shape index: {1}]
  %21 = xla_tuple %s19, %s20
  %s22 = sld [smem:[#allocation0]]
  $region137: #{aucifar_forward.1} parent=0
    _
  %s24 = ssub.s32 1, %s22
  %s25 = scalar_select 0, %s24, %s22
  $region1: #{aucifar_forward.1} parent=0
    #allocation2 [shape = 'u8[393216]{0}', space=vmem, size = 0x60000, scoped, tag = 'input window, operand 5, single buffered']
    #allocation3 [shape = 's32[2]{0}', space=sflag, size = 0x8, scoped, tag = 'scoped memory for aucifar_forward.1']
    #allocation4 [shape = 'u8[393216]{0}', space=vmem, size = 0x60000, scoped, tag = 'input window, operand 8, single buffered']
    #allocation5 [shape = 's32[1]{0}', space=sflag, size = 0x4, scoped, tag = 'scoped memory for aucifar_forward.1']
    #allocation6 [shape = 'u8[393216]{0}', space=vmem, size = 0x60000, scoped, tag = 'input window, operand 11, single buffered']
    #allocation7 [shape = 'u8[393216]{0}', space=vmem, size = 0x60000, scoped, tag = 'input window, operand 14, single buffered']
    #allocation8 [shape = 's32[1]{0}', space=sflag, size = 0x4, scoped, tag = 'scoped memory for aucifar_forward.1']
    #allocation9 [shape = 'u8[196608]{0}', space=vmem, size = 0x30000, scoped, tag = 'input window, operand 17, single buffered']
    %26 = vsyncpa [#allocation3], 0
    %27 = vsyncpa [#allocation5], 0
    %28 = vsyncpa [#allocation8], 0
    loop: start=0, step=1, limit=4
    $region2: #{aucifar_forward.1} parent=1 // loop_pre_header
      _
    $region3: #{aucifar_forward.1} parent=1 // loop_header
      %s30 = sphi 0, %s34
      %p31 = scmp.ge.s32.totalorder %s30, 4
      %s40 = sphi 0, %s42
      %s43 = sphi 0, %s40
      %s44 = sphi 0, %s43
      %s60 = sphi 0, %s44
      %s64 = sphi 0, %s64
      %s66 = sphi 0, %s64
      %s67 = sphi 0, %s66
      %s81 = sphi 0, %s67
      %s85 = sphi 0, %s85
      %s87 = sphi 0, %s85
      %s88 = sphi 0, %s87
      %s102 = sphi 0, %s88
      %s106 = sphi 0, %s106
      %s108 = sphi 0, %s106
      %s109 = sphi 0, %s108
      %s123 = sphi 0, %s109
      %s127 = sphi 0, %s127
      %s129 = sphi 0, %s127
      %s130 = sphi 0, %s129
      %s144 = sphi 0, %s130
      %s148 = sphi 0, %s148
      %s150 = sphi 0, %s148
      %s151 = sphi 0, %s150
      %s165 = sphi 0, %s151
      %s169 = sphi 0, %s169
      %s171 = sphi 0, %s169
      %s172 = sphi 0, %s171
      %s186 = sphi 0, %s172
      %s190 = sphi 0, %s190
      %s192 = sphi 0, %s190
      %s193 = sphi 0, %s192
      %s207 = sphi 0, %s193
      %s211 = sphi 0, %s211
      %s213 = sphi 0, %s211
      %s214 = sphi 0, %s213
      %s228 = sphi 0, %s214
      %s232 = sphi 0, %s232
      %s234 = sphi 0, %s232
      %s235 = sphi 0, %s234
      %s249 = sphi 0, %s235
      %s253 = sphi 0, %s253
      %s255 = sphi 0, %s253
      %s256 = sphi 0, %s255
      %s270 = sphi 0, %s256
      %s274 = sphi 0, %s274
      %s276 = sphi 0, %s274
      %s277 = sphi 0, %s276
      %s291 = sphi 0, %s277
      %s295 = sphi 0, %s295
      %s297 = sphi 0, %s295
      %s298 = sphi 0, %s297
      %s312 = sphi 0, %s298
      %s316 = sphi 0, %s316
      %s318 = sphi 0, %s316
      %s319 = sphi 0, %s318
      %s333 = sphi 0, %s319
      %s337 = sphi 0, %s337
      %s339 = sphi 0, %s337
      %s340 = sphi 0, %s339
      %s354 = sphi 0, %s340
      %s358 = sphi 0, %s358
      %s360 = sphi 0, %s358
      %s361 = sphi 0, %s360
      %s375 = sphi 0, %s361
      %s379 = sphi 0, %s379
      %s381 = sphi 0, %s379
      %s382 = sphi 0, %s381
      %s396 = sphi 0, %s382
      %s400 = sphi 0, %s400
      %s402 = sphi 0, %s400
      %s403 = sphi 0, %s402
      %s417 = sphi 0, %s403
      %s421 = sphi 0, %s421
      %s423 = sphi 0, %s421
      %s424 = sphi 0, %s423
      %s438 = sphi 0, %s424
      %s444 = sphi 0, %s446
      %s447 = sphi 0, %s444
      %s448 = sphi 0, %s447
      %s464 = sphi 0, %s448
      %s470 = sphi 0, %s472
      %s473 = sphi 0, %s470
      %s474 = sphi 0, %s473
      %s490 = sphi 0, %s474
    $region4: #{aucifar_forward.1} parent=1 // loop_header_branch
      %33 = sbr.rel (%p31) target = $region8
    $region5: #{aucifar_forward.1} parent=1 // loop_body
      %s35 = ssub.s32 %s30, 1
      %s36 = ssub.s32 %s30, 2
      %s37 = sadd.s32 %s30, 1
      %s38 = ssub.s32 %s30, %s37
      %p39 = scmp.eq.s32.totalorder %s38, 0
      %s41 = sadd.s32 %s40, 1
      %s42 = scalar_select %p39, %s40, %s41
      %p45 = pneg %p39
      %p46 = scmp.eq.s32.totalorder %s30, 1
      %p47 = por %p45, %p46
      %p48 = scmp.ne.s32.totalorder %s40, %s43
      %p49 = scmp.eq.s32.totalorder %s30, 0
      %p50 = por %p48, %p49
      %p51 = scmp.ne.s32.totalorder %s40, %s43
      %p52 = scmp.eq.s32.totalorder %s35, 1
      %p53 = por %p51, %p52
      %p54 = scmp.ne.s32.totalorder %s43, %s44
      %p55 = scmp.eq.s32.totalorder %s35, 0
      %p56 = por %p54, %p55
      %p57 = scmp.ne.s32.totalorder %s43, %s44
      %p58 = scmp.eq.s32.totalorder %s36, 1
      %p59 = por %p57, %p58
      %p61 = scmp.ne.s32.totalorder %s44, %s60
      %p62 = scmp.eq.s32.totalorder %s36, 0
      %p63 = por %p61, %p62
      %s65 = sadd.s32 %s64, 1
      %p68 = scmp.eq.s32.totalorder %s30, 1
      %p69 = scmp.ne.s32.totalorder %s64, %s66
      %p70 = scmp.eq.s32.totalorder %s30, 0
      %p71 = por %p69, %p70
      %p72 = scmp.ne.s32.totalorder %s64, %s66
      %p73 = scmp.eq.s32.totalorder %s35, 1
      %p74 = por %p72, %p73
      %p75 = scmp.ne.s32.totalorder %s66, %s67
      %p76 = scmp.eq.s32.totalorder %s35, 0
      %p77 = por %p75, %p76
      %p78 = scmp.ne.s32.totalorder %s66, %s67
      %p79 = scmp.eq.s32.totalorder %s36, 1
      %p80 = por %p78, %p79
      %p82 = scmp.ne.s32.totalorder %s67, %s81
      %p83 = scmp.eq.s32.totalorder %s36, 0
      %p84 = por %p82, %p83
      %s86 = sadd.s32 %s85, 1
      %p89 = scmp.eq.s32.totalorder %s30, 1
      %p90 = scmp.ne.s32.totalorder %s85, %s87
      %p91 = scmp.eq.s32.totalorder %s30, 0
      %p92 = por %p90, %p91
      %p93 = scmp.ne.s32.totalorder %s85, %s87
      %p94 = scmp.eq.s32.totalorder %s35, 1
      %p95 = por %p93, %p94
      %p96 = scmp.ne.s32.totalorder %s87, %s88
      %p97 = scmp.eq.s32.totalorder %s35, 0
      %p98 = por %p96, %p97
      %p99 = scmp.ne.s32.totalorder %s87, %s88
      %p100 = scmp.eq.s32.totalorder %s36, 1
      %p101 = por %p99, %p100
      %p103 = scmp.ne.s32.totalorder %s88, %s102
      %p104 = scmp.eq.s32.totalorder %s36, 0
      %p105 = por %p103, %p104
      %s107 = sadd.s32 %s106, 1
      %p110 = scmp.eq.s32.totalorder %s30, 1
      %p111 = scmp.ne.s32.totalorder %s106, %s108
      %p112 = scmp.eq.s32.totalorder %s30, 0
      %p113 = por %p111, %p112
      %p114 = scmp.ne.s32.totalorder %s106, %s108
      %p115 = scmp.eq.s32.totalorder %s35, 1
      %p116 = por %p114, %p115
      %p117 = scmp.ne.s32.totalorder %s108, %s109
      %p118 = scmp.eq.s32.totalorder %s35, 0
      %p119 = por %p117, %p118
      %p120 = scmp.ne.s32.totalorder %s108, %s109
      %p121 = scmp.eq.s32.totalorder %s36, 1
      %p122 = por %p120, %p121
      %p124 = scmp.ne.s32.totalorder %s109, %s123
      %p125 = scmp.eq.s32.totalorder %s36, 0
      %p126 = por %p124, %p125
      %s128 = sadd.s32 %s127, 1
      %p131 = scmp.eq.s32.totalorder %s30, 1
      %p132 = scmp.ne.s32.totalorder %s127, %s129
      %p133 = scmp.eq.s32.totalorder %s30, 0
      %p134 = por %p132, %p133
      %p135 = scmp.ne.s32.totalorder %s127, %s129
      %p136 = scmp.eq.s32.totalorder %s35, 1
      %p137 = por %p135, %p136
      %p138 = scmp.ne.s32.totalorder %s129, %s130
      %p139 = scmp.eq.s32.totalorder %s35, 0
      %p140 = por %p138, %p139
      %p141 = scmp.ne.s32.totalorder %s129, %s130
      %p142 = scmp.eq.s32.totalorder %s36, 1
      %p143 = por %p141, %p142
      %p145 = scmp.ne.s32.totalorder %s130, %s144
      %p146 = scmp.eq.s32.totalorder %s36, 0
      %p147 = por %p145, %p146
      %s149 = sadd.s32 %s148, 1
      %p152 = scmp.eq.s32.totalorder %s30, 1
      %p153 = scmp.ne.s32.totalorder %s148, %s150
      %p154 = scmp.eq.s32.totalorder %s30, 0
      %p155 = por %p153, %p154
      %p156 = scmp.ne.s32.totalorder %s148, %s150
      %p157 = scmp.eq.s32.totalorder %s35, 1
      %p158 = por %p156, %p157
      %p159 = scmp.ne.s32.totalorder %s150, %s151
      %p160 = scmp.eq.s32.totalorder %s35, 0
      %p161 = por %p159, %p160
      %p162 = scmp.ne.s32.totalorder %s150, %s151
      %p163 = scmp.eq.s32.totalorder %s36, 1
      %p164 = por %p162, %p163
      %p166 = scmp.ne.s32.totalorder %s151, %s165
      %p167 = scmp.eq.s32.totalorder %s36, 0
      %p168 = por %p166, %p167
      %s170 = sadd.s32 %s169, 1
      %p173 = scmp.eq.s32.totalorder %s30, 1
      %p174 = scmp.ne.s32.totalorder %s169, %s171
      %p175 = scmp.eq.s32.totalorder %s30, 0
      %p176 = por %p174, %p175
      %p177 = scmp.ne.s32.totalorder %s169, %s171
      %p178 = scmp.eq.s32.totalorder %s35, 1
      %p179 = por %p177, %p178
      %p180 = scmp.ne.s32.totalorder %s171, %s172
      %p181 = scmp.eq.s32.totalorder %s35, 0
      %p182 = por %p180, %p181
      %p183 = scmp.ne.s32.totalorder %s171, %s172
      %p184 = scmp.eq.s32.totalorder %s36, 1
      %p185 = por %p183, %p184
      %p187 = scmp.ne.s32.totalorder %s172, %s186
      %p188 = scmp.eq.s32.totalorder %s36, 0
      %p189 = por %p187, %p188
      %s191 = sadd.s32 %s190, 1
      %p194 = scmp.eq.s32.totalorder %s30, 1
      %p195 = scmp.ne.s32.totalorder %s190, %s192
      %p196 = scmp.eq.s32.totalorder %s30, 0
      %p197 = por %p195, %p196
      %p198 = scmp.ne.s32.totalorder %s190, %s192
      %p199 = scmp.eq.s32.totalorder %s35, 1
      %p200 = por %p198, %p199
      %p201 = scmp.ne.s32.totalorder %s192, %s193
      %p202 = scmp.eq.s32.totalorder %s35, 0
      %p203 = por %p201, %p202
      %p204 = scmp.ne.s32.totalorder %s192, %s193
      %p205 = scmp.eq.s32.totalorder %s36, 1
      %p206 = por %p204, %p205
      %p208 = scmp.ne.s32.totalorder %s193, %s207
      %p209 = scmp.eq.s32.totalorder %s36, 0
      %p210 = por %p208, %p209
      %s212 = sadd.s32 %s211, 1
      %p215 = scmp.eq.s32.totalorder %s30, 1
      %p216 = scmp.ne.s32.totalorder %s211, %s213
      %p217 = scmp.eq.s32.totalorder %s30, 0
      %p218 = por %p216, %p217
      %p219 = scmp.ne.s32.totalorder %s211, %s213
      %p220 = scmp.eq.s32.totalorder %s35, 1
      %p221 = por %p219, %p220
      %p222 = scmp.ne.s32.totalorder %s213, %s214
      %p223 = scmp.eq.s32.totalorder %s35, 0
      %p224 = por %p222, %p223
      %p225 = scmp.ne.s32.totalorder %s213, %s214
      %p226 = scmp.eq.s32.totalorder %s36, 1
      %p227 = por %p225, %p226
      %p229 = scmp.ne.s32.totalorder %s214, %s228
      %p230 = scmp.eq.s32.totalorder %s36, 0
      %p231 = por %p229, %p230
      %s233 = sadd.s32 %s232, 1
      %p236 = scmp.eq.s32.totalorder %s30, 1
      %p237 = scmp.ne.s32.totalorder %s232, %s234
      %p238 = scmp.eq.s32.totalorder %s30, 0
      %p239 = por %p237, %p238
      %p240 = scmp.ne.s32.totalorder %s232, %s234
      %p241 = scmp.eq.s32.totalorder %s35, 1
      %p242 = por %p240, %p241
      %p243 = scmp.ne.s32.totalorder %s234, %s235
      %p244 = scmp.eq.s32.totalorder %s35, 0
      %p245 = por %p243, %p244
      %p246 = scmp.ne.s32.totalorder %s234, %s235
      %p247 = scmp.eq.s32.totalorder %s36, 1
      %p248 = por %p246, %p247
      %p250 = scmp.ne.s32.totalorder %s235, %s249
      %p251 = scmp.eq.s32.totalorder %s36, 0
      %p252 = por %p250, %p251
      %s254 = sadd.s32 %s253, 1
      %p257 = scmp.eq.s32.totalorder %s30, 1
      %p258 = scmp.ne.s32.totalorder %s253, %s255
      %p259 = scmp.eq.s32.totalorder %s30, 0
      %p260 = por %p258, %p259
      %p261 = scmp.ne.s32.totalorder %s253, %s255
      %p262 = scmp.eq.s32.totalorder %s35, 1
      %p263 = por %p261, %p262
      %p264 = scmp.ne.s32.totalorder %s255, %s256
      %p265 = scmp.eq.s32.totalorder %s35, 0
      %p266 = por %p264, %p265
      %p267 = scmp.ne.s32.totalorder %s255, %s256
      %p268 = scmp.eq.s32.totalorder %s36, 1
      %p269 = por %p267, %p268
      %p271 = scmp.ne.s32.totalorder %s256, %s270
      %p272 = scmp.eq.s32.totalorder %s36, 0
      %p273 = por %p271, %p272
      %s275 = sadd.s32 %s274, 1
      %p278 = scmp.eq.s32.totalorder %s30, 1
      %p279 = scmp.ne.s32.totalorder %s274, %s276
      %p280 = scmp.eq.s32.totalorder %s30, 0
      %p281 = por %p279, %p280
      %p282 = scmp.ne.s32.totalorder %s274, %s276
      %p283 = scmp.eq.s32.totalorder %s35, 1
      %p284 = por %p282, %p283
      %p285 = scmp.ne.s32.totalorder %s276, %s277
      %p286 = scmp.eq.s32.totalorder %s35, 0
      %p287 = por %p285, %p286
      %p288 = scmp.ne.s32.totalorder %s276, %s277
      %p289 = scmp.eq.s32.totalorder %s36, 1
      %p290 = por %p288, %p289
      %p292 = scmp.ne.s32.totalorder %s277, %s291
      %p293 = scmp.eq.s32.totalorder %s36, 0
      %p294 = por %p292, %p293
      %s296 = sadd.s32 %s295, 1
      %p299 = scmp.eq.s32.totalorder %s30, 1
      %p300 = scmp.ne.s32.totalorder %s295, %s297
      %p301 = scmp.eq.s32.totalorder %s30, 0
      %p302 = por %p300, %p301
      %p303 = scmp.ne.s32.totalorder %s295, %s297
      %p304 = scmp.eq.s32.totalorder %s35, 1
      %p305 = por %p303, %p304
      %p306 = scmp.ne.s32.totalorder %s297, %s298
      %p307 = scmp.eq.s32.totalorder %s35, 0
      %p308 = por %p306, %p307
      %p309 = scmp.ne.s32.totalorder %s297, %s298
      %p310 = scmp.eq.s32.totalorder %s36, 1
      %p311 = por %p309, %p310
      %p313 = scmp.ne.s32.totalorder %s298, %s312
      %p314 = scmp.eq.s32.totalorder %s36, 0
      %p315 = por %p313, %p314
      %s317 = sadd.s32 %s316, 1
      %p320 = scmp.eq.s32.totalorder %s30, 1
      %p321 = scmp.ne.s32.totalorder %s316, %s318
      %p322 = scmp.eq.s32.totalorder %s30, 0
      %p323 = por %p321, %p322
      %p324 = scmp.ne.s32.totalorder %s316, %s318
      %p325 = scmp.eq.s32.totalorder %s35, 1
      %p326 = por %p324, %p325
      %p327 = scmp.ne.s32.totalorder %s318, %s319
      %p328 = scmp.eq.s32.totalorder %s35, 0
      %p329 = por %p327, %p328
      %p330 = scmp.ne.s32.totalorder %s318, %s319
      %p331 = scmp.eq.s32.totalorder %s36, 1
      %p332 = por %p330, %p331
      %p334 = scmp.ne.s32.totalorder %s319, %s333
      %p335 = scmp.eq.s32.totalorder %s36, 0
      %p336 = por %p334, %p335
      %s338 = sadd.s32 %s337, 1
      %p341 = scmp.eq.s32.totalorder %s30, 1
      %p342 = scmp.ne.s32.totalorder %s337, %s339
      %p343 = scmp.eq.s32.totalorder %s30, 0
      %p344 = por %p342, %p343
      %p345 = scmp.ne.s32.totalorder %s337, %s339
      %p346 = scmp.eq.s32.totalorder %s35, 1
      %p347 = por %p345, %p346
      %p348 = scmp.ne.s32.totalorder %s339, %s340
      %p349 = scmp.eq.s32.totalorder %s35, 0
      %p350 = por %p348, %p349
      %p351 = scmp.ne.s32.totalorder %s339, %s340
      %p352 = scmp.eq.s32.totalorder %s36, 1
      %p353 = por %p351, %p352
      %p355 = scmp.ne.s32.totalorder %s340, %s354
      %p356 = scmp.eq.s32.totalorder %s36, 0
      %p357 = por %p355, %p356
      %s359 = sadd.s32 %s358, 1
      %p362 = scmp.eq.s32.totalorder %s30, 1
      %p363 = scmp.ne.s32.totalorder %s358, %s360
      %p364 = scmp.eq.s32.totalorder %s30, 0
      %p365 = por %p363, %p364
      %p366 = scmp.ne.s32.totalorder %s358, %s360
      %p367 = scmp.eq.s32.totalorder %s35, 1
      %p368 = por %p366, %p367
      %p369 = scmp.ne.s32.totalorder %s360, %s361
      %p370 = scmp.eq.s32.totalorder %s35, 0
      %p371 = por %p369, %p370
      %p372 = scmp.ne.s32.totalorder %s360, %s361
      %p373 = scmp.eq.s32.totalorder %s36, 1
      %p374 = por %p372, %p373
      %p376 = scmp.ne.s32.totalorder %s361, %s375
      %p377 = scmp.eq.s32.totalorder %s36, 0
      %p378 = por %p376, %p377
      %s380 = sadd.s32 %s379, 1
      %p383 = scmp.eq.s32.totalorder %s30, 1
      %p384 = scmp.ne.s32.totalorder %s379, %s381
      %p385 = scmp.eq.s32.totalorder %s30, 0
      %p386 = por %p384, %p385
      %p387 = scmp.ne.s32.totalorder %s379, %s381
      %p388 = scmp.eq.s32.totalorder %s35, 1
      %p389 = por %p387, %p388
      %p390 = scmp.ne.s32.totalorder %s381, %s382
      %p391 = scmp.eq.s32.totalorder %s35, 0
      %p392 = por %p390, %p391
      %p393 = scmp.ne.s32.totalorder %s381, %s382
      %p394 = scmp.eq.s32.totalorder %s36, 1
      %p395 = por %p393, %p394
      %p397 = scmp.ne.s32.totalorder %s382, %s396
      %p398 = scmp.eq.s32.totalorder %s36, 0
      %p399 = por %p397, %p398
      %s401 = sadd.s32 %s400, 1
      %p404 = scmp.eq.s32.totalorder %s30, 1
      %p405 = scmp.ne.s32.totalorder %s400, %s402
      %p406 = scmp.eq.s32.totalorder %s30, 0
      %p407 = por %p405, %p406
      %p408 = scmp.ne.s32.totalorder %s400, %s402
      %p409 = scmp.eq.s32.totalorder %s35, 1
      %p410 = por %p408, %p409
      %p411 = scmp.ne.s32.totalorder %s402, %s403
      %p412 = scmp.eq.s32.totalorder %s35, 0
      %p413 = por %p411, %p412
      %p414 = scmp.ne.s32.totalorder %s402, %s403
      %p415 = scmp.eq.s32.totalorder %s36, 1
      %p416 = por %p414, %p415
      %p418 = scmp.ne.s32.totalorder %s403, %s417
      %p419 = scmp.eq.s32.totalorder %s36, 0
      %p420 = por %p418, %p419
      %s422 = sadd.s32 %s421, 1
      %p425 = scmp.eq.s32.totalorder %s30, 1
      %p426 = scmp.ne.s32.totalorder %s421, %s423
      %p427 = scmp.eq.s32.totalorder %s30, 0
      %p428 = por %p426, %p427
      %p429 = scmp.ne.s32.totalorder %s421, %s423
      %p430 = scmp.eq.s32.totalorder %s35, 1
      %p431 = por %p429, %p430
      %p432 = scmp.ne.s32.totalorder %s423, %s424
      %p433 = scmp.eq.s32.totalorder %s35, 0
      %p434 = por %p432, %p433
      %p435 = scmp.ne.s32.totalorder %s423, %s424
      %p436 = scmp.eq.s32.totalorder %s36, 1
      %p437 = por %p435, %p436
      %p439 = scmp.ne.s32.totalorder %s424, %s438
      %p440 = scmp.eq.s32.totalorder %s36, 0
      %p441 = por %p439, %p440
      %s442 = ssub.s32 %s30, %s37
      %p443 = scmp.eq.s32.totalorder %s442, 0
      %s445 = sadd.s32 %s444, 1
      %s446 = scalar_select %p443, %s444, %s445
      %p449 = pneg %p443
      %p450 = scmp.eq.s32.totalorder %s30, 1
      %p451 = por %p449, %p450
      %p452 = scmp.ne.s32.totalorder %s444, %s447
      %p453 = scmp.eq.s32.totalorder %s30, 0
      %p454 = por %p452, %p453
      %p455 = scmp.ne.s32.totalorder %s444, %s447
      %p456 = scmp.eq.s32.totalorder %s35, 1
      %p457 = por %p455, %p456
      %p458 = scmp.ne.s32.totalorder %s447, %s448
      %p459 = scmp.eq.s32.totalorder %s35, 0
      %p460 = por %p458, %p459
      %p461 = scmp.ne.s32.totalorder %s447, %s448
      %p462 = scmp.eq.s32.totalorder %s36, 1
      %p463 = por %p461, %p462
      %p465 = scmp.ne.s32.totalorder %s448, %s464
      %p466 = scmp.eq.s32.totalorder %s36, 0
      %p467 = por %p465, %p466
      %s468 = ssub.s32 %s30, %s37
      %p469 = scmp.eq.s32.totalorder %s468, 0
      %s471 = sadd.s32 %s470, 1
      %s472 = scalar_select %p469, %s470, %s471
      %p475 = pneg %p469
      %p476 = scmp.eq.s32.totalorder %s30, 1
      %p477 = por %p475, %p476
      %p478 = scmp.ne.s32.totalorder %s470, %s473
      %p479 = scmp.eq.s32.totalorder %s30, 0
      %p480 = por %p478, %p479
      %p481 = scmp.ne.s32.totalorder %s470, %s473
      %p482 = scmp.eq.s32.totalorder %s35, 1
      %p483 = por %p481, %p482
      %p484 = scmp.ne.s32.totalorder %s473, %s474
      %p485 = scmp.eq.s32.totalorder %s35, 0
      %p486 = por %p484, %p485
      %p487 = scmp.ne.s32.totalorder %s473, %s474
      %p488 = scmp.eq.s32.totalorder %s36, 1
      %p489 = por %p487, %p488
      %p491 = scmp.ne.s32.totalorder %s474, %s490
      %p492 = scmp.eq.s32.totalorder %s36, 0
      %p493 = por %p491, %p492
      %p494 = scmp.le.s32.totalorder 1, %s30
      %p495 = scmp.lt.s32.totalorder %s30, 3
      %p496 = pnand %p494, %p495
      %p497 = pneg %p496
      // Predicated region
      $region9: #{aucifar_forward.1} parent=5 // pred_check
        _
      $region10: #{aucifar_forward.1} parent=5 // pred_check_branch
        %499 = sbr.rel (%p496) target = $region12
      $region11: #{aucifar_forward.1} parent=5 // pred_region
        %s500 = ssub.s32 %s30, 1
        // Predicated region
        $region13: #{aucifar_forward.1} parent=11 // pred_check
          %p501 = pneg %p77
        $region14: #{aucifar_forward.1} parent=11 // pred_check_branch
          %503 = sbr.rel (%p501) target = $region16
        $region15: #{aucifar_forward.1} parent=11 // pred_region
          _
        $region16: #{aucifar_forward.1} parent=11 // pred_fallthru
          _
        // Predicated region
        $region17: #{aucifar_forward.1} parent=11 // pred_check
          %p504 = pneg %p98
        $region18: #{aucifar_forward.1} parent=11 // pred_check_branch
          %506 = sbr.rel (%p504) target = $region20
        $region19: #{aucifar_forward.1} parent=11 // pred_region
          _
        $region20: #{aucifar_forward.1} parent=11 // pred_fallthru
          _
        // Predicated region
        $region21: #{aucifar_forward.1} parent=11 // pred_check
          %p507 = pneg %p119
        $region22: #{aucifar_forward.1} parent=11 // pred_check_branch
          %509 = sbr.rel (%p507) target = $region24
        $region23: #{aucifar_forward.1} parent=11 // pred_region
          _
        $region24: #{aucifar_forward.1} parent=11 // pred_fallthru
          _
        // Predicated region
        $region25: #{aucifar_forward.1} parent=11 // pred_check
          %p510 = pneg %p140
        $region26: #{aucifar_forward.1} parent=11 // pred_check_branch
          %512 = sbr.rel (%p510) target = $region28
        $region27: #{aucifar_forward.1} parent=11 // pred_region
          _
        $region28: #{aucifar_forward.1} parent=11 // pred_fallthru
          _
        // Predicated region
        $region29: #{aucifar_forward.1} parent=11 // pred_check
          %p513 = pneg %p161
        $region30: #{aucifar_forward.1} parent=11 // pred_check_branch
          %515 = sbr.rel (%p513) target = $region32
        $region31: #{aucifar_forward.1} parent=11 // pred_region
          %517 = vsyncadd [#allocation3], 0
          %s518 = sshll.u32 %s5, 4
          %s519 = int_to_ptr.hbm [resolvable:$true] %s518
          %s520 = sshll.u32 [#allocation2], 4
          %s521 = int_to_ptr.vmem [resolvable:$true] %s520
          %526 = dma.hbm_to_vmem [thread:$0]  %s519, 12288, %s521, [#allocation3], 128, 128, 8
        $region32: #{aucifar_forward.1} parent=11 // pred_fallthru
          _
        // Predicated region
        $region33: #{aucifar_forward.1} parent=11 // pred_check
          %p527 = pneg %p182
        $region34: #{aucifar_forward.1} parent=11 // pred_check_branch
          %529 = sbr.rel (%p527) target = $region36
        $region35: #{aucifar_forward.1} parent=11 // pred_region
          _
        $region36: #{aucifar_forward.1} parent=11 // pred_fallthru
          _
        // Predicated region
        $region37: #{aucifar_forward.1} parent=11 // pred_check
          %p530 = pneg %p203
        $region38: #{aucifar_forward.1} parent=11 // pred_check_branch
          %532 = sbr.rel (%p530) target = $region40
        $region39: #{aucifar_forward.1} parent=11 // pred_region
          _
        $region40: #{aucifar_forward.1} parent=11 // pred_fallthru
          _
        // Predicated region
        $region41: #{aucifar_forward.1} parent=11 // pred_check
          %p533 = pneg %p224
        $region42: #{aucifar_forward.1} parent=11 // pred_check_branch
          %535 = sbr.rel (%p533) target = $region44
        $region43: #{aucifar_forward.1} parent=11 // pred_region
          %537 = vsyncadd [#allocation5], 0
          %s538 = sshll.u32 %s8, 4
          %s539 = int_to_ptr.hbm [resolvable:$true] %s538
          %s540 = sshll.u32 [#allocation4], 4
          %s541 = int_to_ptr.vmem [resolvable:$true] %s540
          %546 = dma.hbm_to_vmem [thread:$0]  %s539, 12288, %s541, [#allocation5], 128, 128, 8
        $region44: #{aucifar_forward.1} parent=11 // pred_fallthru
          _
        // Predicated region
        $region45: #{aucifar_forward.1} parent=11 // pred_check
          %p547 = pneg %p245
        $region46: #{aucifar_forward.1} parent=11 // pred_check_branch
          %549 = sbr.rel (%p547) target = $region48
        $region47: #{aucifar_forward.1} parent=11 // pred_region
          _
        $region48: #{aucifar_forward.1} parent=11 // pred_fallthru
          _
        // Predicated region
        $region49: #{aucifar_forward.1} parent=11 // pred_check
          %p550 = pneg %p266
        $region50: #{aucifar_forward.1} parent=11 // pred_check_branch
          %552 = sbr.rel (%p550) target = $region52
        $region51: #{aucifar_forward.1} parent=11 // pred_region
          _
        $region52: #{aucifar_forward.1} parent=11 // pred_fallthru
          _
        // Predicated region
        $region53: #{aucifar_forward.1} parent=11 // pred_check
          %p553 = pneg %p287
        $region54: #{aucifar_forward.1} parent=11 // pred_check_branch
          %555 = sbr.rel (%p553) target = $region56
        $region55: #{aucifar_forward.1} parent=11 // pred_region
          %557 = vsyncadd [#allocation5], 0
          %s558 = sshll.u32 %s11, 4
          %s559 = int_to_ptr.hbm [resolvable:$true] %s558
          %s560 = sshll.u32 [#allocation6], 4
          %s561 = int_to_ptr.vmem [resolvable:$true] %s560
          %566 = dma.hbm_to_vmem [thread:$0]  %s559, 12288, %s561, [#allocation5], 128, 128, 8
        $region56: #{aucifar_forward.1} parent=11 // pred_fallthru
          _
        // Predicated region
        $region57: #{aucifar_forward.1} parent=11 // pred_check
          %p567 = pneg %p308
        $region58: #{aucifar_forward.1} parent=11 // pred_check_branch
          %569 = sbr.rel (%p567) target = $region60
        $region59: #{aucifar_forward.1} parent=11 // pred_region
          _
        $region60: #{aucifar_forward.1} parent=11 // pred_fallthru
          _
        // Predicated region
        $region61: #{aucifar_forward.1} parent=11 // pred_check
          %p570 = pneg %p329
        $region62: #{aucifar_forward.1} parent=11 // pred_check_branch
          %572 = sbr.rel (%p570) target = $region64
        $region63: #{aucifar_forward.1} parent=11 // pred_region
          _
        $region64: #{aucifar_forward.1} parent=11 // pred_fallthru
          _
        // Predicated region
        $region65: #{aucifar_forward.1} parent=11 // pred_check
          %p573 = pneg %p350
        $region66: #{aucifar_forward.1} parent=11 // pred_check_branch
          %575 = sbr.rel (%p573) target = $region68
        $region67: #{aucifar_forward.1} parent=11 // pred_region
          %577 = vsyncadd [#allocation8], 0
          %s578 = sshll.u32 %s14, 4
          %s579 = int_to_ptr.hbm [resolvable:$true] %s578
          %s580 = sshll.u32 [#allocation7], 4
          %s581 = int_to_ptr.vmem [resolvable:$true] %s580
          %586 = dma.hbm_to_vmem [thread:$0]  %s579, 12288, %s581, [#allocation8], 128, 128, 8
        $region68: #{aucifar_forward.1} parent=11 // pred_fallthru
          _
        // Predicated region
        $region69: #{aucifar_forward.1} parent=11 // pred_check
          %p587 = pneg %p371
        $region70: #{aucifar_forward.1} parent=11 // pred_check_branch
          %589 = sbr.rel (%p587) target = $region72
        $region71: #{aucifar_forward.1} parent=11 // pred_region
          _
        $region72: #{aucifar_forward.1} parent=11 // pred_fallthru
          _
        // Predicated region
        $region73: #{aucifar_forward.1} parent=11 // pred_check
          %p590 = pneg %p392
        $region74: #{aucifar_forward.1} parent=11 // pred_check_branch
          %592 = sbr.rel (%p590) target = $region76
        $region75: #{aucifar_forward.1} parent=11 // pred_region
          _
        $region76: #{aucifar_forward.1} parent=11 // pred_fallthru
          _
        // Predicated region
        $region77: #{aucifar_forward.1} parent=11 // pred_check
          %p593 = pneg %p413
        $region78: #{aucifar_forward.1} parent=11 // pred_check_branch
          %595 = sbr.rel (%p593) target = $region80
        $region79: #{aucifar_forward.1} parent=11 // pred_region
          %597 = vsyncadd [#allocation8], 0
          %s598 = sshll.u32 %s17, 4
          %s599 = int_to_ptr.hbm [resolvable:$true] %s598
          %s600 = sshll.u32 [#allocation9], 4
          %s601 = int_to_ptr.vmem [resolvable:$true] %s600
          %606 = dma.hbm_to_vmem [thread:$0]  %s599, 6144, %s601, [#allocation8], 64, 64, 4
        $region80: #{aucifar_forward.1} parent=11 // pred_fallthru
          _
        // Predicated region
        $region81: #{aucifar_forward.1} parent=11 // pred_check
          %p607 = pneg %p434
        $region82: #{aucifar_forward.1} parent=11 // pred_check_branch
          %609 = sbr.rel (%p607) target = $region84
        $region83: #{aucifar_forward.1} parent=11 // pred_region
          _
        $region84: #{aucifar_forward.1} parent=11 // pred_fallthru
          _
      $region12: #{aucifar_forward.1} parent=5 // pred_fallthru
        _
      %p610 = scmp.lt.s32.totalorder %s30, 2
      // Predicated region
      $region85: #{aucifar_forward.1} parent=5 // pred_check
        %p611 = pneg %p610
      $region86: #{aucifar_forward.1} parent=5 // pred_check_branch
        %613 = sbr.rel (%p611) target = $region88
      $region87: #{aucifar_forward.1} parent=5 // pred_region
        // Predicated region
        $region89: #{aucifar_forward.1} parent=87 // pred_check
          %p614 = pneg %p50
        $region90: #{aucifar_forward.1} parent=87 // pred_check_branch
          %616 = sbr.rel (%p614) target = $region92
        $region91: #{aucifar_forward.1} parent=87 // pred_region
          %p617 = scmp.lt.s32.totalorder %s30, 1
          %s618 = scalar_select %p617, %s30, 1
          %s619 = smul.addr %s618, 4
          %s620 = smul.addr %s619, 8
          %s621 = scalar_lea.vmem %s0, %s620
        $region92: #{aucifar_forward.1} parent=87 // pred_fallthru
          _
      $region88: #{aucifar_forward.1} parent=5 // pred_fallthru
        _
      %p622 = scmp.le.s32.totalorder 1, %s30
      %p623 = scmp.lt.s32.totalorder %s30, 3
      %p624 = pnand %p622, %p623
      %p625 = pneg %p624
      // Predicated region
      $region93: #{aucifar_forward.1} parent=5 // pred_check
        _
      $region94: #{aucifar_forward.1} parent=5 // pred_check_branch
        %627 = sbr.rel (%p624) target = $region96
      $region95: #{aucifar_forward.1} parent=5 // pred_region
        %s628 = ssub.s32 %s30, 1
        // Predicated region
        $region97: #{aucifar_forward.1} parent=95 // pred_check
          %p629 = pneg %p161
        $region98: #{aucifar_forward.1} parent=95 // pred_check_branch
          %631 = sbr.rel (%p629) target = $region100
        $region99: #{aucifar_forward.1} parent=95 // pred_region
          %633 = dma.done [#allocation3], 12288
        $region100: #{aucifar_forward.1} parent=95 // pred_fallthru
          _
        // Predicated region
        $region101: #{aucifar_forward.1} parent=95 // pred_check
          %p634 = pneg %p224
        $region102: #{aucifar_forward.1} parent=95 // pred_check_branch
          %636 = sbr.rel (%p634) target = $region104
        $region103: #{aucifar_forward.1} parent=95 // pred_region
          %638 = dma.done [#allocation5], 12288
        $region104: #{aucifar_forward.1} parent=95 // pred_fallthru
          _
        // Predicated region
        $region105: #{aucifar_forward.1} parent=95 // pred_check
          %p639 = pneg %p287
        $region106: #{aucifar_forward.1} parent=95 // pred_check_branch
          %641 = sbr.rel (%p639) target = $region108
        $region107: #{aucifar_forward.1} parent=95 // pred_region
          %643 = dma.done [#allocation5], 12288
        $region108: #{aucifar_forward.1} parent=95 // pred_fallthru
          _
        // Predicated region
        $region109: #{aucifar_forward.1} parent=95 // pred_check
          %p644 = pneg %p350
        $region110: #{aucifar_forward.1} parent=95 // pred_check_branch
          %646 = sbr.rel (%p644) target = $region112
        $region111: #{aucifar_forward.1} parent=95 // pred_region
          %648 = dma.done [#allocation8], 12288
        $region112: #{aucifar_forward.1} parent=95 // pred_fallthru
          _
        // Predicated region
        $region113: #{aucifar_forward.1} parent=95 // pred_check
          %p649 = pneg %p413
        $region114: #{aucifar_forward.1} parent=95 // pred_check_branch
          %651 = sbr.rel (%p649) target = $region116
        $region115: #{aucifar_forward.1} parent=95 // pred_region
          %653 = dma.done [#allocation8], 6144
        $region116: #{aucifar_forward.1} parent=95 // pred_fallthru
          _
        %p654 = scmp.lt.s32.totalorder %s35, 1
        %s655 = scalar_select %p654, %s35, 1
        %s656 = smul.addr %s655, 4
        %s657 = smul.addr %s656, 8
        %s658 = scalar_lea.vmem %s0, %s657
        %p659 = pneg %p56
        %p660 = pneg %p53
        %p661 = pneg %p77
        %p662 = pneg %p74
        %p663 = pneg %p98
        %p664 = pneg %p95
        %p665 = pneg %p119
        %p666 = pneg %p116
        %p667 = pneg %p140
        %p668 = pneg %p137
        %p669 = pneg %p161
        %p670 = pneg %p158
        %p671 = pneg %p182
        %p672 = pneg %p179
        %p673 = pneg %p203
        %p674 = pneg %p200
        %p675 = pneg %p224
        %p676 = pneg %p221
        %p677 = pneg %p245
        %p678 = pneg %p242
        %p679 = pneg %p266
        %p680 = pneg %p263
        %p681 = pneg %p287
        %p682 = pneg %p284
        %p683 = pneg %p308
        %p684 = pneg %p305
        %p685 = pneg %p329
        %p686 = pneg %p326
        %p687 = pneg %p350
        %p688 = pneg %p347
        %p689 = pneg %p371
        %p690 = pneg %p368
        %p691 = pneg %p392
        %p692 = pneg %p389
        %p693 = pneg %p413
        %p694 = pneg %p410
        %p695 = pneg %p434
        %p696 = pneg %p431
        %p697 = pneg %p460
        %p698 = pneg %p457
        %p699 = scmp.lt.s32.totalorder %s35, 1
        %s700 = scalar_select %p699, %s35, 1
        %s701 = smul.addr %s700, 2
        %s702 = smul.addr %s701, 4
        %s703 = scalar_lea.vmem %s19, %s702
        %p704 = pneg %p486
        %p705 = pneg %p483
        %p706 = scmp.lt.s32.totalorder %s35, 1
        %s707 = scalar_select %p706, %s35, 1
        %s708 = smul.addr %s707, 4
        %s709 = smul.addr %s708, 8
        %s710 = scalar_lea.vmem %s20, %s709
        %p711 = scmp.lt.s32.totalorder %s35, 1
        %s712 = scalar_select %p711, %s35, 1
        %s713 = smul.addr %s712, 4
        %s714 = smul.addr %s713, 8
        %s715 = scalar_lea.vmem %s0, %s714
        %p716 = scmp.lt.s32.totalorder %s35, 1
        %s717 = scalar_select %p716, %s35, 1
        %s718 = smul.addr %s717, 2
        %s719 = smul.addr %s718, 4
        %s720 = scalar_lea.vmem %s19, %s719
        %p721 = scmp.lt.s32.totalorder %s35, 1
        %s722 = scalar_select %p721, %s35, 1
        %s723 = smul.addr %s722, 4
        %s724 = smul.addr %s723, 8
        %s725 = scalar_lea.vmem %s20, %s724
        %v727 = vld [vmem:[%s715] sm:$0xff]
        %v728 = vld [vmem:[%s715 + $0x8] sm:$0xff]
        %v729 = vld [vmem:[%s715 + $0x10] sm:$0xff]
        %v730 = vld [vmem:[%s715 + $0x18] sm:$0xff]
        %v731 = vpack.c.bf16 %v728, %v727
        %v732 = vpack.c.bf16 %v730, %v729
        %v733 = vld [vmem:[%s3] sm:$0x3]
        %v734 = vld [vmem:[%s1] sm:$0xf]
        %v735 = vld [vmem:[%s1 + $0x4] sm:$0xf]
        %v738 = vunpack.c.l.b16 %v734
        %v739 = vunpack.c.l.b16 %v735
        %v740 = vpack.c.b16 %v739, %v738
        %vm741 = vcmask 261120
        %v743 = vsel %vm741, %v740, 0
        %745 = vmatpush.bf16.msra.mxu0 0
        %746 = vmatpush.bf16.msra.mxu0 0
        %747 = vmatpush.bf16.msra.mxu0 0
        %748 = vmatpush.bf16.msra.mxu0 0
        %749 = vmatpush.bf16.msra.mxu0 0
        %750 = vmatpush.bf16.msra.mxu0 0
        %751 = vmatpush.bf16.msra.mxu0 %v732
        %752 = vmatpush.bf16.msra.mxu0 %v731
        %753 = vmatmul.bf16.gmra.mxu0 %v743
        %v754 = vpop.f32.mrf.mxu0
        %v755 = vadd.f32 0.0, %v754
        %v756 = vpop.f32.mrf.mxu0
        %v757 = vadd.f32 0.0, %v756
        %758 = vdwg.mxu0
        %v759 = vpack.c.bf16 %v757, %v755
        %v760 = vld [vmem:[%s2] sm:$0xff]
        %v761 = vld [vmem:[%s2 + $0x8] sm:$0xff]
        %v762 = vld [vmem:[%s2 + $0x10] sm:$0xff]
        %v763 = vld [vmem:[%s2 + $0x18] sm:$0xff]
        %v764 = vld [vmem:[%s2 + $0x20] sm:$0xff]
        %v765 = vld [vmem:[%s2 + $0x28] sm:$0xff]
        %v766 = vld [vmem:[%s2 + $0x30] sm:$0xff]
        %v767 = vld [vmem:[%s2 + $0x38] sm:$0xff]
        %v768 = vld [vmem:[%s2 + $0x40] sm:$0xff]
        %v769 = vld [vmem:[%s2 + $0x48] sm:$0xff]
        %v770 = vld [vmem:[%s2 + $0x50] sm:$0xff]
        %v771 = vld [vmem:[%s2 + $0x58] sm:$0xff]
        %v784 = vunpack.c.l.b16 %v760
        %v785 = vunpack.c.h.b16 %v760
        %v786 = vunpack.c.l.b16 %v761
        %v787 = vunpack.c.h.b16 %v761
        %v788 = vunpack.c.l.b16 %v762
        %v789 = vunpack.c.h.b16 %v762
        %v790 = vunpack.c.l.b16 %v763
        %v791 = vunpack.c.h.b16 %v763
        %v792 = vunpack.c.l.b16 %v764
        %v793 = vunpack.c.h.b16 %v764
        %v794 = vunpack.c.l.b16 %v765
        %v795 = vunpack.c.h.b16 %v765
        %v796 = vunpack.c.l.b16 %v766
        %v797 = vunpack.c.h.b16 %v766
        %v798 = vunpack.c.l.b16 %v767
        %v799 = vunpack.c.h.b16 %v767
        %v800 = vunpack.c.l.b16 %v768
        %v801 = vunpack.c.h.b16 %v768
        %v802 = vunpack.c.l.b16 %v769
        %v803 = vunpack.c.h.b16 %v769
        %v804 = vunpack.c.l.b16 %v770
        %v805 = vunpack.c.h.b16 %v770
        %v806 = vunpack.c.l.b16 %v771
        %v807 = vunpack.c.h.b16 %v771
        %v808 = vpack.c.b16 %v786, %v784
        %v809 = vpack.c.b16 %v787, %v785
        %v810 = vpack.c.b16 %v790, %v788
        %v811 = vpack.c.b16 %v791, %v789
        %v812 = vpack.c.b16 %v794, %v792
        %v813 = vpack.c.b16 %v795, %v793
        %v814 = vpack.c.b16 %v798, %v796
        %v815 = vpack.c.b16 %v799, %v797
        %v816 = vpack.c.b16 %v802, %v800
        %v817 = vpack.c.b16 %v803, %v801
        %v818 = vpack.c.b16 %v806, %v804
        %v819 = vpack.c.b16 %v807, %v805
        %vm832 = vcmask 785408
        %v834 = vsel %vm832, %v759, 0
        %836 = vmatpush.bf16.msra.mxu0 0
        %837 = vmatpush.bf16.msra.mxu0 0
        %838 = vmatpush.bf16.msra.mxu0 %v818
        %839 = vmatpush.bf16.msra.mxu0 %v816
        %840 = vmatpush.bf16.msra.mxu0 %v814
        %841 = vmatpush.bf16.msra.mxu0 %v812
        %842 = vmatpush.bf16.msra.mxu0 %v810
        %843 = vmatpush.bf16.msra.mxu0 %v808
        %844 = vmatmul.bf16.gmra.mxu0 %v834
        %v845 = vpop.f32.mrf.mxu0
        %v846 = vadd.f32 0.0, %v845
        %v847 = vpop.f32.mrf.mxu0
        %v848 = vadd.f32 0.0, %v847
        %849 = vdwg.mxu0
        %850 = vmatpush.bf16.msra.mxu0 0
        %851 = vmatpush.bf16.msra.mxu0 0
        %852 = vmatpush.bf16.msra.mxu0 %v819
        %853 = vmatpush.bf16.msra.mxu0 %v817
        %854 = vmatpush.bf16.msra.mxu0 %v815
        %855 = vmatpush.bf16.msra.mxu0 %v813
        %856 = vmatpush.bf16.msra.mxu0 %v811
        %857 = vmatpush.bf16.msra.mxu0 %v809
        %858 = vmatmul.bf16.gmra.mxu0 %v834
        %v859 = vpop.f32.mrf.mxu0
        %v860 = vadd.f32 0.0, %v859
        %v861 = vpop.f32.mrf.mxu0
        %v862 = vadd.f32 0.0, %v861
        %863 = vdwg.mxu0
        %v865 = vperm.slane %v733, 0
        %v866 = vperm.slane %v733, 1
        %v869 = vadd.f32 %v865, %v846
        %v870 = vadd.f32 %v866, %v860
        %v871 = vadd.f32 %v865, %v848
        %v872 = vadd.f32 %v866, %v862
        %s873 = scalar_lea.vmem %s1, 8
        %v874 = vld [vmem:[%s873] sm:$0xf]
        %v875 = vld [vmem:[%s873 + $0x4] sm:$0xf]
        %v878 = vunpack.c.l.b16 %v874
        %v879 = vunpack.c.l.b16 %v875
        %v880 = vpack.c.b16 %v879, %v878
        %v882 = vsel %vm741, %v880, 0
        %884 = vmatpush.bf16.msra.mxu0 0
        %885 = vmatpush.bf16.msra.mxu0 0
        %886 = vmatpush.bf16.msra.mxu0 0
        %887 = vmatpush.bf16.msra.mxu0 0
        %888 = vmatpush.bf16.msra.mxu0 0
        %889 = vmatpush.bf16.msra.mxu0 0
        %890 = vmatpush.bf16.msra.mxu0 %v732
        %891 = vmatpush.bf16.msra.mxu0 %v731
        %892 = vmatmul.bf16.gmra.mxu0 %v882
        %v893 = vpop.f32.mrf.mxu0
        %v894 = vadd.f32 0.0, %v893
        %v895 = vpop.f32.mrf.mxu0
        %v896 = vadd.f32 0.0, %v895
        %897 = vdwg.mxu0
        %v898 = vpack.c.bf16 %v896, %v894
        %s899 = scalar_lea.vmem %s2, 96
        %v900 = vld [vmem:[%s899] sm:$0xff]
        %v901 = vld [vmem:[%s899 + $0x8] sm:$0xff]
        %v902 = vld [vmem:[%s899 + $0x10] sm:$0xff]
        %v903 = vld [vmem:[%s899 + $0x18] sm:$0xff]
        %v904 = vld [vmem:[%s899 + $0x20] sm:$0xff]
        %v905 = vld [vmem:[%s899 + $0x28] sm:$0xff]
        %v906 = vld [vmem:[%s899 + $0x30] sm:$0xff]
        %v907 = vld [vmem:[%s899 + $0x38] sm:$0xff]
        %v908 = vld [vmem:[%s899 + $0x40] sm:$0xff]
        %v909 = vld [vmem:[%s899 + $0x48] sm:$0xff]
        %v910 = vld [vmem:[%s899 + $0x50] sm:$0xff]
        %v911 = vld [vmem:[%s899 + $0x58] sm:$0xff]
        %v924 = vunpack.c.l.b16 %v900
        %v925 = vunpack.c.h.b16 %v900
        %v926 = vunpack.c.l.b16 %v901
        %v927 = vunpack.c.h.b16 %v901
        %v928 = vunpack.c.l.b16 %v902
        %v929 = vunpack.c.h.b16 %v902
        %v930 = vunpack.c.l.b16 %v903
        %v931 = vunpack.c.h.b16 %v903
        %v932 = vunpack.c.l.b16 %v904
        %v933 = vunpack.c.h.b16 %v904
        %v934 = vunpack.c.l.b16 %v905
        %v935 = vunpack.c.h.b16 %v905
        %v936 = vunpack.c.l.b16 %v906
        %v937 = vunpack.c.h.b16 %v906
        %v938 = vunpack.c.l.b16 %v907
        %v939 = vunpack.c.h.b16 %v907
        %v940 = vunpack.c.l.b16 %v908
        %v941 = vunpack.c.h.b16 %v908
        %v942 = vunpack.c.l.b16 %v909
        %v943 = vunpack.c.h.b16 %v909
        %v944 = vunpack.c.l.b16 %v910
        %v945 = vunpack.c.h.b16 %v910
        %v946 = vunpack.c.l.b16 %v911
        %v947 = vunpack.c.h.b16 %v911
        %v948 = vpack.c.b16 %v926, %v924
        %v949 = vpack.c.b16 %v927, %v925
        %v950 = vpack.c.b16 %v930, %v928
        %v951 = vpack.c.b16 %v931, %v929
        %v952 = vpack.c.b16 %v934, %v932
        %v953 = vpack.c.b16 %v935, %v933
        %v954 = vpack.c.b16 %v938, %v936
        %v955 = vpack.c.b16 %v939, %v937
        %v956 = vpack.c.b16 %v942, %v940
        %v957 = vpack.c.b16 %v943, %v941
        %v958 = vpack.c.b16 %v946, %v944
        %v959 = vpack.c.b16 %v947, %v945
        %v973 = vsel %vm832, %v898, 0
        %975 = vmatpush.bf16.msra.mxu0 0
        %976 = vmatpush.bf16.msra.mxu0 0
        %977 = vmatpush.bf16.msra.mxu0 %v958
        %978 = vmatpush.bf16.msra.mxu0 %v956
        %979 = vmatpush.bf16.msra.mxu0 %v954
        %980 = vmatpush.bf16.msra.mxu0 %v952
        %981 = vmatpush.bf16.msra.mxu0 %v950
        %982 = vmatpush.bf16.msra.mxu0 %v948
        %983 = vmatmul.bf16.gmra.mxu0 %v973
        %v984 = vpop.f32.mrf.mxu0
        %v985 = vadd.f32 0.0, %v984
        %v986 = vpop.f32.mrf.mxu0
        %v987 = vadd.f32 0.0, %v986
        %988 = vdwg.mxu0
        %989 = vmatpush.bf16.msra.mxu0 0
        %990 = vmatpush.bf16.msra.mxu0 0
        %991 = vmatpush.bf16.msra.mxu0 %v959
        %992 = vmatpush.bf16.msra.mxu0 %v957
        %993 = vmatpush.bf16.msra.mxu0 %v955
        %994 = vmatpush.bf16.msra.mxu0 %v953
        %995 = vmatpush.bf16.msra.mxu0 %v951
        %996 = vmatpush.bf16.msra.mxu0 %v949
        %997 = vmatmul.bf16.gmra.mxu0 %v973
        %v998 = vpop.f32.mrf.mxu0
        %v999 = vadd.f32 0.0, %v998
        %v1000 = vpop.f32.mrf.mxu0
        %v1001 = vadd.f32 0.0, %v1000
        %1002 = vdwg.mxu0
        %v1003 = vadd.f32 %v869, %v985
        %v1004 = vadd.f32 %v870, %v999
        %v1005 = vadd.f32 %v871, %v987
        %v1006 = vadd.f32 %v872, %v1001
        %s1007 = scalar_lea.vmem %s1, 16
        %v1008 = vld [vmem:[%s1007] sm:$0xf]
        %v1009 = vld [vmem:[%s1007 + $0x4] sm:$0xf]
        %v1012 = vunpack.c.l.b16 %v1008
        %v1013 = vunpack.c.l.b16 %v1009
        %v1014 = vpack.c.b16 %v1013, %v1012
        %v1016 = vsel %vm741, %v1014, 0
        %1018 = vmatpush.bf16.msra.mxu0 0
        %1019 = vmatpush.bf16.msra.mxu0 0
        %1020 = vmatpush.bf16.msra.mxu0 0
        %1021 = vmatpush.bf16.msra.mxu0 0
        %1022 = vmatpush.bf16.msra.mxu0 0
        %1023 = vmatpush.bf16.msra.mxu0 0
        %1024 = vmatpush.bf16.msra.mxu0 %v732
        %1025 = vmatpush.bf16.msra.mxu0 %v731
        %1026 = vmatmul.bf16.gmra.mxu0 %v1016
        %v1027 = vpop.f32.mrf.mxu0
        %v1028 = vadd.f32 0.0, %v1027
        %v1029 = vpop.f32.mrf.mxu0
        %v1030 = vadd.f32 0.0, %v1029
        %1031 = vdwg.mxu0
        %v1032 = vpack.c.bf16 %v1030, %v1028
        %s1033 = scalar_lea.vmem %s2, 192
        %v1034 = vld [vmem:[%s1033] sm:$0xff]
        %v1035 = vld [vmem:[%s1033 + $0x8] sm:$0xff]
        %v1036 = vld [vmem:[%s1033 + $0x10] sm:$0xff]
        %v1037 = vld [vmem:[%s1033 + $0x18] sm:$0xff]
        %v1038 = vld [vmem:[%s1033 + $0x20] sm:$0xff]
        %v1039 = vld [vmem:[%s1033 + $0x28] sm:$0xff]
        %v1040 = vld [vmem:[%s1033 + $0x30] sm:$0xff]
        %v1041 = vld [vmem:[%s1033 + $0x38] sm:$0xff]
        %v1042 = vld [vmem:[%s1033 + $0x40] sm:$0xff]
        %v1043 = vld [vmem:[%s1033 + $0x48] sm:$0xff]
        %v1044 = vld [vmem:[%s1033 + $0x50] sm:$0xff]
        %v1045 = vld [vmem:[%s1033 + $0x58] sm:$0xff]
        %v1058 = vunpack.c.l.b16 %v1034
        %v1059 = vunpack.c.h.b16 %v1034
        %v1060 = vunpack.c.l.b16 %v1035
        %v1061 = vunpack.c.h.b16 %v1035
        %v1062 = vunpack.c.l.b16 %v1036
        %v1063 = vunpack.c.h.b16 %v1036
        %v1064 = vunpack.c.l.b16 %v1037
        %v1065 = vunpack.c.h.b16 %v1037
        %v1066 = vunpack.c.l.b16 %v1038
        %v1067 = vunpack.c.h.b16 %v1038
        %v1068 = vunpack.c.l.b16 %v1039
        %v1069 = vunpack.c.h.b16 %v1039
        %v1070 = vunpack.c.l.b16 %v1040
        %v1071 = vunpack.c.h.b16 %v1040
        %v1072 = vunpack.c.l.b16 %v1041
        %v1073 = vunpack.c.h.b16 %v1041
        %v1074 = vunpack.c.l.b16 %v1042
        %v1075 = vunpack.c.h.b16 %v1042
        %v1076 = vunpack.c.l.b16 %v1043
        %v1077 = vunpack.c.h.b16 %v1043
        %v1078 = vunpack.c.l.b16 %v1044
        %v1079 = vunpack.c.h.b16 %v1044
        %v1080 = vunpack.c.l.b16 %v1045
        %v1081 = vunpack.c.h.b16 %v1045
        %v1082 = vpack.c.b16 %v1060, %v1058
        %v1083 = vpack.c.b16 %v1061, %v1059
        %v1084 = vpack.c.b16 %v1064, %v1062
        %v1085 = vpack.c.b16 %v1065, %v1063
        %v1086 = vpack.c.b16 %v1068, %v1066
        %v1087 = vpack.c.b16 %v1069, %v1067
        %v1088 = vpack.c.b16 %v1072, %v1070
        %v1089 = vpack.c.b16 %v1073, %v1071
        %v1090 = vpack.c.b16 %v1076, %v1074
        %v1091 = vpack.c.b16 %v1077, %v1075
        %v1092 = vpack.c.b16 %v1080, %v1078
        %v1093 = vpack.c.b16 %v1081, %v1079
        %v1107 = vsel %vm832, %v1032, 0
        %1109 = vmatpush.bf16.msra.mxu0 0
        %1110 = vmatpush.bf16.msra.mxu0 0
        %1111 = vmatpush.bf16.msra.mxu0 %v1092
        %1112 = vmatpush.bf16.msra.mxu0 %v1090
        %1113 = vmatpush.bf16.msra.mxu0 %v1088
        %1114 = vmatpush.bf16.msra.mxu0 %v1086
        %1115 = vmatpush.bf16.msra.mxu0 %v1084
        %1116 = vmatpush.bf16.msra.mxu0 %v1082
        %1117 = vmatmul.bf16.gmra.mxu0 %v1107
        %v1118 = vpop.f32.mrf.mxu0
        %v1119 = vadd.f32 0.0, %v1118
        %v1120 = vpop.f32.mrf.mxu0
        %v1121 = vadd.f32 0.0, %v1120
        %1122 = vdwg.mxu0
        %1123 = vmatpush.bf16.msra.mxu0 0
        %1124 = vmatpush.bf16.msra.mxu0 0
        %1125 = vmatpush.bf16.msra.mxu0 %v1093
        %1126 = vmatpush.bf16.msra.mxu0 %v1091
        %1127 = vmatpush.bf16.msra.mxu0 %v1089
        %1128 = vmatpush.bf16.msra.mxu0 %v1087
        %1129 = vmatpush.bf16.msra.mxu0 %v1085
        %1130 = vmatpush.bf16.msra.mxu0 %v1083
        %1131 = vmatmul.bf16.gmra.mxu0 %v1107
        %v1132 = vpop.f32.mrf.mxu0
        %v1133 = vadd.f32 0.0, %v1132
        %v1134 = vpop.f32.mrf.mxu0
        %v1135 = vadd.f32 0.0, %v1134
        %1136 = vdwg.mxu0
        %v1137 = vadd.f32 %v1003, %v1119
        %v1138 = vadd.f32 %v1004, %v1133
        %v1139 = vadd.f32 %v1005, %v1121
        %v1140 = vadd.f32 %v1006, %v1135
        %s1141 = scalar_lea.vmem %s1, 24
        %v1142 = vld [vmem:[%s1141] sm:$0xf]
        %v1143 = vld [vmem:[%s1141 + $0x4] sm:$0xf]
        %v1146 = vunpack.c.l.b16 %v1142
        %v1147 = vunpack.c.l.b16 %v1143
        %v1148 = vpack.c.b16 %v1147, %v1146
        %v1150 = vsel %vm741, %v1148, 0
        %1152 = vmatpush.bf16.msra.mxu0 0
        %1153 = vmatpush.bf16.msra.mxu0 0
        %1154 = vmatpush.bf16.msra.mxu0 0
        %1155 = vmatpush.bf16.msra.mxu0 0
        %1156 = vmatpush.bf16.msra.mxu0 0
        %1157 = vmatpush.bf16.msra.mxu0 0
        %1158 = vmatpush.bf16.msra.mxu0 %v732
        %1159 = vmatpush.bf16.msra.mxu0 %v731
        %1160 = vmatmul.bf16.gmra.mxu0 %v1150
        %v1161 = vpop.f32.mrf.mxu0
        %v1162 = vadd.f32 0.0, %v1161
        %v1163 = vpop.f32.mrf.mxu0
        %v1164 = vadd.f32 0.0, %v1163
        %1165 = vdwg.mxu0
        %v1166 = vpack.c.bf16 %v1164, %v1162
        %s1167 = scalar_lea.vmem %s2, 288
        %v1168 = vld [vmem:[%s1167] sm:$0xff]
        %v1169 = vld [vmem:[%s1167 + $0x8] sm:$0xff]
        %v1170 = vld [vmem:[%s1167 + $0x10] sm:$0xff]
        %v1171 = vld [vmem:[%s1167 + $0x18] sm:$0xff]
        %v1172 = vld [vmem:[%s1167 + $0x20] sm:$0xff]
        %v1173 = vld [vmem:[%s1167 + $0x28] sm:$0xff]
        %v1174 = vld [vmem:[%s1167 + $0x30] sm:$0xff]
        %v1175 = vld [vmem:[%s1167 + $0x38] sm:$0xff]
        %v1176 = vld [vmem:[%s1167 + $0x40] sm:$0xff]
        %v1177 = vld [vmem:[%s1167 + $0x48] sm:$0xff]
        %v1178 = vld [vmem:[%s1167 + $0x50] sm:$0xff]
        %v1179 = vld [vmem:[%s1167 + $0x58] sm:$0xff]
        %v1192 = vunpack.c.l.b16 %v1168
        %v1193 = vunpack.c.h.b16 %v1168
        %v1194 = vunpack.c.l.b16 %v1169
        %v1195 = vunpack.c.h.b16 %v1169
        %v1196 = vunpack.c.l.b16 %v1170
        %v1197 = vunpack.c.h.b16 %v1170
        %v1198 = vunpack.c.l.b16 %v1171
        %v1199 = vunpack.c.h.b16 %v1171
        %v1200 = vunpack.c.l.b16 %v1172
        %v1201 = vunpack.c.h.b16 %v1172
        %v1202 = vunpack.c.l.b16 %v1173
        %v1203 = vunpack.c.h.b16 %v1173
        %v1204 = vunpack.c.l.b16 %v1174
        %v1205 = vunpack.c.h.b16 %v1174
        %v1206 = vunpack.c.l.b16 %v1175
        %v1207 = vunpack.c.h.b16 %v1175
        %v1208 = vunpack.c.l.b16 %v1176
        %v1209 = vunpack.c.h.b16 %v1176
        %v1210 = vunpack.c.l.b16 %v1177
        %v1211 = vunpack.c.h.b16 %v1177
        %v1212 = vunpack.c.l.b16 %v1178
        %v1213 = vunpack.c.h.b16 %v1178
        %v1214 = vunpack.c.l.b16 %v1179
        %v1215 = vunpack.c.h.b16 %v1179
        %v1216 = vpack.c.b16 %v1194, %v1192
        %v1217 = vpack.c.b16 %v1195, %v1193
        %v1218 = vpack.c.b16 %v1198, %v1196
        %v1219 = vpack.c.b16 %v1199, %v1197
        %v1220 = vpack.c.b16 %v1202, %v1200
        %v1221 = vpack.c.b16 %v1203, %v1201
        %v1222 = vpack.c.b16 %v1206, %v1204
        %v1223 = vpack.c.b16 %v1207, %v1205
        %v1224 = vpack.c.b16 %v1210, %v1208
        %v1225 = vpack.c.b16 %v1211, %v1209
        %v1226 = vpack.c.b16 %v1214, %v1212
        %v1227 = vpack.c.b16 %v1215, %v1213
        %v1241 = vsel %vm832, %v1166, 0
        %1243 = vmatpush.bf16.msra.mxu0 0
        %1244 = vmatpush.bf16.msra.mxu0 0
        %1245 = vmatpush.bf16.msra.mxu0 %v1226
        %1246 = vmatpush.bf16.msra.mxu0 %v1224
        %1247 = vmatpush.bf16.msra.mxu0 %v1222
        %1248 = vmatpush.bf16.msra.mxu0 %v1220
        %1249 = vmatpush.bf16.msra.mxu0 %v1218
        %1250 = vmatpush.bf16.msra.mxu0 %v1216
        %1251 = vmatmul.bf16.gmra.mxu0 %v1241
        %v1252 = vpop.f32.mrf.mxu0
        %v1253 = vadd.f32 0.0, %v1252
        %v1254 = vpop.f32.mrf.mxu0
        %v1255 = vadd.f32 0.0, %v1254
        %1256 = vdwg.mxu0
        %1257 = vmatpush.bf16.msra.mxu0 0
        %1258 = vmatpush.bf16.msra.mxu0 0
        %1259 = vmatpush.bf16.msra.mxu0 %v1227
        %1260 = vmatpush.bf16.msra.mxu0 %v1225
        %1261 = vmatpush.bf16.msra.mxu0 %v1223
        %1262 = vmatpush.bf16.msra.mxu0 %v1221
        %1263 = vmatpush.bf16.msra.mxu0 %v1219
        %1264 = vmatpush.bf16.msra.mxu0 %v1217
        %1265 = vmatmul.bf16.gmra.mxu0 %v1241
        %v1266 = vpop.f32.mrf.mxu0
        %v1267 = vadd.f32 0.0, %v1266
        %v1268 = vpop.f32.mrf.mxu0
        %v1269 = vadd.f32 0.0, %v1268
        %1270 = vdwg.mxu0
        %v1271 = vadd.f32 %v1137, %v1253
        %v1272 = vadd.f32 %v1138, %v1267
        %v1273 = vadd.f32 %v1139, %v1255
        %v1274 = vadd.f32 %v1140, %v1269
        %v1275 = vmax.f32 %v1271, 0.0
        %v1276 = vmax.f32 %v1272, 0.0
        %v1277 = vmax.f32 %v1273, 0.0
        %v1278 = vmax.f32 %v1274, 0.0
        %v1279 = vpack.c.bf16 %v1277, %v1275
        %v1280 = vpack.c.bf16 %v1278, %v1276
        %v1281 = vld [vmem:[%s6] sm:$0x3]
        %v1282 = vld [vmem:[%s4] sm:$0xf]
        %vm1283 = vcmask 130048
        %v1285 = vsel %vm1283, %v1282, 0
        %1287 = vmatpush.bf16.msra.mxu0 0
        %1288 = vmatpush.bf16.msra.mxu0 0
        %1289 = vmatpush.bf16.msra.mxu0 0
        %1290 = vmatpush.bf16.msra.mxu0 0
        %1291 = vmatpush.bf16.msra.mxu0 0
        %1292 = vmatpush.bf16.msra.mxu0 0
        %1293 = vmatpush.bf16.msra.mxu0 0
        %1294 = vmatpush.bf16.msra.mxu0 %v1279
        %1295 = vmatmul.bf16.gmra.mxu0 %v1285
        %v1296 = vpop.f32.mrf.mxu0
        %v1297 = vadd.f32 0.0, %v1296
        %v1298 = vpop.f32.mrf.mxu0
        %1299 = vdwg.mxu0
        %1300 = vmatpush.bf16.msra.mxu0 0
        %1301 = vmatpush.bf16.msra.mxu0 0
        %1302 = vmatpush.bf16.msra.mxu0 0
        %1303 = vmatpush.bf16.msra.mxu0 0
        %1304 = vmatpush.bf16.msra.mxu0 0
        %1305 = vmatpush.bf16.msra.mxu0 0
        %1306 = vmatpush.bf16.msra.mxu0 0
        %1307 = vmatpush.bf16.msra.mxu0 %v1280
        %1308 = vmatmul.bf16.gmra.mxu0 %v1285
        %v1309 = vpop.f32.mrf.mxu0
        %v1310 = vadd.f32 0.0, %v1309
        %v1311 = vpop.f32.mrf.mxu0
        %1312 = vdwg.mxu0
        %v1313 = vpack.c.bf16 %v1297, %v1297
        %v1314 = vpack.c.bf16 %v1310, %v1310
        %v1315 = vld [vmem:[#allocation2] sm:$0xff]
        %v1316 = vld [vmem:[#allocation2 + $0x8] sm:$0xff]
        %v1317 = vld [vmem:[#allocation2 + $0x10] sm:$0xff]
        %v1318 = vld [vmem:[#allocation2 + $0x18] sm:$0xff]
        %v1319 = vld [vmem:[#allocation2 + $0x20] sm:$0xff]
        %v1320 = vld [vmem:[#allocation2 + $0x28] sm:$0xff]
        %v1321 = vld [vmem:[#allocation2 + $0x30] sm:$0xff]
        %v1322 = vld [vmem:[#allocation2 + $0x38] sm:$0xff]
        %v1323 = vld [vmem:[#allocation2 + $0x40] sm:$0xff]
        %v1324 = vld [vmem:[#allocation2 + $0x48] sm:$0xff]
        %v1325 = vld [vmem:[#allocation2 + $0x50] sm:$0xff]
        %v1326 = vld [vmem:[#allocation2 + $0x58] sm:$0xff]
        %v1327 = vld [vmem:[#allocation2 + $0x60] sm:$0xff]
        %v1328 = vld [vmem:[#allocation2 + $0x68] sm:$0xff]
        %v1329 = vld [vmem:[#allocation2 + $0x70] sm:$0xff]
        %v1330 = vld [vmem:[#allocation2 + $0x78] sm:$0xff]
        %v1331 = vld [vmem:[#allocation2 + $0x80] sm:$0xff]
        %v1332 = vld [vmem:[#allocation2 + $0x88] sm:$0xff]
        %v1333 = vld [vmem:[#allocation2 + $0x90] sm:$0xff]
        %v1334 = vld [vmem:[#allocation2 + $0x98] sm:$0xff]
        %v1335 = vld [vmem:[#allocation2 + $0xa0] sm:$0xff]
        %v1336 = vld [vmem:[#allocation2 + $0xa8] sm:$0xff]
        %v1337 = vld [vmem:[#allocation2 + $0xb0] sm:$0xff]
        %v1338 = vld [vmem:[#allocation2 + $0xb8] sm:$0xff]
        %v1363 = vunpack.c.l.b16 %v1315
        %v1364 = vunpack.c.h.b16 %v1315
        %v1365 = vunpack.c.l.b16 %v1316
        %v1366 = vunpack.c.h.b16 %v1316
        %v1367 = vunpack.c.l.b16 %v1317
        %v1368 = vunpack.c.h.b16 %v1317
        %v1369 = vunpack.c.l.b16 %v1318
        %v1370 = vunpack.c.h.b16 %v1318
        %v1371 = vunpack.c.l.b16 %v1319
        %v1372 = vunpack.c.h.b16 %v1319
        %v1373 = vunpack.c.l.b16 %v1320
        %v1374 = vunpack.c.h.b16 %v1320
        %v1375 = vunpack.c.l.b16 %v1321
        %v1376 = vunpack.c.h.b16 %v1321
        %v1377 = vunpack.c.l.b16 %v1322
        %v1378 = vunpack.c.h.b16 %v1322
        %v1379 = vunpack.c.l.b16 %v1323
        %v1380 = vunpack.c.h.b16 %v1323
        %v1381 = vunpack.c.l.b16 %v1324
        %v1382 = vunpack.c.h.b16 %v1324
        %v1383 = vunpack.c.l.b16 %v1325
        %v1384 = vunpack.c.h.b16 %v1325
        %v1385 = vunpack.c.l.b16 %v1326
        %v1386 = vunpack.c.h.b16 %v1326
        %v1387 = vunpack.c.l.b16 %v1327
        %v1388 = vunpack.c.h.b16 %v1327
        %v1389 = vunpack.c.l.b16 %v1328
        %v1390 = vunpack.c.h.b16 %v1328
        %v1391 = vunpack.c.l.b16 %v1329
        %v1392 = vunpack.c.h.b16 %v1329
        %v1393 = vunpack.c.l.b16 %v1330
        %v1394 = vunpack.c.h.b16 %v1330
        %v1395 = vunpack.c.l.b16 %v1331
        %v1396 = vunpack.c.h.b16 %v1331
        %v1397 = vunpack.c.l.b16 %v1332
        %v1398 = vunpack.c.h.b16 %v1332
        %v1399 = vunpack.c.l.b16 %v1333
        %v1400 = vunpack.c.h.b16 %v1333
        %v1401 = vunpack.c.l.b16 %v1334
        %v1402 = vunpack.c.h.b16 %v1334
        %v1403 = vunpack.c.l.b16 %v1335
        %v1404 = vunpack.c.h.b16 %v1335
        %v1405 = vunpack.c.l.b16 %v1336
        %v1406 = vunpack.c.h.b16 %v1336
        %v1407 = vunpack.c.l.b16 %v1337
        %v1408 = vunpack.c.h.b16 %v1337
        %v1409 = vunpack.c.l.b16 %v1338
        %v1410 = vunpack.c.h.b16 %v1338
        %v1411 = vpack.c.b16 %v1365, %v1363
        %v1412 = vpack.c.b16 %v1366, %v1364
        %v1413 = vpack.c.b16 %v1369, %v1367
        %v1414 = vpack.c.b16 %v1370, %v1368
        %v1415 = vpack.c.b16 %v1373, %v1371
        %v1416 = vpack.c.b16 %v1374, %v1372
        %v1417 = vpack.c.b16 %v1377, %v1375
        %v1418 = vpack.c.b16 %v1378, %v1376
        %v1419 = vpack.c.b16 %v1381, %v1379
        %v1420 = vpack.c.b16 %v1382, %v1380
        %v1421 = vpack.c.b16 %v1385, %v1383
        %v1422 = vpack.c.b16 %v1386, %v1384
        %v1423 = vpack.c.b16 %v1389, %v1387
        %v1424 = vpack.c.b16 %v1390, %v1388
        %v1425 = vpack.c.b16 %v1393, %v1391
        %v1426 = vpack.c.b16 %v1394, %v1392
        %v1427 = vpack.c.b16 %v1397, %v1395
        %v1428 = vpack.c.b16 %v1398, %v1396
        %v1429 = vpack.c.b16 %v1401, %v1399
        %v1430 = vpack.c.b16 %v1402, %v1400
        %v1431 = vpack.c.b16 %v1405, %v1403
        %v1432 = vpack.c.b16 %v1406, %v1404
        %v1433 = vpack.c.b16 %v1409, %v1407
        %v1434 = vpack.c.b16 %v1410, %v1408
        %vm1459 = vcmask 523264
        %v1461 = vsel %vm1459, %v1314, 0
        %1463 = vmatpush.bf16.msra.mxu0 %v1425
        %1464 = vmatpush.bf16.msra.mxu0 %v1423
        %1465 = vmatpush.bf16.msra.mxu0 %v1421
        %1466 = vmatpush.bf16.msra.mxu0 %v1419
        %1467 = vmatpush.bf16.msra.mxu0 %v1417
        %1468 = vmatpush.bf16.msra.mxu0 %v1415
        %1469 = vmatpush.bf16.msra.mxu0 %v1413
        %1470 = vmatpush.bf16.msra.mxu0 %v1411
        %1471 = vmatmul.bf16.gmra.mxu0 %v1313
        %v1472 = vpop.f32.mrf.mxu0
        %v1473 = vadd.f32 0.0, %v1472
        %v1474 = vpop.f32.mrf.mxu0
        %1475 = vdwg.mxu0
        %1476 = vmatpush.bf16.msra.mxu0 0
        %1477 = vmatpush.bf16.msra.mxu0 0
        %1478 = vmatpush.bf16.msra.mxu0 0
        %1479 = vmatpush.bf16.msra.mxu0 0
        %1480 = vmatpush.bf16.msra.mxu0 %v1433
        %1481 = vmatpush.bf16.msra.mxu0 %v1431
        %1482 = vmatpush.bf16.msra.mxu0 %v1429
        %1483 = vmatpush.bf16.msra.mxu0 %v1427
        %1484 = vmatmul.bf16.gmra.mxu0 %v1461
        %v1485 = vpop.f32.mrf.mxu0
        %v1486 = vadd.f32 %v1473, %v1485
        %v1487 = vpop.f32.mrf.mxu0
        %1488 = vdwg.mxu0
        %1489 = vmatpush.bf16.msra.mxu0 %v1426
        %1490 = vmatpush.bf16.msra.mxu0 %v1424
        %1491 = vmatpush.bf16.msra.mxu0 %v1422
        %1492 = vmatpush.bf16.msra.mxu0 %v1420
        %1493 = vmatpush.bf16.msra.mxu0 %v1418
        %1494 = vmatpush.bf16.msra.mxu0 %v1416
        %1495 = vmatpush.bf16.msra.mxu0 %v1414
        %1496 = vmatpush.bf16.msra.mxu0 %v1412
        %1497 = vmatmul.bf16.gmra.mxu0 %v1313
        %v1498 = vpop.f32.mrf.mxu0
        %v1499 = vadd.f32 0.0, %v1498
        %v1500 = vpop.f32.mrf.mxu0
        %1501 = vdwg.mxu0
        %1502 = vmatpush.bf16.msra.mxu0 0
        %1503 = vmatpush.bf16.msra.mxu0 0
        %1504 = vmatpush.bf16.msra.mxu0 0
        %1505 = vmatpush.bf16.msra.mxu0 0
        %1506 = vmatpush.bf16.msra.mxu0 %v1434
        %1507 = vmatpush.bf16.msra.mxu0 %v1432
        %1508 = vmatpush.bf16.msra.mxu0 %v1430
        %1509 = vmatpush.bf16.msra.mxu0 %v1428
        %1510 = vmatmul.bf16.gmra.mxu0 %v1461
        %v1511 = vpop.f32.mrf.mxu0
        %v1512 = vadd.f32 %v1499, %v1511
        %v1513 = vpop.f32.mrf.mxu0
        %1514 = vdwg.mxu0
        %v1516 = vperm.slane %v1281, 0
        %v1517 = vperm.slane %v1281, 1
        %v1520 = vadd.f32 %v1516, %v1486
        %v1521 = vadd.f32 %v1517, %v1512
        %s1522 = scalar_lea.vmem %s4, 4
        %v1523 = vld [vmem:[%s1522] sm:$0xf]
        %v1525 = vsel %vm1283, %v1523, 0
        %1527 = vmatpush.bf16.msra.mxu0 0
        %1528 = vmatpush.bf16.msra.mxu0 0
        %1529 = vmatpush.bf16.msra.mxu0 0
        %1530 = vmatpush.bf16.msra.mxu0 0
        %1531 = vmatpush.bf16.msra.mxu0 0
        %1532 = vmatpush.bf16.msra.mxu0 0
        %1533 = vmatpush.bf16.msra.mxu0 0
        %1534 = vmatpush.bf16.msra.mxu0 %v1279
        %1535 = vmatmul.bf16.gmra.mxu0 %v1525
        %v1536 = vpop.f32.mrf.mxu0
        %v1537 = vadd.f32 0.0, %v1536
        %v1538 = vpop.f32.mrf.mxu0
        %1539 = vdwg.mxu0
        %1540 = vmatpush.bf16.msra.mxu0 0
        %1541 = vmatpush.bf16.msra.mxu0 0
        %1542 = vmatpush.bf16.msra.mxu0 0
        %1543 = vmatpush.bf16.msra.mxu0 0
        %1544 = vmatpush.bf16.msra.mxu0 0
        %1545 = vmatpush.bf16.msra.mxu0 0
        %1546 = vmatpush.bf16.msra.mxu0 0
        %1547 = vmatpush.bf16.msra.mxu0 %v1280
        %1548 = vmatmul.bf16.gmra.mxu0 %v1525
        %v1549 = vpop.f32.mrf.mxu0
        %v1550 = vadd.f32 0.0, %v1549
        %v1551 = vpop.f32.mrf.mxu0
        %1552 = vdwg.mxu0
        %v1553 = vpack.c.bf16 %v1537, %v1537
        %v1554 = vpack.c.bf16 %v1550, %v1550
        %s1555 = scalar_lea.vmem [#allocation2], 192
        %v1556 = vld [vmem:[%s1555] sm:$0xff]
        %v1557 = vld [vmem:[%s1555 + $0x8] sm:$0xff]
        %v1558 = vld [vmem:[%s1555 + $0x10] sm:$0xff]
        %v1559 = vld [vmem:[%s1555 + $0x18] sm:$0xff]
        %v1560 = vld [vmem:[%s1555 + $0x20] sm:$0xff]
        %v1561 = vld [vmem:[%s1555 + $0x28] sm:$0xff]
        %v1562 = vld [vmem:[%s1555 + $0x30] sm:$0xff]
        %v1563 = vld [vmem:[%s1555 + $0x38] sm:$0xff]
        %v1564 = vld [vmem:[%s1555 + $0x40] sm:$0xff]
        %v1565 = vld [vmem:[%s1555 + $0x48] sm:$0xff]
        %v1566 = vld [vmem:[%s1555 + $0x50] sm:$0xff]
        %v1567 = vld [vmem:[%s1555 + $0x58] sm:$0xff]
        %v1568 = vld [vmem:[%s1555 + $0x60] sm:$0xff]
        %v1569 = vld [vmem:[%s1555 + $0x68] sm:$0xff]
        %v1570 = vld [vmem:[%s1555 + $0x70] sm:$0xff]
        %v1571 = vld [vmem:[%s1555 + $0x78] sm:$0xff]
        %v1572 = vld [vmem:[%s1555 + $0x80] sm:$0xff]
        %v1573 = vld [vmem:[%s1555 + $0x88] sm:$0xff]
        %v1574 = vld [vmem:[%s1555 + $0x90] sm:$0xff]
        %v1575 = vld [vmem:[%s1555 + $0x98] sm:$0xff]
        %v1576 = vld [vmem:[%s1555 + $0xa0] sm:$0xff]
        %v1577 = vld [vmem:[%s1555 + $0xa8] sm:$0xff]
        %v1578 = vld [vmem:[%s1555 + $0xb0] sm:$0xff]
        %v1579 = vld [vmem:[%s1555 + $0xb8] sm:$0xff]
        %v1604 = vunpack.c.l.b16 %v1556
        %v1605 = vunpack.c.h.b16 %v1556
        %v1606 = vunpack.c.l.b16 %v1557
        %v1607 = vunpack.c.h.b16 %v1557
        %v1608 = vunpack.c.l.b16 %v1558
        %v1609 = vunpack.c.h.b16 %v1558
        %v1610 = vunpack.c.l.b16 %v1559
        %v1611 = vunpack.c.h.b16 %v1559
        %v1612 = vunpack.c.l.b16 %v1560
        %v1613 = vunpack.c.h.b16 %v1560
        %v1614 = vunpack.c.l.b16 %v1561
        %v1615 = vunpack.c.h.b16 %v1561
        %v1616 = vunpack.c.l.b16 %v1562
        %v1617 = vunpack.c.h.b16 %v1562
        %v1618 = vunpack.c.l.b16 %v1563
        %v1619 = vunpack.c.h.b16 %v1563
        %v1620 = vunpack.c.l.b16 %v1564
        %v1621 = vunpack.c.h.b16 %v1564
        %v1622 = vunpack.c.l.b16 %v1565
        %v1623 = vunpack.c.h.b16 %v1565
        %v1624 = vunpack.c.l.b16 %v1566
        %v1625 = vunpack.c.h.b16 %v1566
        %v1626 = vunpack.c.l.b16 %v1567
        %v1627 = vunpack.c.h.b16 %v1567
        %v1628 = vunpack.c.l.b16 %v1568
        %v1629 = vunpack.c.h.b16 %v1568
        %v1630 = vunpack.c.l.b16 %v1569
        %v1631 = vunpack.c.h.b16 %v1569
        %v1632 = vunpack.c.l.b16 %v1570
        %v1633 = vunpack.c.h.b16 %v1570
        %v1634 = vunpack.c.l.b16 %v1571
        %v1635 = vunpack.c.h.b16 %v1571
        %v1636 = vunpack.c.l.b16 %v1572
        %v1637 = vunpack.c.h.b16 %v1572
        %v1638 = vunpack.c.l.b16 %v1573
        %v1639 = vunpack.c.h.b16 %v1573
        %v1640 = vunpack.c.l.b16 %v1574
        %v1641 = vunpack.c.h.b16 %v1574
        %v1642 = vunpack.c.l.b16 %v1575
        %v1643 = vunpack.c.h.b16 %v1575
        %v1644 = vunpack.c.l.b16 %v1576
        %v1645 = vunpack.c.h.b16 %v1576
        %v1646 = vunpack.c.l.b16 %v1577
        %v1647 = vunpack.c.h.b16 %v1577
        %v1648 = vunpack.c.l.b16 %v1578
        %v1649 = vunpack.c.h.b16 %v1578
        %v1650 = vunpack.c.l.b16 %v1579
        %v1651 = vunpack.c.h.b16 %v1579
        %v1652 = vpack.c.b16 %v1606, %v1604
        %v1653 = vpack.c.b16 %v1607, %v1605
        %v1654 = vpack.c.b16 %v1610, %v1608
        %v1655 = vpack.c.b16 %v1611, %v1609
        %v1656 = vpack.c.b16 %v1614, %v1612
        %v1657 = vpack.c.b16 %v1615, %v1613
        %v1658 = vpack.c.b16 %v1618, %v1616
        %v1659 = vpack.c.b16 %v1619, %v1617
        %v1660 = vpack.c.b16 %v1622, %v1620
        %v1661 = vpack.c.b16 %v1623, %v1621
        %v1662 = vpack.c.b16 %v1626, %v1624
        %v1663 = vpack.c.b16 %v1627, %v1625
        %v1664 = vpack.c.b16 %v1630, %v1628
        %v1665 = vpack.c.b16 %v1631, %v1629
        %v1666 = vpack.c.b16 %v1634, %v1632
        %v1667 = vpack.c.b16 %v1635, %v1633
        %v1668 = vpack.c.b16 %v1638, %v1636
        %v1669 = vpack.c.b16 %v1639, %v1637
        %v1670 = vpack.c.b16 %v1642, %v1640
        %v1671 = vpack.c.b16 %v1643, %v1641
        %v1672 = vpack.c.b16 %v1646, %v1644
        %v1673 = vpack.c.b16 %v1647, %v1645
        %v1674 = vpack.c.b16 %v1650, %v1648
        %v1675 = vpack.c.b16 %v1651, %v1649
        %v1701 = vsel %vm1459, %v1554, 0
        %1703 = vmatpush.bf16.msra.mxu0 %v1666
        %1704 = vmatpush.bf16.msra.mxu0 %v1664
        %1705 = vmatpush.bf16.msra.mxu0 %v1662
        %1706 = vmatpush.bf16.msra.mxu0 %v1660
        %1707 = vmatpush.bf16.msra.mxu0 %v1658
        %1708 = vmatpush.bf16.msra.mxu0 %v1656
        %1709 = vmatpush.bf16.msra.mxu0 %v1654
        %1710 = vmatpush.bf16.msra.mxu0 %v1652
        %1711 = vmatmul.bf16.gmra.mxu0 %v1553
        %v1712 = vpop.f32.mrf.mxu0
        %v1713 = vadd.f32 0.0, %v1712
        %v1714 = vpop.f32.mrf.mxu0
        %1715 = vdwg.mxu0
        %1716 = vmatpush.bf16.msra.mxu0 0
        %1717 = vmatpush.bf16.msra.mxu0 0
        %1718 = vmatpush.bf16.msra.mxu0 0
        %1719 = vmatpush.bf16.msra.mxu0 0
        %1720 = vmatpush.bf16.msra.mxu0 %v1674
        %1721 = vmatpush.bf16.msra.mxu0 %v1672
        %1722 = vmatpush.bf16.msra.mxu0 %v1670
        %1723 = vmatpush.bf16.msra.mxu0 %v1668
        %1724 = vmatmul.bf16.gmra.mxu0 %v1701
        %v1725 = vpop.f32.mrf.mxu0
        %v1726 = vadd.f32 %v1713, %v1725
        %v1727 = vpop.f32.mrf.mxu0
        %1728 = vdwg.mxu0
        %1729 = vmatpush.bf16.msra.mxu0 %v1667
        %1730 = vmatpush.bf16.msra.mxu0 %v1665
        %1731 = vmatpush.bf16.msra.mxu0 %v1663
        %1732 = vmatpush.bf16.msra.mxu0 %v1661
        %1733 = vmatpush.bf16.msra.mxu0 %v1659
        %1734 = vmatpush.bf16.msra.mxu0 %v1657
        %1735 = vmatpush.bf16.msra.mxu0 %v1655
        %1736 = vmatpush.bf16.msra.mxu0 %v1653
        %1737 = vmatmul.bf16.gmra.mxu0 %v1553
        %v1738 = vpop.f32.mrf.mxu0
        %v1739 = vadd.f32 0.0, %v1738
        %v1740 = vpop.f32.mrf.mxu0
        %1741 = vdwg.mxu0
        %1742 = vmatpush.bf16.msra.mxu0 0
        %1743 = vmatpush.bf16.msra.mxu0 0
        %1744 = vmatpush.bf16.msra.mxu0 0
        %1745 = vmatpush.bf16.msra.mxu0 0
        %1746 = vmatpush.bf16.msra.mxu0 %v1675
        %1747 = vmatpush.bf16.msra.mxu0 %v1673
        %1748 = vmatpush.bf16.msra.mxu0 %v1671
        %1749 = vmatpush.bf16.msra.mxu0 %v1669
        %1750 = vmatmul.bf16.gmra.mxu0 %v1701
        %v1751 = vpop.f32.mrf.mxu0
        %v1752 = vadd.f32 %v1739, %v1751
        %v1753 = vpop.f32.mrf.mxu0
        %1754 = vdwg.mxu0
        %v1755 = vadd.f32 %v1520, %v1726
        %v1756 = vadd.f32 %v1521, %v1752
        %s1757 = scalar_lea.vmem %s4, 8
        %v1758 = vld [vmem:[%s1757] sm:$0xf]
        %v1760 = vsel %vm1283, %v1758, 0
        %1762 = vmatpush.bf16.msra.mxu0 0
        %1763 = vmatpush.bf16.msra.mxu0 0
        %1764 = vmatpush.bf16.msra.mxu0 0
        %1765 = vmatpush.bf16.msra.mxu0 0
        %1766 = vmatpush.bf16.msra.mxu0 0
        %1767 = vmatpush.bf16.msra.mxu0 0
        %1768 = vmatpush.bf16.msra.mxu0 0
        %1769 = vmatpush.bf16.msra.mxu0 %v1279
        %1770 = vmatmul.bf16.gmra.mxu0 %v1760
        %v1771 = vpop.f32.mrf.mxu0
        %v1772 = vadd.f32 0.0, %v1771
        %v1773 = vpop.f32.mrf.mxu0
        %1774 = vdwg.mxu0
        %1775 = vmatpush.bf16.msra.mxu0 0
        %1776 = vmatpush.bf16.msra.mxu0 0
        %1777 = vmatpush.bf16.msra.mxu0 0
        %1778 = vmatpush.bf16.msra.mxu0 0
        %1779 = vmatpush.bf16.msra.mxu0 0
        %1780 = vmatpush.bf16.msra.mxu0 0
        %1781 = vmatpush.bf16.msra.mxu0 0
        %1782 = vmatpush.bf16.msra.mxu0 %v1280
        %1783 = vmatmul.bf16.gmra.mxu0 %v1760
        %v1784 = vpop.f32.mrf.mxu0
        %v1785 = vadd.f32 0.0, %v1784
        %v1786 = vpop.f32.mrf.mxu0
        %1787 = vdwg.mxu0
        %v1788 = vpack.c.bf16 %v1772, %v1772
        %v1789 = vpack.c.bf16 %v1785, %v1785
        %s1790 = scalar_lea.vmem [#allocation2], 384
        %v1791 = vld [vmem:[%s1790] sm:$0xff]
        %v1792 = vld [vmem:[%s1790 + $0x8] sm:$0xff]
        %v1793 = vld [vmem:[%s1790 + $0x10] sm:$0xff]
        %v1794 = vld [vmem:[%s1790 + $0x18] sm:$0xff]
        %v1795 = vld [vmem:[%s1790 + $0x20] sm:$0xff]
        %v1796 = vld [vmem:[%s1790 + $0x28] sm:$0xff]
        %v1797 = vld [vmem:[%s1790 + $0x30] sm:$0xff]
        %v1798 = vld [vmem:[%s1790 + $0x38] sm:$0xff]
        %v1799 = vld [vmem:[%s1790 + $0x40] sm:$0xff]
        %v1800 = vld [vmem:[%s1790 + $0x48] sm:$0xff]
        %v1801 = vld [vmem:[%s1790 + $0x50] sm:$0xff]
        %v1802 = vld [vmem:[%s1790 + $0x58] sm:$0xff]
        %v1803 = vld [vmem:[%s1790 + $0x60] sm:$0xff]
        %v1804 = vld [vmem:[%s1790 + $0x68] sm:$0xff]
        %v1805 = vld [vmem:[%s1790 + $0x70] sm:$0xff]
        %v1806 = vld [vmem:[%s1790 + $0x78] sm:$0xff]
        %v1807 = vld [vmem:[%s1790 + $0x80] sm:$0xff]
        %v1808 = vld [vmem:[%s1790 + $0x88] sm:$0xff]
        %v1809 = vld [vmem:[%s1790 + $0x90] sm:$0xff]
        %v1810 = vld [vmem:[%s1790 + $0x98] sm:$0xff]
        %v1811 = vld [vmem:[%s1790 + $0xa0] sm:$0xff]
        %v1812 = vld [vmem:[%s1790 + $0xa8] sm:$0xff]
        %v1813 = vld [vmem:[%s1790 + $0xb0] sm:$0xff]
        %v1814 = vld [vmem:[%s1790 + $0xb8] sm:$0xff]
        %v1839 = vunpack.c.l.b16 %v1791
        %v1840 = vunpack.c.h.b16 %v1791
        %v1841 = vunpack.c.l.b16 %v1792
        %v1842 = vunpack.c.h.b16 %v1792
        %v1843 = vunpack.c.l.b16 %v1793
        %v1844 = vunpack.c.h.b16 %v1793
        %v1845 = vunpack.c.l.b16 %v1794
        %v1846 = vunpack.c.h.b16 %v1794
        %v1847 = vunpack.c.l.b16 %v1795
        %v1848 = vunpack.c.h.b16 %v1795
        %v1849 = vunpack.c.l.b16 %v1796
        %v1850 = vunpack.c.h.b16 %v1796
        %v1851 = vunpack.c.l.b16 %v1797
        %v1852 = vunpack.c.h.b16 %v1797
        %v1853 = vunpack.c.l.b16 %v1798
        %v1854 = vunpack.c.h.b16 %v1798
        %v1855 = vunpack.c.l.b16 %v1799
        %v1856 = vunpack.c.h.b16 %v1799
        %v1857 = vunpack.c.l.b16 %v1800
        %v1858 = vunpack.c.h.b16 %v1800
        %v1859 = vunpack.c.l.b16 %v1801
        %v1860 = vunpack.c.h.b16 %v1801
        %v1861 = vunpack.c.l.b16 %v1802
        %v1862 = vunpack.c.h.b16 %v1802
        %v1863 = vunpack.c.l.b16 %v1803
        %v1864 = vunpack.c.h.b16 %v1803
        %v1865 = vunpack.c.l.b16 %v1804
        %v1866 = vunpack.c.h.b16 %v1804
        %v1867 = vunpack.c.l.b16 %v1805
        %v1868 = vunpack.c.h.b16 %v1805
        %v1869 = vunpack.c.l.b16 %v1806
        %v1870 = vunpack.c.h.b16 %v1806
        %v1871 = vunpack.c.l.b16 %v1807
        %v1872 = vunpack.c.h.b16 %v1807
        %v1873 = vunpack.c.l.b16 %v1808
        %v1874 = vunpack.c.h.b16 %v1808
        %v1875 = vunpack.c.l.b16 %v1809
        %v1876 = vunpack.c.h.b16 %v1809
        %v1877 = vunpack.c.l.b16 %v1810
        %v1878 = vunpack.c.h.b16 %v1810
        %v1879 = vunpack.c.l.b16 %v1811
        %v1880 = vunpack.c.h.b16 %v1811
        %v1881 = vunpack.c.l.b16 %v1812
        %v1882 = vunpack.c.h.b16 %v1812
        %v1883 = vunpack.c.l.b16 %v1813
        %v1884 = vunpack.c.h.b16 %v1813
        %v1885 = vunpack.c.l.b16 %v1814
        %v1886 = vunpack.c.h.b16 %v1814
        %v1887 = vpack.c.b16 %v1841, %v1839
        %v1888 = vpack.c.b16 %v1842, %v1840
        %v1889 = vpack.c.b16 %v1845, %v1843
        %v1890 = vpack.c.b16 %v1846, %v1844
        %v1891 = vpack.c.b16 %v1849, %v1847
        %v1892 = vpack.c.b16 %v1850, %v1848
        %v1893 = vpack.c.b16 %v1853, %v1851
        %v1894 = vpack.c.b16 %v1854, %v1852
        %v1895 = vpack.c.b16 %v1857, %v1855
        %v1896 = vpack.c.b16 %v1858, %v1856
        %v1897 = vpack.c.b16 %v1861, %v1859
        %v1898 = vpack.c.b16 %v1862, %v1860
        %v1899 = vpack.c.b16 %v1865, %v1863
        %v1900 = vpack.c.b16 %v1866, %v1864
        %v1901 = vpack.c.b16 %v1869, %v1867
        %v1902 = vpack.c.b16 %v1870, %v1868
        %v1903 = vpack.c.b16 %v1873, %v1871
        %v1904 = vpack.c.b16 %v1874, %v1872
        %v1905 = vpack.c.b16 %v1877, %v1875
        %v1906 = vpack.c.b16 %v1878, %v1876
        %v1907 = vpack.c.b16 %v1881, %v1879
        %v1908 = vpack.c.b16 %v1882, %v1880
        %v1909 = vpack.c.b16 %v1885, %v1883
        %v1910 = vpack.c.b16 %v1886, %v1884
        %v1936 = vsel %vm1459, %v1789, 0
        %1938 = vmatpush.bf16.msra.mxu0 %v1901
        %1939 = vmatpush.bf16.msra.mxu0 %v1899
        %1940 = vmatpush.bf16.msra.mxu0 %v1897
        %1941 = vmatpush.bf16.msra.mxu0 %v1895
        %1942 = vmatpush.bf16.msra.mxu0 %v1893
        %1943 = vmatpush.bf16.msra.mxu0 %v1891
        %1944 = vmatpush.bf16.msra.mxu0 %v1889
        %1945 = vmatpush.bf16.msra.mxu0 %v1887
        %1946 = vmatmul.bf16.gmra.mxu0 %v1788
        %v1947 = vpop.f32.mrf.mxu0
        %v1948 = vadd.f32 0.0, %v1947
        %v1949 = vpop.f32.mrf.mxu0
        %1950 = vdwg.mxu0
        %1951 = vmatpush.bf16.msra.mxu0 0
        %1952 = vmatpush.bf16.msra.mxu0 0
        %1953 = vmatpush.bf16.msra.mxu0 0
        %1954 = vmatpush.bf16.msra.mxu0 0
        %1955 = vmatpush.bf16.msra.mxu0 %v1909
        %1956 = vmatpush.bf16.msra.mxu0 %v1907
        %1957 = vmatpush.bf16.msra.mxu0 %v1905
        %1958 = vmatpush.bf16.msra.mxu0 %v1903
        %1959 = vmatmul.bf16.gmra.mxu0 %v1936
        %v1960 = vpop.f32.mrf.mxu0
        %v1961 = vadd.f32 %v1948, %v1960
        %v1962 = vpop.f32.mrf.mxu0
        %1963 = vdwg.mxu0
        %1964 = vmatpush.bf16.msra.mxu0 %v1902
        %1965 = vmatpush.bf16.msra.mxu0 %v1900
        %1966 = vmatpush.bf16.msra.mxu0 %v1898
        %1967 = vmatpush.bf16.msra.mxu0 %v1896
        %1968 = vmatpush.bf16.msra.mxu0 %v1894
        %1969 = vmatpush.bf16.msra.mxu0 %v1892
        %1970 = vmatpush.bf16.msra.mxu0 %v1890
        %1971 = vmatpush.bf16.msra.mxu0 %v1888
        %1972 = vmatmul.bf16.gmra.mxu0 %v1788
        %v1973 = vpop.f32.mrf.mxu0
        %v1974 = vadd.f32 0.0, %v1973
        %v1975 = vpop.f32.mrf.mxu0
        %1976 = vdwg.mxu0
        %1977 = vmatpush.bf16.msra.mxu0 0
        %1978 = vmatpush.bf16.msra.mxu0 0
        %1979 = vmatpush.bf16.msra.mxu0 0
        %1980 = vmatpush.bf16.msra.mxu0 0
        %1981 = vmatpush.bf16.msra.mxu0 %v1910
        %1982 = vmatpush.bf16.msra.mxu0 %v1908
        %1983 = vmatpush.bf16.msra.mxu0 %v1906
        %1984 = vmatpush.bf16.msra.mxu0 %v1904
        %1985 = vmatmul.bf16.gmra.mxu0 %v1936
        %v1986 = vpop.f32.mrf.mxu0
        %v1987 = vadd.f32 %v1974, %v1986
        %v1988 = vpop.f32.mrf.mxu0
        %1989 = vdwg.mxu0
        %v1990 = vadd.f32 %v1755, %v1961
        %v1991 = vadd.f32 %v1756, %v1987
        %s1992 = scalar_lea.vmem %s4, 12
        %v1993 = vld [vmem:[%s1992] sm:$0xf]
        %v1995 = vsel %vm1283, %v1993, 0
        %1997 = vmatpush.bf16.msra.mxu0 0
        %1998 = vmatpush.bf16.msra.mxu0 0
        %1999 = vmatpush.bf16.msra.mxu0 0
        %2000 = vmatpush.bf16.msra.mxu0 0
        %2001 = vmatpush.bf16.msra.mxu0 0
        %2002 = vmatpush.bf16.msra.mxu0 0
        %2003 = vmatpush.bf16.msra.mxu0 0
        %2004 = vmatpush.bf16.msra.mxu0 %v1279
        %2005 = vmatmul.bf16.gmra.mxu0 %v1995
        %v2006 = vpop.f32.mrf.mxu0
        %v2007 = vadd.f32 0.0, %v2006
        %v2008 = vpop.f32.mrf.mxu0
        %2009 = vdwg.mxu0
        %2010 = vmatpush.bf16.msra.mxu0 0
        %2011 = vmatpush.bf16.msra.mxu0 0
        %2012 = vmatpush.bf16.msra.mxu0 0
        %2013 = vmatpush.bf16.msra.mxu0 0
        %2014 = vmatpush.bf16.msra.mxu0 0
        %2015 = vmatpush.bf16.msra.mxu0 0
        %2016 = vmatpush.bf16.msra.mxu0 0
        %2017 = vmatpush.bf16.msra.mxu0 %v1280
        %2018 = vmatmul.bf16.gmra.mxu0 %v1995
        %v2019 = vpop.f32.mrf.mxu0
        %v2020 = vadd.f32 0.0, %v2019
        %v2021 = vpop.f32.mrf.mxu0
        %2022 = vdwg.mxu0
        %v2023 = vpack.c.bf16 %v2007, %v2007
        %v2024 = vpack.c.bf16 %v2020, %v2020
        %s2025 = scalar_lea.vmem [#allocation2], 576
        %v2026 = vld [vmem:[%s2025] sm:$0xff]
        %v2027 = vld [vmem:[%s2025 + $0x8] sm:$0xff]
        %v2028 = vld [vmem:[%s2025 + $0x10] sm:$0xff]
        %v2029 = vld [vmem:[%s2025 + $0x18] sm:$0xff]
        %v2030 = vld [vmem:[%s2025 + $0x20] sm:$0xff]
        %v2031 = vld [vmem:[%s2025 + $0x28] sm:$0xff]
        %v2032 = vld [vmem:[%s2025 + $0x30] sm:$0xff]
        %v2033 = vld [vmem:[%s2025 + $0x38] sm:$0xff]
        %v2034 = vld [vmem:[%s2025 + $0x40] sm:$0xff]
        %v2035 = vld [vmem:[%s2025 + $0x48] sm:$0xff]
        %v2036 = vld [vmem:[%s2025 + $0x50] sm:$0xff]
        %v2037 = vld [vmem:[%s2025 + $0x58] sm:$0xff]
        %v2038 = vld [vmem:[%s2025 + $0x60] sm:$0xff]
        %v2039 = vld [vmem:[%s2025 + $0x68] sm:$0xff]
        %v2040 = vld [vmem:[%s2025 + $0x70] sm:$0xff]
        %v2041 = vld [vmem:[%s2025 + $0x78] sm:$0xff]
        %v2042 = vld [vmem:[%s2025 + $0x80] sm:$0xff]
        %v2043 = vld [vmem:[%s2025 + $0x88] sm:$0xff]
        %v2044 = vld [vmem:[%s2025 + $0x90] sm:$0xff]
        %v2045 = vld [vmem:[%s2025 + $0x98] sm:$0xff]
        %v2046 = vld [vmem:[%s2025 + $0xa0] sm:$0xff]
        %v2047 = vld [vmem:[%s2025 + $0xa8] sm:$0xff]
        %v2048 = vld [vmem:[%s2025 + $0xb0] sm:$0xff]
        %v2049 = vld [vmem:[%s2025 + $0xb8] sm:$0xff]
        %v2074 = vunpack.c.l.b16 %v2026
        %v2075 = vunpack.c.h.b16 %v2026
        %v2076 = vunpack.c.l.b16 %v2027
        %v2077 = vunpack.c.h.b16 %v2027
        %v2078 = vunpack.c.l.b16 %v2028
        %v2079 = vunpack.c.h.b16 %v2028
        %v2080 = vunpack.c.l.b16 %v2029
        %v2081 = vunpack.c.h.b16 %v2029
        %v2082 = vunpack.c.l.b16 %v2030
        %v2083 = vunpack.c.h.b16 %v2030
        %v2084 = vunpack.c.l.b16 %v2031
        %v2085 = vunpack.c.h.b16 %v2031
        %v2086 = vunpack.c.l.b16 %v2032
        %v2087 = vunpack.c.h.b16 %v2032
        %v2088 = vunpack.c.l.b16 %v2033
        %v2089 = vunpack.c.h.b16 %v2033
        %v2090 = vunpack.c.l.b16 %v2034
        %v2091 = vunpack.c.h.b16 %v2034
        %v2092 = vunpack.c.l.b16 %v2035
        %v2093 = vunpack.c.h.b16 %v2035
        %v2094 = vunpack.c.l.b16 %v2036
        %v2095 = vunpack.c.h.b16 %v2036
        %v2096 = vunpack.c.l.b16 %v2037
        %v2097 = vunpack.c.h.b16 %v2037
        %v2098 = vunpack.c.l.b16 %v2038
        %v2099 = vunpack.c.h.b16 %v2038
        %v2100 = vunpack.c.l.b16 %v2039
        %v2101 = vunpack.c.h.b16 %v2039
        %v2102 = vunpack.c.l.b16 %v2040
        %v2103 = vunpack.c.h.b16 %v2040
        %v2104 = vunpack.c.l.b16 %v2041
        %v2105 = vunpack.c.h.b16 %v2041
        %v2106 = vunpack.c.l.b16 %v2042
        %v2107 = vunpack.c.h.b16 %v2042
        %v2108 = vunpack.c.l.b16 %v2043
        %v2109 = vunpack.c.h.b16 %v2043
        %v2110 = vunpack.c.l.b16 %v2044
        %v2111 = vunpack.c.h.b16 %v2044
        %v2112 = vunpack.c.l.b16 %v2045
        %v2113 = vunpack.c.h.b16 %v2045
        %v2114 = vunpack.c.l.b16 %v2046
        %v2115 = vunpack.c.h.b16 %v2046
        %v2116 = vunpack.c.l.b16 %v2047
        %v2117 = vunpack.c.h.b16 %v2047
        %v2118 = vunpack.c.l.b16 %v2048
        %v2119 = vunpack.c.h.b16 %v2048
        %v2120 = vunpack.c.l.b16 %v2049
        %v2121 = vunpack.c.h.b16 %v2049
        %v2122 = vpack.c.b16 %v2076, %v2074
        %v2123 = vpack.c.b16 %v2077, %v2075
        %v2124 = vpack.c.b16 %v2080, %v2078
        %v2125 = vpack.c.b16 %v2081, %v2079
        %v2126 = vpack.c.b16 %v2084, %v2082
        %v2127 = vpack.c.b16 %v2085, %v2083
        %v2128 = vpack.c.b16 %v2088, %v2086
        %v2129 = vpack.c.b16 %v2089, %v2087
        %v2130 = vpack.c.b16 %v2092, %v2090
        %v2131 = vpack.c.b16 %v2093, %v2091
        %v2132 = vpack.c.b16 %v2096, %v2094
        %v2133 = vpack.c.b16 %v2097, %v2095
        %v2134 = vpack.c.b16 %v2100, %v2098
        %v2135 = vpack.c.b16 %v2101, %v2099
        %v2136 = vpack.c.b16 %v2104, %v2102
        %v2137 = vpack.c.b16 %v2105, %v2103
        %v2138 = vpack.c.b16 %v2108, %v2106
        %v2139 = vpack.c.b16 %v2109, %v2107
        %v2140 = vpack.c.b16 %v2112, %v2110
        %v2141 = vpack.c.b16 %v2113, %v2111
        %v2142 = vpack.c.b16 %v2116, %v2114
        %v2143 = vpack.c.b16 %v2117, %v2115
        %v2144 = vpack.c.b16 %v2120, %v2118
        %v2145 = vpack.c.b16 %v2121, %v2119
        %v2171 = vsel %vm1459, %v2024, 0
        %2173 = vmatpush.bf16.msra.mxu0 %v2136
        %2174 = vmatpush.bf16.msra.mxu0 %v2134
        %2175 = vmatpush.bf16.msra.mxu0 %v2132
        %2176 = vmatpush.bf16.msra.mxu0 %v2130
        %2177 = vmatpush.bf16.msra.mxu0 %v2128
        %2178 = vmatpush.bf16.msra.mxu0 %v2126
        %2179 = vmatpush.bf16.msra.mxu0 %v2124
        %2180 = vmatpush.bf16.msra.mxu0 %v2122
        %2181 = vmatmul.bf16.gmra.mxu0 %v2023
        %v2182 = vpop.f32.mrf.mxu0
        %v2183 = vadd.f32 0.0, %v2182
        %v2184 = vpop.f32.mrf.mxu0
        %2185 = vdwg.mxu0
        %2186 = vmatpush.bf16.msra.mxu0 0
        %2187 = vmatpush.bf16.msra.mxu0 0
        %2188 = vmatpush.bf16.msra.mxu0 0
        %2189 = vmatpush.bf16.msra.mxu0 0
        %2190 = vmatpush.bf16.msra.mxu0 %v2144
        %2191 = vmatpush.bf16.msra.mxu0 %v2142
        %2192 = vmatpush.bf16.msra.mxu0 %v2140
        %2193 = vmatpush.bf16.msra.mxu0 %v2138
        %2194 = vmatmul.bf16.gmra.mxu0 %v2171
        %v2195 = vpop.f32.mrf.mxu0
        %v2196 = vadd.f32 %v2183, %v2195
        %v2197 = vpop.f32.mrf.mxu0
        %2198 = vdwg.mxu0
        %2199 = vmatpush.bf16.msra.mxu0 %v2137
        %2200 = vmatpush.bf16.msra.mxu0 %v2135
        %2201 = vmatpush.bf16.msra.mxu0 %v2133
        %2202 = vmatpush.bf16.msra.mxu0 %v2131
        %2203 = vmatpush.bf16.msra.mxu0 %v2129
        %2204 = vmatpush.bf16.msra.mxu0 %v2127
        %2205 = vmatpush.bf16.msra.mxu0 %v2125
        %2206 = vmatpush.bf16.msra.mxu0 %v2123
        %2207 = vmatmul.bf16.gmra.mxu0 %v2023
        %v2208 = vpop.f32.mrf.mxu0
        %v2209 = vadd.f32 0.0, %v2208
        %v2210 = vpop.f32.mrf.mxu0
        %2211 = vdwg.mxu0
        %2212 = vmatpush.bf16.msra.mxu0 0
        %2213 = vmatpush.bf16.msra.mxu0 0
        %2214 = vmatpush.bf16.msra.mxu0 0
        %2215 = vmatpush.bf16.msra.mxu0 0
        %2216 = vmatpush.bf16.msra.mxu0 %v2145
        %2217 = vmatpush.bf16.msra.mxu0 %v2143
        %2218 = vmatpush.bf16.msra.mxu0 %v2141
        %2219 = vmatpush.bf16.msra.mxu0 %v2139
        %2220 = vmatmul.bf16.gmra.mxu0 %v2171
        %v2221 = vpop.f32.mrf.mxu0
        %v2222 = vadd.f32 %v2209, %v2221
        %v2223 = vpop.f32.mrf.mxu0
        %2224 = vdwg.mxu0
        %v2225 = vadd.f32 %v1990, %v2196
        %v2226 = vadd.f32 %v1991, %v2222
        %v2227 = vmax.f32 %v2225, 0.0
        %v2228 = vmax.f32 %v2226, 0.0
        %v2229 = vpack.c.bf16 %v2227, %v2227
        %v2230 = vpack.c.bf16 %v2228, %v2228
        %v2231 = vld [vmem:[%s9] sm:$0x3]
        %v2232 = vld [vmem:[%s7] sm:$0x3]
        %vm2233 = vcmask 64512
        %v2235 = vsel %vm2233, %v2232, 0
        %vm2237 = vcmask 1043456
        %v2239 = vsel %vm2237, %v2229, 0
        %v2242 = vsel %vm2237, %v2230, 0
        %2244 = vmatpush.bf16.msra.mxu0 0
        %2245 = vmatpush.bf16.msra.mxu0 0
        %2246 = vmatpush.bf16.msra.mxu0 0
        %2247 = vmatpush.bf16.msra.mxu0 0
        %2248 = vmatpush.bf16.msra.mxu0 0
        %2249 = vmatpush.bf16.msra.mxu0 0
        %2250 = vmatpush.bf16.msra.mxu0 0
        %2251 = vmatpush.bf16.msra.mxu0 %v2239
        %2252 = vmatmul.bf16.gmra.mxu0 %v2235
        %v2253 = vpop.f32.mrf.mxu0
        %v2254 = vadd.f32 0.0, %v2253
        %v2255 = vpop.f32.mrf.mxu0
        %2256 = vdwg.mxu0
        %2257 = vmatpush.bf16.msra.mxu0 0
        %2258 = vmatpush.bf16.msra.mxu0 0
        %2259 = vmatpush.bf16.msra.mxu0 0
        %2260 = vmatpush.bf16.msra.mxu0 0
        %2261 = vmatpush.bf16.msra.mxu0 0
        %2262 = vmatpush.bf16.msra.mxu0 0
        %2263 = vmatpush.bf16.msra.mxu0 0
        %2264 = vmatpush.bf16.msra.mxu0 %v2242
        %2265 = vmatmul.bf16.gmra.mxu0 %v2235
        %v2266 = vpop.f32.mrf.mxu0
        %v2267 = vadd.f32 0.0, %v2266
        %v2268 = vpop.f32.mrf.mxu0
        %2269 = vdwg.mxu0
        %v2270 = vpack.c.bf16 %v2254, %v2254
        %v2271 = vpack.c.bf16 %v2267, %v2267
        %v2272 = vld [vmem:[#allocation4] sm:$0xff]
        %v2273 = vld [vmem:[#allocation4 + $0x8] sm:$0xff]
        %v2274 = vld [vmem:[#allocation4 + $0x10] sm:$0xff]
        %v2275 = vld [vmem:[#allocation4 + $0x18] sm:$0xff]
        %v2276 = vld [vmem:[#allocation4 + $0x20] sm:$0xff]
        %v2277 = vld [vmem:[#allocation4 + $0x28] sm:$0xff]
        %v2278 = vld [vmem:[#allocation4 + $0x30] sm:$0xff]
        %v2279 = vld [vmem:[#allocation4 + $0x38] sm:$0xff]
        %v2280 = vld [vmem:[#allocation4 + $0x40] sm:$0xff]
        %v2281 = vld [vmem:[#allocation4 + $0x48] sm:$0xff]
        %v2282 = vld [vmem:[#allocation4 + $0x50] sm:$0xff]
        %v2283 = vld [vmem:[#allocation4 + $0x58] sm:$0xff]
        %v2284 = vld [vmem:[#allocation4 + $0x60] sm:$0xff]
        %v2285 = vld [vmem:[#allocation4 + $0x68] sm:$0xff]
        %v2286 = vld [vmem:[#allocation4 + $0x70] sm:$0xff]
        %v2287 = vld [vmem:[#allocation4 + $0x78] sm:$0xff]
        %v2288 = vld [vmem:[#allocation4 + $0x80] sm:$0xff]
        %v2289 = vld [vmem:[#allocation4 + $0x88] sm:$0xff]
        %v2290 = vld [vmem:[#allocation4 + $0x90] sm:$0xff]
        %v2291 = vld [vmem:[#allocation4 + $0x98] sm:$0xff]
        %v2292 = vld [vmem:[#allocation4 + $0xa0] sm:$0xff]
        %v2293 = vld [vmem:[#allocation4 + $0xa8] sm:$0xff]
        %v2294 = vld [vmem:[#allocation4 + $0xb0] sm:$0xff]
        %v2295 = vld [vmem:[#allocation4 + $0xb8] sm:$0xff]
        %v2320 = vunpack.c.l.b16 %v2272
        %v2321 = vunpack.c.h.b16 %v2272
        %v2322 = vunpack.c.l.b16 %v2273
        %v2323 = vunpack.c.h.b16 %v2273
        %v2324 = vunpack.c.l.b16 %v2274
        %v2325 = vunpack.c.h.b16 %v2274
        %v2326 = vunpack.c.l.b16 %v2275
        %v2327 = vunpack.c.h.b16 %v2275
        %v2328 = vunpack.c.l.b16 %v2276
        %v2329 = vunpack.c.h.b16 %v2276
        %v2330 = vunpack.c.l.b16 %v2277
        %v2331 = vunpack.c.h.b16 %v2277
        %v2332 = vunpack.c.l.b16 %v2278
        %v2333 = vunpack.c.h.b16 %v2278
        %v2334 = vunpack.c.l.b16 %v2279
        %v2335 = vunpack.c.h.b16 %v2279
        %v2336 = vunpack.c.l.b16 %v2280
        %v2337 = vunpack.c.h.b16 %v2280
        %v2338 = vunpack.c.l.b16 %v2281
        %v2339 = vunpack.c.h.b16 %v2281
        %v2340 = vunpack.c.l.b16 %v2282
        %v2341 = vunpack.c.h.b16 %v2282
        %v2342 = vunpack.c.l.b16 %v2283
        %v2343 = vunpack.c.h.b16 %v2283
        %v2344 = vunpack.c.l.b16 %v2284
        %v2345 = vunpack.c.h.b16 %v2284
        %v2346 = vunpack.c.l.b16 %v2285
        %v2347 = vunpack.c.h.b16 %v2285
        %v2348 = vunpack.c.l.b16 %v2286
        %v2349 = vunpack.c.h.b16 %v2286
        %v2350 = vunpack.c.l.b16 %v2287
        %v2351 = vunpack.c.h.b16 %v2287
        %v2352 = vunpack.c.l.b16 %v2288
        %v2353 = vunpack.c.h.b16 %v2288
        %v2354 = vunpack.c.l.b16 %v2289
        %v2355 = vunpack.c.h.b16 %v2289
        %v2356 = vunpack.c.l.b16 %v2290
        %v2357 = vunpack.c.h.b16 %v2290
        %v2358 = vunpack.c.l.b16 %v2291
        %v2359 = vunpack.c.h.b16 %v2291
        %v2360 = vunpack.c.l.b16 %v2292
        %v2361 = vunpack.c.h.b16 %v2292
        %v2362 = vunpack.c.l.b16 %v2293
        %v2363 = vunpack.c.h.b16 %v2293
        %v2364 = vunpack.c.l.b16 %v2294
        %v2365 = vunpack.c.h.b16 %v2294
        %v2366 = vunpack.c.l.b16 %v2295
        %v2367 = vunpack.c.h.b16 %v2295
        %v2368 = vpack.c.b16 %v2322, %v2320
        %v2369 = vpack.c.b16 %v2323, %v2321
        %v2370 = vpack.c.b16 %v2326, %v2324
        %v2371 = vpack.c.b16 %v2327, %v2325
        %v2372 = vpack.c.b16 %v2330, %v2328
        %v2373 = vpack.c.b16 %v2331, %v2329
        %v2374 = vpack.c.b16 %v2334, %v2332
        %v2375 = vpack.c.b16 %v2335, %v2333
        %v2376 = vpack.c.b16 %v2338, %v2336
        %v2377 = vpack.c.b16 %v2339, %v2337
        %v2378 = vpack.c.b16 %v2342, %v2340
        %v2379 = vpack.c.b16 %v2343, %v2341
        %v2380 = vpack.c.b16 %v2346, %v2344
        %v2381 = vpack.c.b16 %v2347, %v2345
        %v2382 = vpack.c.b16 %v2350, %v2348
        %v2383 = vpack.c.b16 %v2351, %v2349
        %v2384 = vpack.c.b16 %v2354, %v2352
        %v2385 = vpack.c.b16 %v2355, %v2353
        %v2386 = vpack.c.b16 %v2358, %v2356
        %v2387 = vpack.c.b16 %v2359, %v2357
        %v2388 = vpack.c.b16 %v2362, %v2360
        %v2389 = vpack.c.b16 %v2363, %v2361
        %v2390 = vpack.c.b16 %v2366, %v2364
        %v2391 = vpack.c.b16 %v2367, %v2365
        %v2417 = vsel %vm1459, %v2271, 0
        %2419 = vmatpush.bf16.msra.mxu0 %v2382
        %2420 = vmatpush.bf16.msra.mxu0 %v2380
        %2421 = vmatpush.bf16.msra.mxu0 %v2378
        %2422 = vmatpush.bf16.msra.mxu0 %v2376
        %2423 = vmatpush.bf16.msra.mxu0 %v2374
        %2424 = vmatpush.bf16.msra.mxu0 %v2372
        %2425 = vmatpush.bf16.msra.mxu0 %v2370
        %2426 = vmatpush.bf16.msra.mxu0 %v2368
        %2427 = vmatmul.bf16.gmra.mxu0 %v2270
        %v2428 = vpop.f32.mrf.mxu0
        %v2429 = vadd.f32 0.0, %v2428
        %v2430 = vpop.f32.mrf.mxu0
        %2431 = vdwg.mxu0
        %2432 = vmatpush.bf16.msra.mxu0 0
        %2433 = vmatpush.bf16.msra.mxu0 0
        %2434 = vmatpush.bf16.msra.mxu0 0
        %2435 = vmatpush.bf16.msra.mxu0 0
        %2436 = vmatpush.bf16.msra.mxu0 %v2390
        %2437 = vmatpush.bf16.msra.mxu0 %v2388
        %2438 = vmatpush.bf16.msra.mxu0 %v2386
        %2439 = vmatpush.bf16.msra.mxu0 %v2384
        %2440 = vmatmul.bf16.gmra.mxu0 %v2417
        %v2441 = vpop.f32.mrf.mxu0
        %v2442 = vadd.f32 %v2429, %v2441
        %v2443 = vpop.f32.mrf.mxu0
        %2444 = vdwg.mxu0
        %2445 = vmatpush.bf16.msra.mxu0 %v2383
        %2446 = vmatpush.bf16.msra.mxu0 %v2381
        %2447 = vmatpush.bf16.msra.mxu0 %v2379
        %2448 = vmatpush.bf16.msra.mxu0 %v2377
        %2449 = vmatpush.bf16.msra.mxu0 %v2375
        %2450 = vmatpush.bf16.msra.mxu0 %v2373
        %2451 = vmatpush.bf16.msra.mxu0 %v2371
        %2452 = vmatpush.bf16.msra.mxu0 %v2369
        %2453 = vmatmul.bf16.gmra.mxu0 %v2270
        %v2454 = vpop.f32.mrf.mxu0
        %v2455 = vadd.f32 0.0, %v2454
        %v2456 = vpop.f32.mrf.mxu0
        %2457 = vdwg.mxu0
        %2458 = vmatpush.bf16.msra.mxu0 0
        %2459 = vmatpush.bf16.msra.mxu0 0
        %2460 = vmatpush.bf16.msra.mxu0 0
        %2461 = vmatpush.bf16.msra.mxu0 0
        %2462 = vmatpush.bf16.msra.mxu0 %v2391
        %2463 = vmatpush.bf16.msra.mxu0 %v2389
        %2464 = vmatpush.bf16.msra.mxu0 %v2387
        %2465 = vmatpush.bf16.msra.mxu0 %v2385
        %2466 = vmatmul.bf16.gmra.mxu0 %v2417
        %v2467 = vpop.f32.mrf.mxu0
        %v2468 = vadd.f32 %v2455, %v2467
        %v2469 = vpop.f32.mrf.mxu0
        %2470 = vdwg.mxu0
        %v2472 = vperm.slane %v2231, 0
        %v2473 = vperm.slane %v2231, 1
        %v2476 = vadd.f32 %v2472, %v2442
        %v2477 = vadd.f32 %v2473, %v2468
        %s2478 = scalar_lea.vmem %s7, 2
        %v2479 = vld [vmem:[%s2478] sm:$0x3]
        %v2481 = vsel %vm2233, %v2479, 0
        %2483 = vmatpush.bf16.msra.mxu0 0
        %2484 = vmatpush.bf16.msra.mxu0 0
        %2485 = vmatpush.bf16.msra.mxu0 0
        %2486 = vmatpush.bf16.msra.mxu0 0
        %2487 = vmatpush.bf16.msra.mxu0 0
        %2488 = vmatpush.bf16.msra.mxu0 0
        %2489 = vmatpush.bf16.msra.mxu0 0
        %2490 = vmatpush.bf16.msra.mxu0 %v2239
        %2491 = vmatmul.bf16.gmra.mxu0 %v2481
        %v2492 = vpop.f32.mrf.mxu0
        %v2493 = vadd.f32 0.0, %v2492
        %v2494 = vpop.f32.mrf.mxu0
        %2495 = vdwg.mxu0
        %2496 = vmatpush.bf16.msra.mxu0 0
        %2497 = vmatpush.bf16.msra.mxu0 0
        %2498 = vmatpush.bf16.msra.mxu0 0
        %2499 = vmatpush.bf16.msra.mxu0 0
        %2500 = vmatpush.bf16.msra.mxu0 0
        %2501 = vmatpush.bf16.msra.mxu0 0
        %2502 = vmatpush.bf16.msra.mxu0 0
        %2503 = vmatpush.bf16.msra.mxu0 %v2242
        %2504 = vmatmul.bf16.gmra.mxu0 %v2481
        %v2505 = vpop.f32.mrf.mxu0
        %v2506 = vadd.f32 0.0, %v2505
        %v2507 = vpop.f32.mrf.mxu0
        %2508 = vdwg.mxu0
        %v2509 = vpack.c.bf16 %v2493, %v2493
        %v2510 = vpack.c.bf16 %v2506, %v2506
        %s2511 = scalar_lea.vmem [#allocation4], 192
        %v2512 = vld [vmem:[%s2511] sm:$0xff]
        %v2513 = vld [vmem:[%s2511 + $0x8] sm:$0xff]
        %v2514 = vld [vmem:[%s2511 + $0x10] sm:$0xff]
        %v2515 = vld [vmem:[%s2511 + $0x18] sm:$0xff]
        %v2516 = vld [vmem:[%s2511 + $0x20] sm:$0xff]
        %v2517 = vld [vmem:[%s2511 + $0x28] sm:$0xff]
        %v2518 = vld [vmem:[%s2511 + $0x30] sm:$0xff]
        %v2519 = vld [vmem:[%s2511 + $0x38] sm:$0xff]
        %v2520 = vld [vmem:[%s2511 + $0x40] sm:$0xff]
        %v2521 = vld [vmem:[%s2511 + $0x48] sm:$0xff]
        %v2522 = vld [vmem:[%s2511 + $0x50] sm:$0xff]
        %v2523 = vld [vmem:[%s2511 + $0x58] sm:$0xff]
        %v2524 = vld [vmem:[%s2511 + $0x60] sm:$0xff]
        %v2525 = vld [vmem:[%s2511 + $0x68] sm:$0xff]
        %v2526 = vld [vmem:[%s2511 + $0x70] sm:$0xff]
        %v2527 = vld [vmem:[%s2511 + $0x78] sm:$0xff]
        %v2528 = vld [vmem:[%s2511 + $0x80] sm:$0xff]
        %v2529 = vld [vmem:[%s2511 + $0x88] sm:$0xff]
        %v2530 = vld [vmem:[%s2511 + $0x90] sm:$0xff]
        %v2531 = vld [vmem:[%s2511 + $0x98] sm:$0xff]
        %v2532 = vld [vmem:[%s2511 + $0xa0] sm:$0xff]
        %v2533 = vld [vmem:[%s2511 + $0xa8] sm:$0xff]
        %v2534 = vld [vmem:[%s2511 + $0xb0] sm:$0xff]
        %v2535 = vld [vmem:[%s2511 + $0xb8] sm:$0xff]
        %v2560 = vunpack.c.l.b16 %v2512
        %v2561 = vunpack.c.h.b16 %v2512
        %v2562 = vunpack.c.l.b16 %v2513
        %v2563 = vunpack.c.h.b16 %v2513
        %v2564 = vunpack.c.l.b16 %v2514
        %v2565 = vunpack.c.h.b16 %v2514
        %v2566 = vunpack.c.l.b16 %v2515
        %v2567 = vunpack.c.h.b16 %v2515
        %v2568 = vunpack.c.l.b16 %v2516
        %v2569 = vunpack.c.h.b16 %v2516
        %v2570 = vunpack.c.l.b16 %v2517
        %v2571 = vunpack.c.h.b16 %v2517
        %v2572 = vunpack.c.l.b16 %v2518
        %v2573 = vunpack.c.h.b16 %v2518
        %v2574 = vunpack.c.l.b16 %v2519
        %v2575 = vunpack.c.h.b16 %v2519
        %v2576 = vunpack.c.l.b16 %v2520
        %v2577 = vunpack.c.h.b16 %v2520
        %v2578 = vunpack.c.l.b16 %v2521
        %v2579 = vunpack.c.h.b16 %v2521
        %v2580 = vunpack.c.l.b16 %v2522
        %v2581 = vunpack.c.h.b16 %v2522
        %v2582 = vunpack.c.l.b16 %v2523
        %v2583 = vunpack.c.h.b16 %v2523
        %v2584 = vunpack.c.l.b16 %v2524
        %v2585 = vunpack.c.h.b16 %v2524
        %v2586 = vunpack.c.l.b16 %v2525
        %v2587 = vunpack.c.h.b16 %v2525
        %v2588 = vunpack.c.l.b16 %v2526
        %v2589 = vunpack.c.h.b16 %v2526
        %v2590 = vunpack.c.l.b16 %v2527
        %v2591 = vunpack.c.h.b16 %v2527
        %v2592 = vunpack.c.l.b16 %v2528
        %v2593 = vunpack.c.h.b16 %v2528
        %v2594 = vunpack.c.l.b16 %v2529
        %v2595 = vunpack.c.h.b16 %v2529
        %v2596 = vunpack.c.l.b16 %v2530
        %v2597 = vunpack.c.h.b16 %v2530
        %v2598 = vunpack.c.l.b16 %v2531
        %v2599 = vunpack.c.h.b16 %v2531
        %v2600 = vunpack.c.l.b16 %v2532
        %v2601 = vunpack.c.h.b16 %v2532
        %v2602 = vunpack.c.l.b16 %v2533
        %v2603 = vunpack.c.h.b16 %v2533
        %v2604 = vunpack.c.l.b16 %v2534
        %v2605 = vunpack.c.h.b16 %v2534
        %v2606 = vunpack.c.l.b16 %v2535
        %v2607 = vunpack.c.h.b16 %v2535
        %v2608 = vpack.c.b16 %v2562, %v2560
        %v2609 = vpack.c.b16 %v2563, %v2561
        %v2610 = vpack.c.b16 %v2566, %v2564
        %v2611 = vpack.c.b16 %v2567, %v2565
        %v2612 = vpack.c.b16 %v2570, %v2568
        %v2613 = vpack.c.b16 %v2571, %v2569
        %v2614 = vpack.c.b16 %v2574, %v2572
        %v2615 = vpack.c.b16 %v2575, %v2573
        %v2616 = vpack.c.b16 %v2578, %v2576
        %v2617 = vpack.c.b16 %v2579, %v2577
        %v2618 = vpack.c.b16 %v2582, %v2580
        %v2619 = vpack.c.b16 %v2583, %v2581
        %v2620 = vpack.c.b16 %v2586, %v2584
        %v2621 = vpack.c.b16 %v2587, %v2585
        %v2622 = vpack.c.b16 %v2590, %v2588
        %v2623 = vpack.c.b16 %v2591, %v2589
        %v2624 = vpack.c.b16 %v2594, %v2592
        %v2625 = vpack.c.b16 %v2595, %v2593
        %v2626 = vpack.c.b16 %v2598, %v2596
        %v2627 = vpack.c.b16 %v2599, %v2597
        %v2628 = vpack.c.b16 %v2602, %v2600
        %v2629 = vpack.c.b16 %v2603, %v2601
        %v2630 = vpack.c.b16 %v2606, %v2604
        %v2631 = vpack.c.b16 %v2607, %v2605
        %v2657 = vsel %vm1459, %v2510, 0
        %2659 = vmatpush.bf16.msra.mxu0 %v2622
        %2660 = vmatpush.bf16.msra.mxu0 %v2620
        %2661 = vmatpush.bf16.msra.mxu0 %v2618
        %2662 = vmatpush.bf16.msra.mxu0 %v2616
        %2663 = vmatpush.bf16.msra.mxu0 %v2614
        %2664 = vmatpush.bf16.msra.mxu0 %v2612
        %2665 = vmatpush.bf16.msra.mxu0 %v2610
        %2666 = vmatpush.bf16.msra.mxu0 %v2608
        %2667 = vmatmul.bf16.gmra.mxu0 %v2509
        %v2668 = vpop.f32.mrf.mxu0
        %v2669 = vadd.f32 0.0, %v2668
        %v2670 = vpop.f32.mrf.mxu0
        %2671 = vdwg.mxu0
        %2672 = vmatpush.bf16.msra.mxu0 0
        %2673 = vmatpush.bf16.msra.mxu0 0
        %2674 = vmatpush.bf16.msra.mxu0 0
        %2675 = vmatpush.bf16.msra.mxu0 0
        %2676 = vmatpush.bf16.msra.mxu0 %v2630
        %2677 = vmatpush.bf16.msra.mxu0 %v2628
        %2678 = vmatpush.bf16.msra.mxu0 %v2626
        %2679 = vmatpush.bf16.msra.mxu0 %v2624
        %2680 = vmatmul.bf16.gmra.mxu0 %v2657
        %v2681 = vpop.f32.mrf.mxu0
        %v2682 = vadd.f32 %v2669, %v2681
        %v2683 = vpop.f32.mrf.mxu0
        %2684 = vdwg.mxu0
        %2685 = vmatpush.bf16.msra.mxu0 %v2623
        %2686 = vmatpush.bf16.msra.mxu0 %v2621
        %2687 = vmatpush.bf16.msra.mxu0 %v2619
        %2688 = vmatpush.bf16.msra.mxu0 %v2617
        %2689 = vmatpush.bf16.msra.mxu0 %v2615
        %2690 = vmatpush.bf16.msra.mxu0 %v2613
        %2691 = vmatpush.bf16.msra.mxu0 %v2611
        %2692 = vmatpush.bf16.msra.mxu0 %v2609
        %2693 = vmatmul.bf16.gmra.mxu0 %v2509
        %v2694 = vpop.f32.mrf.mxu0
        %v2695 = vadd.f32 0.0, %v2694
        %v2696 = vpop.f32.mrf.mxu0
        %2697 = vdwg.mxu0
        %2698 = vmatpush.bf16.msra.mxu0 0
        %2699 = vmatpush.bf16.msra.mxu0 0
        %2700 = vmatpush.bf16.msra.mxu0 0
        %2701 = vmatpush.bf16.msra.mxu0 0
        %2702 = vmatpush.bf16.msra.mxu0 %v2631
        %2703 = vmatpush.bf16.msra.mxu0 %v2629
        %2704 = vmatpush.bf16.msra.mxu0 %v2627
        %2705 = vmatpush.bf16.msra.mxu0 %v2625
        %2706 = vmatmul.bf16.gmra.mxu0 %v2657
        %v2707 = vpop.f32.mrf.mxu0
        %v2708 = vadd.f32 %v2695, %v2707
        %v2709 = vpop.f32.mrf.mxu0
        %2710 = vdwg.mxu0
        %v2711 = vadd.f32 %v2476, %v2682
        %v2712 = vadd.f32 %v2477, %v2708
        %s2713 = scalar_lea.vmem %s7, 4
        %v2714 = vld [vmem:[%s2713] sm:$0x3]
        %v2716 = vsel %vm2233, %v2714, 0
        %2718 = vmatpush.bf16.msra.mxu0 0
        %2719 = vmatpush.bf16.msra.mxu0 0
        %2720 = vmatpush.bf16.msra.mxu0 0
        %2721 = vmatpush.bf16.msra.mxu0 0
        %2722 = vmatpush.bf16.msra.mxu0 0
        %2723 = vmatpush.bf16.msra.mxu0 0
        %2724 = vmatpush.bf16.msra.mxu0 0
        %2725 = vmatpush.bf16.msra.mxu0 %v2239
        %2726 = vmatmul.bf16.gmra.mxu0 %v2716
        %v2727 = vpop.f32.mrf.mxu0
        %v2728 = vadd.f32 0.0, %v2727
        %v2729 = vpop.f32.mrf.mxu0
        %2730 = vdwg.mxu0
        %2731 = vmatpush.bf16.msra.mxu0 0
        %2732 = vmatpush.bf16.msra.mxu0 0
        %2733 = vmatpush.bf16.msra.mxu0 0
        %2734 = vmatpush.bf16.msra.mxu0 0
        %2735 = vmatpush.bf16.msra.mxu0 0
        %2736 = vmatpush.bf16.msra.mxu0 0
        %2737 = vmatpush.bf16.msra.mxu0 0
        %2738 = vmatpush.bf16.msra.mxu0 %v2242
        %2739 = vmatmul.bf16.gmra.mxu0 %v2716
        %v2740 = vpop.f32.mrf.mxu0
        %v2741 = vadd.f32 0.0, %v2740
        %v2742 = vpop.f32.mrf.mxu0
        %2743 = vdwg.mxu0
        %v2744 = vpack.c.bf16 %v2728, %v2728
        %v2745 = vpack.c.bf16 %v2741, %v2741
        %s2746 = scalar_lea.vmem [#allocation4], 384
        %v2747 = vld [vmem:[%s2746] sm:$0xff]
        %v2748 = vld [vmem:[%s2746 + $0x8] sm:$0xff]
        %v2749 = vld [vmem:[%s2746 + $0x10] sm:$0xff]
        %v2750 = vld [vmem:[%s2746 + $0x18] sm:$0xff]
        %v2751 = vld [vmem:[%s2746 + $0x20] sm:$0xff]
        %v2752 = vld [vmem:[%s2746 + $0x28] sm:$0xff]
        %v2753 = vld [vmem:[%s2746 + $0x30] sm:$0xff]
        %v2754 = vld [vmem:[%s2746 + $0x38] sm:$0xff]
        %v2755 = vld [vmem:[%s2746 + $0x40] sm:$0xff]
        %v2756 = vld [vmem:[%s2746 + $0x48] sm:$0xff]
        %v2757 = vld [vmem:[%s2746 + $0x50] sm:$0xff]
        %v2758 = vld [vmem:[%s2746 + $0x58] sm:$0xff]
        %v2759 = vld [vmem:[%s2746 + $0x60] sm:$0xff]
        %v2760 = vld [vmem:[%s2746 + $0x68] sm:$0xff]
        %v2761 = vld [vmem:[%s2746 + $0x70] sm:$0xff]
        %v2762 = vld [vmem:[%s2746 + $0x78] sm:$0xff]
        %v2763 = vld [vmem:[%s2746 + $0x80] sm:$0xff]
        %v2764 = vld [vmem:[%s2746 + $0x88] sm:$0xff]
        %v2765 = vld [vmem:[%s2746 + $0x90] sm:$0xff]
        %v2766 = vld [vmem:[%s2746 + $0x98] sm:$0xff]
        %v2767 = vld [vmem:[%s2746 + $0xa0] sm:$0xff]
        %v2768 = vld [vmem:[%s2746 + $0xa8] sm:$0xff]
        %v2769 = vld [vmem:[%s2746 + $0xb0] sm:$0xff]
        %v2770 = vld [vmem:[%s2746 + $0xb8] sm:$0xff]
        %v2795 = vunpack.c.l.b16 %v2747
        %v2796 = vunpack.c.h.b16 %v2747
        %v2797 = vunpack.c.l.b16 %v2748
        %v2798 = vunpack.c.h.b16 %v2748
        %v2799 = vunpack.c.l.b16 %v2749
        %v2800 = vunpack.c.h.b16 %v2749
        %v2801 = vunpack.c.l.b16 %v2750
        %v2802 = vunpack.c.h.b16 %v2750
        %v2803 = vunpack.c.l.b16 %v2751
        %v2804 = vunpack.c.h.b16 %v2751
        %v2805 = vunpack.c.l.b16 %v2752
        %v2806 = vunpack.c.h.b16 %v2752
        %v2807 = vunpack.c.l.b16 %v2753
        %v2808 = vunpack.c.h.b16 %v2753
        %v2809 = vunpack.c.l.b16 %v2754
        %v2810 = vunpack.c.h.b16 %v2754
        %v2811 = vunpack.c.l.b16 %v2755
        %v2812 = vunpack.c.h.b16 %v2755
        %v2813 = vunpack.c.l.b16 %v2756
        %v2814 = vunpack.c.h.b16 %v2756
        %v2815 = vunpack.c.l.b16 %v2757
        %v2816 = vunpack.c.h.b16 %v2757
        %v2817 = vunpack.c.l.b16 %v2758
        %v2818 = vunpack.c.h.b16 %v2758
        %v2819 = vunpack.c.l.b16 %v2759
        %v2820 = vunpack.c.h.b16 %v2759
        %v2821 = vunpack.c.l.b16 %v2760
        %v2822 = vunpack.c.h.b16 %v2760
        %v2823 = vunpack.c.l.b16 %v2761
        %v2824 = vunpack.c.h.b16 %v2761
        %v2825 = vunpack.c.l.b16 %v2762
        %v2826 = vunpack.c.h.b16 %v2762
        %v2827 = vunpack.c.l.b16 %v2763
        %v2828 = vunpack.c.h.b16 %v2763
        %v2829 = vunpack.c.l.b16 %v2764
        %v2830 = vunpack.c.h.b16 %v2764
        %v2831 = vunpack.c.l.b16 %v2765
        %v2832 = vunpack.c.h.b16 %v2765
        %v2833 = vunpack.c.l.b16 %v2766
        %v2834 = vunpack.c.h.b16 %v2766
        %v2835 = vunpack.c.l.b16 %v2767
        %v2836 = vunpack.c.h.b16 %v2767
        %v2837 = vunpack.c.l.b16 %v2768
        %v2838 = vunpack.c.h.b16 %v2768
        %v2839 = vunpack.c.l.b16 %v2769
        %v2840 = vunpack.c.h.b16 %v2769
        %v2841 = vunpack.c.l.b16 %v2770
        %v2842 = vunpack.c.h.b16 %v2770
        %v2843 = vpack.c.b16 %v2797, %v2795
        %v2844 = vpack.c.b16 %v2798, %v2796
        %v2845 = vpack.c.b16 %v2801, %v2799
        %v2846 = vpack.c.b16 %v2802, %v2800
        %v2847 = vpack.c.b16 %v2805, %v2803
        %v2848 = vpack.c.b16 %v2806, %v2804
        %v2849 = vpack.c.b16 %v2809, %v2807
        %v2850 = vpack.c.b16 %v2810, %v2808
        %v2851 = vpack.c.b16 %v2813, %v2811
        %v2852 = vpack.c.b16 %v2814, %v2812
        %v2853 = vpack.c.b16 %v2817, %v2815
        %v2854 = vpack.c.b16 %v2818, %v2816
        %v2855 = vpack.c.b16 %v2821, %v2819
        %v2856 = vpack.c.b16 %v2822, %v2820
        %v2857 = vpack.c.b16 %v2825, %v2823
        %v2858 = vpack.c.b16 %v2826, %v2824
        %v2859 = vpack.c.b16 %v2829, %v2827
        %v2860 = vpack.c.b16 %v2830, %v2828
        %v2861 = vpack.c.b16 %v2833, %v2831
        %v2862 = vpack.c.b16 %v2834, %v2832
        %v2863 = vpack.c.b16 %v2837, %v2835
        %v2864 = vpack.c.b16 %v2838, %v2836
        %v2865 = vpack.c.b16 %v2841, %v2839
        %v2866 = vpack.c.b16 %v2842, %v2840
        %v2892 = vsel %vm1459, %v2745, 0
        %2894 = vmatpush.bf16.msra.mxu0 %v2857
        %2895 = vmatpush.bf16.msra.mxu0 %v2855
        %2896 = vmatpush.bf16.msra.mxu0 %v2853
        %2897 = vmatpush.bf16.msra.mxu0 %v2851
        %2898 = vmatpush.bf16.msra.mxu0 %v2849
        %2899 = vmatpush.bf16.msra.mxu0 %v2847
        %2900 = vmatpush.bf16.msra.mxu0 %v2845
        %2901 = vmatpush.bf16.msra.mxu0 %v2843
        %2902 = vmatmul.bf16.gmra.mxu0 %v2744
        %v2903 = vpop.f32.mrf.mxu0
        %v2904 = vadd.f32 0.0, %v2903
        %v2905 = vpop.f32.mrf.mxu0
        %2906 = vdwg.mxu0
        %2907 = vmatpush.bf16.msra.mxu0 0
        %2908 = vmatpush.bf16.msra.mxu0 0
        %2909 = vmatpush.bf16.msra.mxu0 0
        %2910 = vmatpush.bf16.msra.mxu0 0
        %2911 = vmatpush.bf16.msra.mxu0 %v2865
        %2912 = vmatpush.bf16.msra.mxu0 %v2863
        %2913 = vmatpush.bf16.msra.mxu0 %v2861
        %2914 = vmatpush.bf16.msra.mxu0 %v2859
        %2915 = vmatmul.bf16.gmra.mxu0 %v2892
        %v2916 = vpop.f32.mrf.mxu0
        %v2917 = vadd.f32 %v2904, %v2916
        %v2918 = vpop.f32.mrf.mxu0
        %2919 = vdwg.mxu0
        %2920 = vmatpush.bf16.msra.mxu0 %v2858
        %2921 = vmatpush.bf16.msra.mxu0 %v2856
        %2922 = vmatpush.bf16.msra.mxu0 %v2854
        %2923 = vmatpush.bf16.msra.mxu0 %v2852
        %2924 = vmatpush.bf16.msra.mxu0 %v2850
        %2925 = vmatpush.bf16.msra.mxu0 %v2848
        %2926 = vmatpush.bf16.msra.mxu0 %v2846
        %2927 = vmatpush.bf16.msra.mxu0 %v2844
        %2928 = vmatmul.bf16.gmra.mxu0 %v2744
        %v2929 = vpop.f32.mrf.mxu0
        %v2930 = vadd.f32 0.0, %v2929
        %v2931 = vpop.f32.mrf.mxu0
        %2932 = vdwg.mxu0
        %2933 = vmatpush.bf16.msra.mxu0 0
        %2934 = vmatpush.bf16.msra.mxu0 0
        %2935 = vmatpush.bf16.msra.mxu0 0
        %2936 = vmatpush.bf16.msra.mxu0 0
        %2937 = vmatpush.bf16.msra.mxu0 %v2866
        %2938 = vmatpush.bf16.msra.mxu0 %v2864
        %2939 = vmatpush.bf16.msra.mxu0 %v2862
        %2940 = vmatpush.bf16.msra.mxu0 %v2860
        %2941 = vmatmul.bf16.gmra.mxu0 %v2892
        %v2942 = vpop.f32.mrf.mxu0
        %v2943 = vadd.f32 %v2930, %v2942
        %v2944 = vpop.f32.mrf.mxu0
        %2945 = vdwg.mxu0
        %v2946 = vadd.f32 %v2711, %v2917
        %v2947 = vadd.f32 %v2712, %v2943
        %s2948 = scalar_lea.vmem %s7, 6
        %v2949 = vld [vmem:[%s2948] sm:$0x3]
        %v2951 = vsel %vm2233, %v2949, 0
        %2953 = vmatpush.bf16.msra.mxu0 0
        %2954 = vmatpush.bf16.msra.mxu0 0
        %2955 = vmatpush.bf16.msra.mxu0 0
        %2956 = vmatpush.bf16.msra.mxu0 0
        %2957 = vmatpush.bf16.msra.mxu0 0
        %2958 = vmatpush.bf16.msra.mxu0 0
        %2959 = vmatpush.bf16.msra.mxu0 0
        %2960 = vmatpush.bf16.msra.mxu0 %v2239
        %2961 = vmatmul.bf16.gmra.mxu0 %v2951
        %v2962 = vpop.f32.mrf.mxu0
        %v2963 = vadd.f32 0.0, %v2962
        %v2964 = vpop.f32.mrf.mxu0
        %2965 = vdwg.mxu0
        %2966 = vmatpush.bf16.msra.mxu0 0
        %2967 = vmatpush.bf16.msra.mxu0 0
        %2968 = vmatpush.bf16.msra.mxu0 0
        %2969 = vmatpush.bf16.msra.mxu0 0
        %2970 = vmatpush.bf16.msra.mxu0 0
        %2971 = vmatpush.bf16.msra.mxu0 0
        %2972 = vmatpush.bf16.msra.mxu0 0
        %2973 = vmatpush.bf16.msra.mxu0 %v2242
        %2974 = vmatmul.bf16.gmra.mxu0 %v2951
        %v2975 = vpop.f32.mrf.mxu0
        %v2976 = vadd.f32 0.0, %v2975
        %v2977 = vpop.f32.mrf.mxu0
        %2978 = vdwg.mxu0
        %v2979 = vpack.c.bf16 %v2963, %v2963
        %v2980 = vpack.c.bf16 %v2976, %v2976
        %s2981 = scalar_lea.vmem [#allocation4], 576
        %v2982 = vld [vmem:[%s2981] sm:$0xff]
        %v2983 = vld [vmem:[%s2981 + $0x8] sm:$0xff]
        %v2984 = vld [vmem:[%s2981 + $0x10] sm:$0xff]
        %v2985 = vld [vmem:[%s2981 + $0x18] sm:$0xff]
        %v2986 = vld [vmem:[%s2981 + $0x20] sm:$0xff]
        %v2987 = vld [vmem:[%s2981 + $0x28] sm:$0xff]
        %v2988 = vld [vmem:[%s2981 + $0x30] sm:$0xff]
        %v2989 = vld [vmem:[%s2981 + $0x38] sm:$0xff]
        %v2990 = vld [vmem:[%s2981 + $0x40] sm:$0xff]
        %v2991 = vld [vmem:[%s2981 + $0x48] sm:$0xff]
        %v2992 = vld [vmem:[%s2981 + $0x50] sm:$0xff]
        %v2993 = vld [vmem:[%s2981 + $0x58] sm:$0xff]
        %v2994 = vld [vmem:[%s2981 + $0x60] sm:$0xff]
        %v2995 = vld [vmem:[%s2981 + $0x68] sm:$0xff]
        %v2996 = vld [vmem:[%s2981 + $0x70] sm:$0xff]
        %v2997 = vld [vmem:[%s2981 + $0x78] sm:$0xff]
        %v2998 = vld [vmem:[%s2981 + $0x80] sm:$0xff]
        %v2999 = vld [vmem:[%s2981 + $0x88] sm:$0xff]
        %v3000 = vld [vmem:[%s2981 + $0x90] sm:$0xff]
        %v3001 = vld [vmem:[%s2981 + $0x98] sm:$0xff]
        %v3002 = vld [vmem:[%s2981 + $0xa0] sm:$0xff]
        %v3003 = vld [vmem:[%s2981 + $0xa8] sm:$0xff]
        %v3004 = vld [vmem:[%s2981 + $0xb0] sm:$0xff]
        %v3005 = vld [vmem:[%s2981 + $0xb8] sm:$0xff]
        %v3030 = vunpack.c.l.b16 %v2982
        %v3031 = vunpack.c.h.b16 %v2982
        %v3032 = vunpack.c.l.b16 %v2983
        %v3033 = vunpack.c.h.b16 %v2983
        %v3034 = vunpack.c.l.b16 %v2984
        %v3035 = vunpack.c.h.b16 %v2984
        %v3036 = vunpack.c.l.b16 %v2985
        %v3037 = vunpack.c.h.b16 %v2985
        %v3038 = vunpack.c.l.b16 %v2986
        %v3039 = vunpack.c.h.b16 %v2986
        %v3040 = vunpack.c.l.b16 %v2987
        %v3041 = vunpack.c.h.b16 %v2987
        %v3042 = vunpack.c.l.b16 %v2988
        %v3043 = vunpack.c.h.b16 %v2988
        %v3044 = vunpack.c.l.b16 %v2989
        %v3045 = vunpack.c.h.b16 %v2989
        %v3046 = vunpack.c.l.b16 %v2990
        %v3047 = vunpack.c.h.b16 %v2990
        %v3048 = vunpack.c.l.b16 %v2991
        %v3049 = vunpack.c.h.b16 %v2991
        %v3050 = vunpack.c.l.b16 %v2992
        %v3051 = vunpack.c.h.b16 %v2992
        %v3052 = vunpack.c.l.b16 %v2993
        %v3053 = vunpack.c.h.b16 %v2993
        %v3054 = vunpack.c.l.b16 %v2994
        %v3055 = vunpack.c.h.b16 %v2994
        %v3056 = vunpack.c.l.b16 %v2995
        %v3057 = vunpack.c.h.b16 %v2995
        %v3058 = vunpack.c.l.b16 %v2996
        %v3059 = vunpack.c.h.b16 %v2996
        %v3060 = vunpack.c.l.b16 %v2997
        %v3061 = vunpack.c.h.b16 %v2997
        %v3062 = vunpack.c.l.b16 %v2998
        %v3063 = vunpack.c.h.b16 %v2998
        %v3064 = vunpack.c.l.b16 %v2999
        %v3065 = vunpack.c.h.b16 %v2999
        %v3066 = vunpack.c.l.b16 %v3000
        %v3067 = vunpack.c.h.b16 %v3000
        %v3068 = vunpack.c.l.b16 %v3001
        %v3069 = vunpack.c.h.b16 %v3001
        %v3070 = vunpack.c.l.b16 %v3002
        %v3071 = vunpack.c.h.b16 %v3002
        %v3072 = vunpack.c.l.b16 %v3003
        %v3073 = vunpack.c.h.b16 %v3003
        %v3074 = vunpack.c.l.b16 %v3004
        %v3075 = vunpack.c.h.b16 %v3004
        %v3076 = vunpack.c.l.b16 %v3005
        %v3077 = vunpack.c.h.b16 %v3005
        %v3078 = vpack.c.b16 %v3032, %v3030
        %v3079 = vpack.c.b16 %v3033, %v3031
        %v3080 = vpack.c.b16 %v3036, %v3034
        %v3081 = vpack.c.b16 %v3037, %v3035
        %v3082 = vpack.c.b16 %v3040, %v3038
        %v3083 = vpack.c.b16 %v3041, %v3039
        %v3084 = vpack.c.b16 %v3044, %v3042
        %v3085 = vpack.c.b16 %v3045, %v3043
        %v3086 = vpack.c.b16 %v3048, %v3046
        %v3087 = vpack.c.b16 %v3049, %v3047
        %v3088 = vpack.c.b16 %v3052, %v3050
        %v3089 = vpack.c.b16 %v3053, %v3051
        %v3090 = vpack.c.b16 %v3056, %v3054
        %v3091 = vpack.c.b16 %v3057, %v3055
        %v3092 = vpack.c.b16 %v3060, %v3058
        %v3093 = vpack.c.b16 %v3061, %v3059
        %v3094 = vpack.c.b16 %v3064, %v3062
        %v3095 = vpack.c.b16 %v3065, %v3063
        %v3096 = vpack.c.b16 %v3068, %v3066
        %v3097 = vpack.c.b16 %v3069, %v3067
        %v3098 = vpack.c.b16 %v3072, %v3070
        %v3099 = vpack.c.b16 %v3073, %v3071
        %v3100 = vpack.c.b16 %v3076, %v3074
        %v3101 = vpack.c.b16 %v3077, %v3075
        %v3127 = vsel %vm1459, %v2980, 0
        %3129 = vmatpush.bf16.msra.mxu0 %v3092
        %3130 = vmatpush.bf16.msra.mxu0 %v3090
        %3131 = vmatpush.bf16.msra.mxu0 %v3088
        %3132 = vmatpush.bf16.msra.mxu0 %v3086
        %3133 = vmatpush.bf16.msra.mxu0 %v3084
        %3134 = vmatpush.bf16.msra.mxu0 %v3082
        %3135 = vmatpush.bf16.msra.mxu0 %v3080
        %3136 = vmatpush.bf16.msra.mxu0 %v3078
        %3137 = vmatmul.bf16.gmra.mxu0 %v2979
        %v3138 = vpop.f32.mrf.mxu0
        %v3139 = vadd.f32 0.0, %v3138
        %v3140 = vpop.f32.mrf.mxu0
        %3141 = vdwg.mxu0
        %3142 = vmatpush.bf16.msra.mxu0 0
        %3143 = vmatpush.bf16.msra.mxu0 0
        %3144 = vmatpush.bf16.msra.mxu0 0
        %3145 = vmatpush.bf16.msra.mxu0 0
        %3146 = vmatpush.bf16.msra.mxu0 %v3100
        %3147 = vmatpush.bf16.msra.mxu0 %v3098
        %3148 = vmatpush.bf16.msra.mxu0 %v3096
        %3149 = vmatpush.bf16.msra.mxu0 %v3094
        %3150 = vmatmul.bf16.gmra.mxu0 %v3127
        %v3151 = vpop.f32.mrf.mxu0
        %v3152 = vadd.f32 %v3139, %v3151
        %v3153 = vpop.f32.mrf.mxu0
        %3154 = vdwg.mxu0
        %3155 = vmatpush.bf16.msra.mxu0 %v3093
        %3156 = vmatpush.bf16.msra.mxu0 %v3091
        %3157 = vmatpush.bf16.msra.mxu0 %v3089
        %3158 = vmatpush.bf16.msra.mxu0 %v3087
        %3159 = vmatpush.bf16.msra.mxu0 %v3085
        %3160 = vmatpush.bf16.msra.mxu0 %v3083
        %3161 = vmatpush.bf16.msra.mxu0 %v3081
        %3162 = vmatpush.bf16.msra.mxu0 %v3079
        %3163 = vmatmul.bf16.gmra.mxu0 %v2979
        %v3164 = vpop.f32.mrf.mxu0
        %v3165 = vadd.f32 0.0, %v3164
        %v3166 = vpop.f32.mrf.mxu0
        %3167 = vdwg.mxu0
        %3168 = vmatpush.bf16.msra.mxu0 0
        %3169 = vmatpush.bf16.msra.mxu0 0
        %3170 = vmatpush.bf16.msra.mxu0 0
        %3171 = vmatpush.bf16.msra.mxu0 0
        %3172 = vmatpush.bf16.msra.mxu0 %v3101
        %3173 = vmatpush.bf16.msra.mxu0 %v3099
        %3174 = vmatpush.bf16.msra.mxu0 %v3097
        %3175 = vmatpush.bf16.msra.mxu0 %v3095
        %3176 = vmatmul.bf16.gmra.mxu0 %v3127
        %v3177 = vpop.f32.mrf.mxu0
        %v3178 = vadd.f32 %v3165, %v3177
        %v3179 = vpop.f32.mrf.mxu0
        %3180 = vdwg.mxu0
        %v3181 = vadd.f32 %v2946, %v3152
        %v3182 = vadd.f32 %v2947, %v3178
        %v3183 = vmax.f32 %v3181, 0.0
        %v3184 = vmax.f32 %v3182, 0.0
        %v3187 = vrot.slane %v3184, 4
        %v3188 = vsel %vm2237, %v3183, %v3187
        %vm3190 = vcmask 523268
        %vm3191 = vmor %vm3190, %vm2237
        %3192 = vst.msk [vmem:[%s720] sm:$0xff] %vm3191, %v3188
        %v3193 = vpack.c.bf16 %v3183, %v3183
        %v3194 = vpack.c.bf16 %v3184, %v3184
        %v3195 = vld [vmem:[%s12] sm:$0x3]
        %v3196 = vld [vmem:[%s10] sm:$0xf]
        %vm3197 = vcmask 31744
        %v3199 = vsel %vm3197, %v3196, 0
        %vm3201 = vcmask 1041408
        %v3203 = vsel %vm3201, %v3193, 0
        %v3206 = vsel %vm3201, %v3194, 0
        %3208 = vmatpush.bf16.msra.mxu0 0
        %3209 = vmatpush.bf16.msra.mxu0 0
        %3210 = vmatpush.bf16.msra.mxu0 0
        %3211 = vmatpush.bf16.msra.mxu0 0
        %3212 = vmatpush.bf16.msra.mxu0 0
        %3213 = vmatpush.bf16.msra.mxu0 0
        %3214 = vmatpush.bf16.msra.mxu0 0
        %3215 = vmatpush.bf16.msra.mxu0 %v3203
        %3216 = vmatmul.bf16.gmra.mxu0 %v3199
        %v3217 = vpop.f32.mrf.mxu0
        %v3218 = vadd.f32 0.0, %v3217
        %v3219 = vpop.f32.mrf.mxu0
        %3220 = vdwg.mxu0
        %3221 = vmatpush.bf16.msra.mxu0 0
        %3222 = vmatpush.bf16.msra.mxu0 0
        %3223 = vmatpush.bf16.msra.mxu0 0
        %3224 = vmatpush.bf16.msra.mxu0 0
        %3225 = vmatpush.bf16.msra.mxu0 0
        %3226 = vmatpush.bf16.msra.mxu0 0
        %3227 = vmatpush.bf16.msra.mxu0 0
        %3228 = vmatpush.bf16.msra.mxu0 %v3206
        %3229 = vmatmul.bf16.gmra.mxu0 %v3199
        %v3230 = vpop.f32.mrf.mxu0
        %v3231 = vadd.f32 0.0, %v3230
        %v3232 = vpop.f32.mrf.mxu0
        %3233 = vdwg.mxu0
        %v3234 = vpack.c.bf16 %v3218, %v3218
        %v3235 = vpack.c.bf16 %v3231, %v3231
        %v3236 = vld [vmem:[#allocation6] sm:$0xff]
        %v3237 = vld [vmem:[#allocation6 + $0x8] sm:$0xff]
        %v3238 = vld [vmem:[#allocation6 + $0x10] sm:$0xff]
        %v3239 = vld [vmem:[#allocation6 + $0x18] sm:$0xff]
        %v3240 = vld [vmem:[#allocation6 + $0x20] sm:$0xff]
        %v3241 = vld [vmem:[#allocation6 + $0x28] sm:$0xff]
        %v3242 = vld [vmem:[#allocation6 + $0x30] sm:$0xff]
        %v3243 = vld [vmem:[#allocation6 + $0x38] sm:$0xff]
        %v3244 = vld [vmem:[#allocation6 + $0x40] sm:$0xff]
        %v3245 = vld [vmem:[#allocation6 + $0x48] sm:$0xff]
        %v3246 = vld [vmem:[#allocation6 + $0x50] sm:$0xff]
        %v3247 = vld [vmem:[#allocation6 + $0x58] sm:$0xff]
        %v3248 = vld [vmem:[#allocation6 + $0x60] sm:$0xff]
        %v3249 = vld [vmem:[#allocation6 + $0x68] sm:$0xff]
        %v3250 = vld [vmem:[#allocation6 + $0x70] sm:$0xff]
        %v3251 = vld [vmem:[#allocation6 + $0x78] sm:$0xff]
        %v3252 = vld [vmem:[#allocation6 + $0x80] sm:$0xff]
        %v3253 = vld [vmem:[#allocation6 + $0x88] sm:$0xff]
        %v3254 = vld [vmem:[#allocation6 + $0x90] sm:$0xff]
        %v3255 = vld [vmem:[#allocation6 + $0x98] sm:$0xff]
        %v3256 = vld [vmem:[#allocation6 + $0xa0] sm:$0xff]
        %v3257 = vld [vmem:[#allocation6 + $0xa8] sm:$0xff]
        %v3258 = vld [vmem:[#allocation6 + $0xb0] sm:$0xff]
        %v3259 = vld [vmem:[#allocation6 + $0xb8] sm:$0xff]
        %v3284 = vunpack.c.l.b16 %v3236
        %v3285 = vunpack.c.h.b16 %v3236
        %v3286 = vunpack.c.l.b16 %v3237
        %v3287 = vunpack.c.h.b16 %v3237
        %v3288 = vunpack.c.l.b16 %v3238
        %v3289 = vunpack.c.h.b16 %v3238
        %v3290 = vunpack.c.l.b16 %v3239
        %v3291 = vunpack.c.h.b16 %v3239
        %v3292 = vunpack.c.l.b16 %v3240
        %v3293 = vunpack.c.h.b16 %v3240
        %v3294 = vunpack.c.l.b16 %v3241
        %v3295 = vunpack.c.h.b16 %v3241
        %v3296 = vunpack.c.l.b16 %v3242
        %v3297 = vunpack.c.h.b16 %v3242
        %v3298 = vunpack.c.l.b16 %v3243
        %v3299 = vunpack.c.h.b16 %v3243
        %v3300 = vunpack.c.l.b16 %v3244
        %v3301 = vunpack.c.h.b16 %v3244
        %v3302 = vunpack.c.l.b16 %v3245
        %v3303 = vunpack.c.h.b16 %v3245
        %v3304 = vunpack.c.l.b16 %v3246
        %v3305 = vunpack.c.h.b16 %v3246
        %v3306 = vunpack.c.l.b16 %v3247
        %v3307 = vunpack.c.h.b16 %v3247
        %v3308 = vunpack.c.l.b16 %v3248
        %v3309 = vunpack.c.h.b16 %v3248
        %v3310 = vunpack.c.l.b16 %v3249
        %v3311 = vunpack.c.h.b16 %v3249
        %v3312 = vunpack.c.l.b16 %v3250
        %v3313 = vunpack.c.h.b16 %v3250
        %v3314 = vunpack.c.l.b16 %v3251
        %v3315 = vunpack.c.h.b16 %v3251
        %v3316 = vunpack.c.l.b16 %v3252
        %v3317 = vunpack.c.h.b16 %v3252
        %v3318 = vunpack.c.l.b16 %v3253
        %v3319 = vunpack.c.h.b16 %v3253
        %v3320 = vunpack.c.l.b16 %v3254
        %v3321 = vunpack.c.h.b16 %v3254
        %v3322 = vunpack.c.l.b16 %v3255
        %v3323 = vunpack.c.h.b16 %v3255
        %v3324 = vunpack.c.l.b16 %v3256
        %v3325 = vunpack.c.h.b16 %v3256
        %v3326 = vunpack.c.l.b16 %v3257
        %v3327 = vunpack.c.h.b16 %v3257
        %v3328 = vunpack.c.l.b16 %v3258
        %v3329 = vunpack.c.h.b16 %v3258
        %v3330 = vunpack.c.l.b16 %v3259
        %v3331 = vunpack.c.h.b16 %v3259
        %v3332 = vpack.c.b16 %v3286, %v3284
        %v3333 = vpack.c.b16 %v3287, %v3285
        %v3334 = vpack.c.b16 %v3290, %v3288
        %v3335 = vpack.c.b16 %v3291, %v3289
        %v3336 = vpack.c.b16 %v3294, %v3292
        %v3337 = vpack.c.b16 %v3295, %v3293
        %v3338 = vpack.c.b16 %v3298, %v3296
        %v3339 = vpack.c.b16 %v3299, %v3297
        %v3340 = vpack.c.b16 %v3302, %v3300
        %v3341 = vpack.c.b16 %v3303, %v3301
        %v3342 = vpack.c.b16 %v3306, %v3304
        %v3343 = vpack.c.b16 %v3307, %v3305
        %v3344 = vpack.c.b16 %v3310, %v3308
        %v3345 = vpack.c.b16 %v3311, %v3309
        %v3346 = vpack.c.b16 %v3314, %v3312
        %v3347 = vpack.c.b16 %v3315, %v3313
        %v3348 = vpack.c.b16 %v3318, %v3316
        %v3349 = vpack.c.b16 %v3319, %v3317
        %v3350 = vpack.c.b16 %v3322, %v3320
        %v3351 = vpack.c.b16 %v3323, %v3321
        %v3352 = vpack.c.b16 %v3326, %v3324
        %v3353 = vpack.c.b16 %v3327, %v3325
        %v3354 = vpack.c.b16 %v3330, %v3328
        %v3355 = vpack.c.b16 %v3331, %v3329
        %v3381 = vsel %vm1459, %v3235, 0
        %3383 = vmatpush.bf16.msra.mxu0 %v3346
        %3384 = vmatpush.bf16.msra.mxu0 %v3344
        %3385 = vmatpush.bf16.msra.mxu0 %v3342
        %3386 = vmatpush.bf16.msra.mxu0 %v3340
        %3387 = vmatpush.bf16.msra.mxu0 %v3338
        %3388 = vmatpush.bf16.msra.mxu0 %v3336
        %3389 = vmatpush.bf16.msra.mxu0 %v3334
        %3390 = vmatpush.bf16.msra.mxu0 %v3332
        %3391 = vmatmul.bf16.gmra.mxu0 %v3234
        %v3392 = vpop.f32.mrf.mxu0
        %v3393 = vadd.f32 0.0, %v3392
        %v3394 = vpop.f32.mrf.mxu0
        %3395 = vdwg.mxu0
        %3396 = vmatpush.bf16.msra.mxu0 0
        %3397 = vmatpush.bf16.msra.mxu0 0
        %3398 = vmatpush.bf16.msra.mxu0 0
        %3399 = vmatpush.bf16.msra.mxu0 0
        %3400 = vmatpush.bf16.msra.mxu0 %v3354
        %3401 = vmatpush.bf16.msra.mxu0 %v3352
        %3402 = vmatpush.bf16.msra.mxu0 %v3350
        %3403 = vmatpush.bf16.msra.mxu0 %v3348
        %3404 = vmatmul.bf16.gmra.mxu0 %v3381
        %v3405 = vpop.f32.mrf.mxu0
        %v3406 = vadd.f32 %v3393, %v3405
        %v3407 = vpop.f32.mrf.mxu0
        %3408 = vdwg.mxu0
        %3409 = vmatpush.bf16.msra.mxu0 %v3347
        %3410 = vmatpush.bf16.msra.mxu0 %v3345
        %3411 = vmatpush.bf16.msra.mxu0 %v3343
        %3412 = vmatpush.bf16.msra.mxu0 %v3341
        %3413 = vmatpush.bf16.msra.mxu0 %v3339
        %3414 = vmatpush.bf16.msra.mxu0 %v3337
        %3415 = vmatpush.bf16.msra.mxu0 %v3335
        %3416 = vmatpush.bf16.msra.mxu0 %v3333
        %3417 = vmatmul.bf16.gmra.mxu0 %v3234
        %v3418 = vpop.f32.mrf.mxu0
        %v3419 = vadd.f32 0.0, %v3418
        %v3420 = vpop.f32.mrf.mxu0
        %3421 = vdwg.mxu0
        %3422 = vmatpush.bf16.msra.mxu0 0
        %3423 = vmatpush.bf16.msra.mxu0 0
        %3424 = vmatpush.bf16.msra.mxu0 0
        %3425 = vmatpush.bf16.msra.mxu0 0
        %3426 = vmatpush.bf16.msra.mxu0 %v3355
        %3427 = vmatpush.bf16.msra.mxu0 %v3353
        %3428 = vmatpush.bf16.msra.mxu0 %v3351
        %3429 = vmatpush.bf16.msra.mxu0 %v3349
        %3430 = vmatmul.bf16.gmra.mxu0 %v3381
        %v3431 = vpop.f32.mrf.mxu0
        %v3432 = vadd.f32 %v3419, %v3431
        %v3433 = vpop.f32.mrf.mxu0
        %3434 = vdwg.mxu0
        %v3436 = vperm.slane %v3195, 0
        %v3437 = vperm.slane %v3195, 1
        %v3440 = vadd.f32 %v3436, %v3406
        %v3441 = vadd.f32 %v3437, %v3432
        %s3442 = scalar_lea.vmem %s10, 4
        %v3443 = vld [vmem:[%s3442] sm:$0xf]
        %v3445 = vsel %vm3197, %v3443, 0
        %3447 = vmatpush.bf16.msra.mxu0 0
        %3448 = vmatpush.bf16.msra.mxu0 0
        %3449 = vmatpush.bf16.msra.mxu0 0
        %3450 = vmatpush.bf16.msra.mxu0 0
        %3451 = vmatpush.bf16.msra.mxu0 0
        %3452 = vmatpush.bf16.msra.mxu0 0
        %3453 = vmatpush.bf16.msra.mxu0 0
        %3454 = vmatpush.bf16.msra.mxu0 %v3203
        %3455 = vmatmul.bf16.gmra.mxu0 %v3445
        %v3456 = vpop.f32.mrf.mxu0
        %v3457 = vadd.f32 0.0, %v3456
        %v3458 = vpop.f32.mrf.mxu0
        %3459 = vdwg.mxu0
        %3460 = vmatpush.bf16.msra.mxu0 0
        %3461 = vmatpush.bf16.msra.mxu0 0
        %3462 = vmatpush.bf16.msra.mxu0 0
        %3463 = vmatpush.bf16.msra.mxu0 0
        %3464 = vmatpush.bf16.msra.mxu0 0
        %3465 = vmatpush.bf16.msra.mxu0 0
        %3466 = vmatpush.bf16.msra.mxu0 0
        %3467 = vmatpush.bf16.msra.mxu0 %v3206
        %3468 = vmatmul.bf16.gmra.mxu0 %v3445
        %v3469 = vpop.f32.mrf.mxu0
        %v3470 = vadd.f32 0.0, %v3469
        %v3471 = vpop.f32.mrf.mxu0
        %3472 = vdwg.mxu0
        %v3473 = vpack.c.bf16 %v3457, %v3457
        %v3474 = vpack.c.bf16 %v3470, %v3470
        %s3475 = scalar_lea.vmem [#allocation6], 192
        %v3476 = vld [vmem:[%s3475] sm:$0xff]
        %v3477 = vld [vmem:[%s3475 + $0x8] sm:$0xff]
        %v3478 = vld [vmem:[%s3475 + $0x10] sm:$0xff]
        %v3479 = vld [vmem:[%s3475 + $0x18] sm:$0xff]
        %v3480 = vld [vmem:[%s3475 + $0x20] sm:$0xff]
        %v3481 = vld [vmem:[%s3475 + $0x28] sm:$0xff]
        %v3482 = vld [vmem:[%s3475 + $0x30] sm:$0xff]
        %v3483 = vld [vmem:[%s3475 + $0x38] sm:$0xff]
        %v3484 = vld [vmem:[%s3475 + $0x40] sm:$0xff]
        %v3485 = vld [vmem:[%s3475 + $0x48] sm:$0xff]
        %v3486 = vld [vmem:[%s3475 + $0x50] sm:$0xff]
        %v3487 = vld [vmem:[%s3475 + $0x58] sm:$0xff]
        %v3488 = vld [vmem:[%s3475 + $0x60] sm:$0xff]
        %v3489 = vld [vmem:[%s3475 + $0x68] sm:$0xff]
        %v3490 = vld [vmem:[%s3475 + $0x70] sm:$0xff]
        %v3491 = vld [vmem:[%s3475 + $0x78] sm:$0xff]
        %v3492 = vld [vmem:[%s3475 + $0x80] sm:$0xff]
        %v3493 = vld [vmem:[%s3475 + $0x88] sm:$0xff]
        %v3494 = vld [vmem:[%s3475 + $0x90] sm:$0xff]
        %v3495 = vld [vmem:[%s3475 + $0x98] sm:$0xff]
        %v3496 = vld [vmem:[%s3475 + $0xa0] sm:$0xff]
        %v3497 = vld [vmem:[%s3475 + $0xa8] sm:$0xff]
        %v3498 = vld [vmem:[%s3475 + $0xb0] sm:$0xff]
        %v3499 = vld [vmem:[%s3475 + $0xb8] sm:$0xff]
        %v3524 = vunpack.c.l.b16 %v3476
        %v3525 = vunpack.c.h.b16 %v3476
        %v3526 = vunpack.c.l.b16 %v3477
        %v3527 = vunpack.c.h.b16 %v3477
        %v3528 = vunpack.c.l.b16 %v3478
        %v3529 = vunpack.c.h.b16 %v3478
        %v3530 = vunpack.c.l.b16 %v3479
        %v3531 = vunpack.c.h.b16 %v3479
        %v3532 = vunpack.c.l.b16 %v3480
        %v3533 = vunpack.c.h.b16 %v3480
        %v3534 = vunpack.c.l.b16 %v3481
        %v3535 = vunpack.c.h.b16 %v3481
        %v3536 = vunpack.c.l.b16 %v3482
        %v3537 = vunpack.c.h.b16 %v3482
        %v3538 = vunpack.c.l.b16 %v3483
        %v3539 = vunpack.c.h.b16 %v3483
        %v3540 = vunpack.c.l.b16 %v3484
        %v3541 = vunpack.c.h.b16 %v3484
        %v3542 = vunpack.c.l.b16 %v3485
        %v3543 = vunpack.c.h.b16 %v3485
        %v3544 = vunpack.c.l.b16 %v3486
        %v3545 = vunpack.c.h.b16 %v3486
        %v3546 = vunpack.c.l.b16 %v3487
        %v3547 = vunpack.c.h.b16 %v3487
        %v3548 = vunpack.c.l.b16 %v3488
        %v3549 = vunpack.c.h.b16 %v3488
        %v3550 = vunpack.c.l.b16 %v3489
        %v3551 = vunpack.c.h.b16 %v3489
        %v3552 = vunpack.c.l.b16 %v3490
        %v3553 = vunpack.c.h.b16 %v3490
        %v3554 = vunpack.c.l.b16 %v3491
        %v3555 = vunpack.c.h.b16 %v3491
        %v3556 = vunpack.c.l.b16 %v3492
        %v3557 = vunpack.c.h.b16 %v3492
        %v3558 = vunpack.c.l.b16 %v3493
        %v3559 = vunpack.c.h.b16 %v3493
        %v3560 = vunpack.c.l.b16 %v3494
        %v3561 = vunpack.c.h.b16 %v3494
        %v3562 = vunpack.c.l.b16 %v3495
        %v3563 = vunpack.c.h.b16 %v3495
        %v3564 = vunpack.c.l.b16 %v3496
        %v3565 = vunpack.c.h.b16 %v3496
        %v3566 = vunpack.c.l.b16 %v3497
        %v3567 = vunpack.c.h.b16 %v3497
        %v3568 = vunpack.c.l.b16 %v3498
        %v3569 = vunpack.c.h.b16 %v3498
        %v3570 = vunpack.c.l.b16 %v3499
        %v3571 = vunpack.c.h.b16 %v3499
        %v3572 = vpack.c.b16 %v3526, %v3524
        %v3573 = vpack.c.b16 %v3527, %v3525
        %v3574 = vpack.c.b16 %v3530, %v3528
        %v3575 = vpack.c.b16 %v3531, %v3529
        %v3576 = vpack.c.b16 %v3534, %v3532
        %v3577 = vpack.c.b16 %v3535, %v3533
        %v3578 = vpack.c.b16 %v3538, %v3536
        %v3579 = vpack.c.b16 %v3539, %v3537
        %v3580 = vpack.c.b16 %v3542, %v3540
        %v3581 = vpack.c.b16 %v3543, %v3541
        %v3582 = vpack.c.b16 %v3546, %v3544
        %v3583 = vpack.c.b16 %v3547, %v3545
        %v3584 = vpack.c.b16 %v3550, %v3548
        %v3585 = vpack.c.b16 %v3551, %v3549
        %v3586 = vpack.c.b16 %v3554, %v3552
        %v3587 = vpack.c.b16 %v3555, %v3553
        %v3588 = vpack.c.b16 %v3558, %v3556
        %v3589 = vpack.c.b16 %v3559, %v3557
        %v3590 = vpack.c.b16 %v3562, %v3560
        %v3591 = vpack.c.b16 %v3563, %v3561
        %v3592 = vpack.c.b16 %v3566, %v3564
        %v3593 = vpack.c.b16 %v3567, %v3565
        %v3594 = vpack.c.b16 %v3570, %v3568
        %v3595 = vpack.c.b16 %v3571, %v3569
        %v3621 = vsel %vm1459, %v3474, 0
        %3623 = vmatpush.bf16.msra.mxu0 %v3586
        %3624 = vmatpush.bf16.msra.mxu0 %v3584
        %3625 = vmatpush.bf16.msra.mxu0 %v3582
        %3626 = vmatpush.bf16.msra.mxu0 %v3580
        %3627 = vmatpush.bf16.msra.mxu0 %v3578
        %3628 = vmatpush.bf16.msra.mxu0 %v3576
        %3629 = vmatpush.bf16.msra.mxu0 %v3574
        %3630 = vmatpush.bf16.msra.mxu0 %v3572
        %3631 = vmatmul.bf16.gmra.mxu0 %v3473
        %v3632 = vpop.f32.mrf.mxu0
        %v3633 = vadd.f32 0.0, %v3632
        %v3634 = vpop.f32.mrf.mxu0
        %3635 = vdwg.mxu0
        %3636 = vmatpush.bf16.msra.mxu0 0
        %3637 = vmatpush.bf16.msra.mxu0 0
        %3638 = vmatpush.bf16.msra.mxu0 0
        %3639 = vmatpush.bf16.msra.mxu0 0
        %3640 = vmatpush.bf16.msra.mxu0 %v3594
        %3641 = vmatpush.bf16.msra.mxu0 %v3592
        %3642 = vmatpush.bf16.msra.mxu0 %v3590
        %3643 = vmatpush.bf16.msra.mxu0 %v3588
        %3644 = vmatmul.bf16.gmra.mxu0 %v3621
        %v3645 = vpop.f32.mrf.mxu0
        %v3646 = vadd.f32 %v3633, %v3645
        %v3647 = vpop.f32.mrf.mxu0
        %3648 = vdwg.mxu0
        %3649 = vmatpush.bf16.msra.mxu0 %v3587
        %3650 = vmatpush.bf16.msra.mxu0 %v3585
        %3651 = vmatpush.bf16.msra.mxu0 %v3583
        %3652 = vmatpush.bf16.msra.mxu0 %v3581
        %3653 = vmatpush.bf16.msra.mxu0 %v3579
        %3654 = vmatpush.bf16.msra.mxu0 %v3577
        %3655 = vmatpush.bf16.msra.mxu0 %v3575
        %3656 = vmatpush.bf16.msra.mxu0 %v3573
        %3657 = vmatmul.bf16.gmra.mxu0 %v3473
        %v3658 = vpop.f32.mrf.mxu0
        %v3659 = vadd.f32 0.0, %v3658
        %v3660 = vpop.f32.mrf.mxu0
        %3661 = vdwg.mxu0
        %3662 = vmatpush.bf16.msra.mxu0 0
        %3663 = vmatpush.bf16.msra.mxu0 0
        %3664 = vmatpush.bf16.msra.mxu0 0
        %3665 = vmatpush.bf16.msra.mxu0 0
        %3666 = vmatpush.bf16.msra.mxu0 %v3595
        %3667 = vmatpush.bf16.msra.mxu0 %v3593
        %3668 = vmatpush.bf16.msra.mxu0 %v3591
        %3669 = vmatpush.bf16.msra.mxu0 %v3589
        %3670 = vmatmul.bf16.gmra.mxu0 %v3621
        %v3671 = vpop.f32.mrf.mxu0
        %v3672 = vadd.f32 %v3659, %v3671
        %v3673 = vpop.f32.mrf.mxu0
        %3674 = vdwg.mxu0
        %v3675 = vadd.f32 %v3440, %v3646
        %v3676 = vadd.f32 %v3441, %v3672
        %s3677 = scalar_lea.vmem %s10, 8
        %v3678 = vld [vmem:[%s3677] sm:$0xf]
        %v3680 = vsel %vm3197, %v3678, 0
        %3682 = vmatpush.bf16.msra.mxu0 0
        %3683 = vmatpush.bf16.msra.mxu0 0
        %3684 = vmatpush.bf16.msra.mxu0 0
        %3685 = vmatpush.bf16.msra.mxu0 0
        %3686 = vmatpush.bf16.msra.mxu0 0
        %3687 = vmatpush.bf16.msra.mxu0 0
        %3688 = vmatpush.bf16.msra.mxu0 0
        %3689 = vmatpush.bf16.msra.mxu0 %v3203
        %3690 = vmatmul.bf16.gmra.mxu0 %v3680
        %v3691 = vpop.f32.mrf.mxu0
        %v3692 = vadd.f32 0.0, %v3691
        %v3693 = vpop.f32.mrf.mxu0
        %3694 = vdwg.mxu0
        %3695 = vmatpush.bf16.msra.mxu0 0
        %3696 = vmatpush.bf16.msra.mxu0 0
        %3697 = vmatpush.bf16.msra.mxu0 0
        %3698 = vmatpush.bf16.msra.mxu0 0
        %3699 = vmatpush.bf16.msra.mxu0 0
        %3700 = vmatpush.bf16.msra.mxu0 0
        %3701 = vmatpush.bf16.msra.mxu0 0
        %3702 = vmatpush.bf16.msra.mxu0 %v3206
        %3703 = vmatmul.bf16.gmra.mxu0 %v3680
        %v3704 = vpop.f32.mrf.mxu0
        %v3705 = vadd.f32 0.0, %v3704
        %v3706 = vpop.f32.mrf.mxu0
        %3707 = vdwg.mxu0
        %v3708 = vpack.c.bf16 %v3692, %v3692
        %v3709 = vpack.c.bf16 %v3705, %v3705
        %s3710 = scalar_lea.vmem [#allocation6], 384
        %v3711 = vld [vmem:[%s3710] sm:$0xff]
        %v3712 = vld [vmem:[%s3710 + $0x8] sm:$0xff]
        %v3713 = vld [vmem:[%s3710 + $0x10] sm:$0xff]
        %v3714 = vld [vmem:[%s3710 + $0x18] sm:$0xff]
        %v3715 = vld [vmem:[%s3710 + $0x20] sm:$0xff]
        %v3716 = vld [vmem:[%s3710 + $0x28] sm:$0xff]
        %v3717 = vld [vmem:[%s3710 + $0x30] sm:$0xff]
        %v3718 = vld [vmem:[%s3710 + $0x38] sm:$0xff]
        %v3719 = vld [vmem:[%s3710 + $0x40] sm:$0xff]
        %v3720 = vld [vmem:[%s3710 + $0x48] sm:$0xff]
        %v3721 = vld [vmem:[%s3710 + $0x50] sm:$0xff]
        %v3722 = vld [vmem:[%s3710 + $0x58] sm:$0xff]
        %v3723 = vld [vmem:[%s3710 + $0x60] sm:$0xff]
        %v3724 = vld [vmem:[%s3710 + $0x68] sm:$0xff]
        %v3725 = vld [vmem:[%s3710 + $0x70] sm:$0xff]
        %v3726 = vld [vmem:[%s3710 + $0x78] sm:$0xff]
        %v3727 = vld [vmem:[%s3710 + $0x80] sm:$0xff]
        %v3728 = vld [vmem:[%s3710 + $0x88] sm:$0xff]
        %v3729 = vld [vmem:[%s3710 + $0x90] sm:$0xff]
        %v3730 = vld [vmem:[%s3710 + $0x98] sm:$0xff]
        %v3731 = vld [vmem:[%s3710 + $0xa0] sm:$0xff]
        %v3732 = vld [vmem:[%s3710 + $0xa8] sm:$0xff]
        %v3733 = vld [vmem:[%s3710 + $0xb0] sm:$0xff]
        %v3734 = vld [vmem:[%s3710 + $0xb8] sm:$0xff]
        %v3759 = vunpack.c.l.b16 %v3711
        %v3760 = vunpack.c.h.b16 %v3711
        %v3761 = vunpack.c.l.b16 %v3712
        %v3762 = vunpack.c.h.b16 %v3712
        %v3763 = vunpack.c.l.b16 %v3713
        %v3764 = vunpack.c.h.b16 %v3713
        %v3765 = vunpack.c.l.b16 %v3714
        %v3766 = vunpack.c.h.b16 %v3714
        %v3767 = vunpack.c.l.b16 %v3715
        %v3768 = vunpack.c.h.b16 %v3715
        %v3769 = vunpack.c.l.b16 %v3716
        %v3770 = vunpack.c.h.b16 %v3716
        %v3771 = vunpack.c.l.b16 %v3717
        %v3772 = vunpack.c.h.b16 %v3717
        %v3773 = vunpack.c.l.b16 %v3718
        %v3774 = vunpack.c.h.b16 %v3718
        %v3775 = vunpack.c.l.b16 %v3719
        %v3776 = vunpack.c.h.b16 %v3719
        %v3777 = vunpack.c.l.b16 %v3720
        %v3778 = vunpack.c.h.b16 %v3720
        %v3779 = vunpack.c.l.b16 %v3721
        %v3780 = vunpack.c.h.b16 %v3721
        %v3781 = vunpack.c.l.b16 %v3722
        %v3782 = vunpack.c.h.b16 %v3722
        %v3783 = vunpack.c.l.b16 %v3723
        %v3784 = vunpack.c.h.b16 %v3723
        %v3785 = vunpack.c.l.b16 %v3724
        %v3786 = vunpack.c.h.b16 %v3724
        %v3787 = vunpack.c.l.b16 %v3725
        %v3788 = vunpack.c.h.b16 %v3725
        %v3789 = vunpack.c.l.b16 %v3726
        %v3790 = vunpack.c.h.b16 %v3726
        %v3791 = vunpack.c.l.b16 %v3727
        %v3792 = vunpack.c.h.b16 %v3727
        %v3793 = vunpack.c.l.b16 %v3728
        %v3794 = vunpack.c.h.b16 %v3728
        %v3795 = vunpack.c.l.b16 %v3729
        %v3796 = vunpack.c.h.b16 %v3729
        %v3797 = vunpack.c.l.b16 %v3730
        %v3798 = vunpack.c.h.b16 %v3730
        %v3799 = vunpack.c.l.b16 %v3731
        %v3800 = vunpack.c.h.b16 %v3731
        %v3801 = vunpack.c.l.b16 %v3732
        %v3802 = vunpack.c.h.b16 %v3732
        %v3803 = vunpack.c.l.b16 %v3733
        %v3804 = vunpack.c.h.b16 %v3733
        %v3805 = vunpack.c.l.b16 %v3734
        %v3806 = vunpack.c.h.b16 %v3734
        %v3807 = vpack.c.b16 %v3761, %v3759
        %v3808 = vpack.c.b16 %v3762, %v3760
        %v3809 = vpack.c.b16 %v3765, %v3763
        %v3810 = vpack.c.b16 %v3766, %v3764
        %v3811 = vpack.c.b16 %v3769, %v3767
        %v3812 = vpack.c.b16 %v3770, %v3768
        %v3813 = vpack.c.b16 %v3773, %v3771
        %v3814 = vpack.c.b16 %v3774, %v3772
        %v3815 = vpack.c.b16 %v3777, %v3775
        %v3816 = vpack.c.b16 %v3778, %v3776
        %v3817 = vpack.c.b16 %v3781, %v3779
        %v3818 = vpack.c.b16 %v3782, %v3780
        %v3819 = vpack.c.b16 %v3785, %v3783
        %v3820 = vpack.c.b16 %v3786, %v3784
        %v3821 = vpack.c.b16 %v3789, %v3787
        %v3822 = vpack.c.b16 %v3790, %v3788
        %v3823 = vpack.c.b16 %v3793, %v3791
        %v3824 = vpack.c.b16 %v3794, %v3792
        %v3825 = vpack.c.b16 %v3797, %v3795
        %v3826 = vpack.c.b16 %v3798, %v3796
        %v3827 = vpack.c.b16 %v3801, %v3799
        %v3828 = vpack.c.b16 %v3802, %v3800
        %v3829 = vpack.c.b16 %v3805, %v3803
        %v3830 = vpack.c.b16 %v3806, %v3804
        %v3856 = vsel %vm1459, %v3709, 0
        %3858 = vmatpush.bf16.msra.mxu0 %v3821
        %3859 = vmatpush.bf16.msra.mxu0 %v3819
        %3860 = vmatpush.bf16.msra.mxu0 %v3817
        %3861 = vmatpush.bf16.msra.mxu0 %v3815
        %3862 = vmatpush.bf16.msra.mxu0 %v3813
        %3863 = vmatpush.bf16.msra.mxu0 %v3811
        %3864 = vmatpush.bf16.msra.mxu0 %v3809
        %3865 = vmatpush.bf16.msra.mxu0 %v3807
        %3866 = vmatmul.bf16.gmra.mxu0 %v3708
        %v3867 = vpop.f32.mrf.mxu0
        %v3868 = vadd.f32 0.0, %v3867
        %v3869 = vpop.f32.mrf.mxu0
        %3870 = vdwg.mxu0
        %3871 = vmatpush.bf16.msra.mxu0 0
        %3872 = vmatpush.bf16.msra.mxu0 0
        %3873 = vmatpush.bf16.msra.mxu0 0
        %3874 = vmatpush.bf16.msra.mxu0 0
        %3875 = vmatpush.bf16.msra.mxu0 %v3829
        %3876 = vmatpush.bf16.msra.mxu0 %v3827
        %3877 = vmatpush.bf16.msra.mxu0 %v3825
        %3878 = vmatpush.bf16.msra.mxu0 %v3823
        %3879 = vmatmul.bf16.gmra.mxu0 %v3856
        %v3880 = vpop.f32.mrf.mxu0
        %v3881 = vadd.f32 %v3868, %v3880
        %v3882 = vpop.f32.mrf.mxu0
        %3883 = vdwg.mxu0
        %3884 = vmatpush.bf16.msra.mxu0 %v3822
        %3885 = vmatpush.bf16.msra.mxu0 %v3820
        %3886 = vmatpush.bf16.msra.mxu0 %v3818
        %3887 = vmatpush.bf16.msra.mxu0 %v3816
        %3888 = vmatpush.bf16.msra.mxu0 %v3814
        %3889 = vmatpush.bf16.msra.mxu0 %v3812
        %3890 = vmatpush.bf16.msra.mxu0 %v3810
        %3891 = vmatpush.bf16.msra.mxu0 %v3808
        %3892 = vmatmul.bf16.gmra.mxu0 %v3708
        %v3893 = vpop.f32.mrf.mxu0
        %v3894 = vadd.f32 0.0, %v3893
        %v3895 = vpop.f32.mrf.mxu0
        %3896 = vdwg.mxu0
        %3897 = vmatpush.bf16.msra.mxu0 0
        %3898 = vmatpush.bf16.msra.mxu0 0
        %3899 = vmatpush.bf16.msra.mxu0 0
        %3900 = vmatpush.bf16.msra.mxu0 0
        %3901 = vmatpush.bf16.msra.mxu0 %v3830
        %3902 = vmatpush.bf16.msra.mxu0 %v3828
        %3903 = vmatpush.bf16.msra.mxu0 %v3826
        %3904 = vmatpush.bf16.msra.mxu0 %v3824
        %3905 = vmatmul.bf16.gmra.mxu0 %v3856
        %v3906 = vpop.f32.mrf.mxu0
        %v3907 = vadd.f32 %v3894, %v3906
        %v3908 = vpop.f32.mrf.mxu0
        %3909 = vdwg.mxu0
        %v3910 = vadd.f32 %v3675, %v3881
        %v3911 = vadd.f32 %v3676, %v3907
        %s3912 = scalar_lea.vmem %s10, 12
        %v3913 = vld [vmem:[%s3912] sm:$0xf]
        %v3915 = vsel %vm3197, %v3913, 0
        %3917 = vmatpush.bf16.msra.mxu0 0
        %3918 = vmatpush.bf16.msra.mxu0 0
        %3919 = vmatpush.bf16.msra.mxu0 0
        %3920 = vmatpush.bf16.msra.mxu0 0
        %3921 = vmatpush.bf16.msra.mxu0 0
        %3922 = vmatpush.bf16.msra.mxu0 0
        %3923 = vmatpush.bf16.msra.mxu0 0
        %3924 = vmatpush.bf16.msra.mxu0 %v3203
        %3925 = vmatmul.bf16.gmra.mxu0 %v3915
        %v3926 = vpop.f32.mrf.mxu0
        %v3927 = vadd.f32 0.0, %v3926
        %v3928 = vpop.f32.mrf.mxu0
        %3929 = vdwg.mxu0
        %3930 = vmatpush.bf16.msra.mxu0 0
        %3931 = vmatpush.bf16.msra.mxu0 0
        %3932 = vmatpush.bf16.msra.mxu0 0
        %3933 = vmatpush.bf16.msra.mxu0 0
        %3934 = vmatpush.bf16.msra.mxu0 0
        %3935 = vmatpush.bf16.msra.mxu0 0
        %3936 = vmatpush.bf16.msra.mxu0 0
        %3937 = vmatpush.bf16.msra.mxu0 %v3206
        %3938 = vmatmul.bf16.gmra.mxu0 %v3915
        %v3939 = vpop.f32.mrf.mxu0
        %v3940 = vadd.f32 0.0, %v3939
        %v3941 = vpop.f32.mrf.mxu0
        %3942 = vdwg.mxu0
        %v3943 = vpack.c.bf16 %v3927, %v3927
        %v3944 = vpack.c.bf16 %v3940, %v3940
        %s3945 = scalar_lea.vmem [#allocation6], 576
        %v3946 = vld [vmem:[%s3945] sm:$0xff]
        %v3947 = vld [vmem:[%s3945 + $0x8] sm:$0xff]
        %v3948 = vld [vmem:[%s3945 + $0x10] sm:$0xff]
        %v3949 = vld [vmem:[%s3945 + $0x18] sm:$0xff]
        %v3950 = vld [vmem:[%s3945 + $0x20] sm:$0xff]
        %v3951 = vld [vmem:[%s3945 + $0x28] sm:$0xff]
        %v3952 = vld [vmem:[%s3945 + $0x30] sm:$0xff]
        %v3953 = vld [vmem:[%s3945 + $0x38] sm:$0xff]
        %v3954 = vld [vmem:[%s3945 + $0x40] sm:$0xff]
        %v3955 = vld [vmem:[%s3945 + $0x48] sm:$0xff]
        %v3956 = vld [vmem:[%s3945 + $0x50] sm:$0xff]
        %v3957 = vld [vmem:[%s3945 + $0x58] sm:$0xff]
        %v3958 = vld [vmem:[%s3945 + $0x60] sm:$0xff]
        %v3959 = vld [vmem:[%s3945 + $0x68] sm:$0xff]
        %v3960 = vld [vmem:[%s3945 + $0x70] sm:$0xff]
        %v3961 = vld [vmem:[%s3945 + $0x78] sm:$0xff]
        %v3962 = vld [vmem:[%s3945 + $0x80] sm:$0xff]
        %v3963 = vld [vmem:[%s3945 + $0x88] sm:$0xff]
        %v3964 = vld [vmem:[%s3945 + $0x90] sm:$0xff]
        %v3965 = vld [vmem:[%s3945 + $0x98] sm:$0xff]
        %v3966 = vld [vmem:[%s3945 + $0xa0] sm:$0xff]
        %v3967 = vld [vmem:[%s3945 + $0xa8] sm:$0xff]
        %v3968 = vld [vmem:[%s3945 + $0xb0] sm:$0xff]
        %v3969 = vld [vmem:[%s3945 + $0xb8] sm:$0xff]
        %v3994 = vunpack.c.l.b16 %v3946
        %v3995 = vunpack.c.h.b16 %v3946
        %v3996 = vunpack.c.l.b16 %v3947
        %v3997 = vunpack.c.h.b16 %v3947
        %v3998 = vunpack.c.l.b16 %v3948
        %v3999 = vunpack.c.h.b16 %v3948
        %v4000 = vunpack.c.l.b16 %v3949
        %v4001 = vunpack.c.h.b16 %v3949
        %v4002 = vunpack.c.l.b16 %v3950
        %v4003 = vunpack.c.h.b16 %v3950
        %v4004 = vunpack.c.l.b16 %v3951
        %v4005 = vunpack.c.h.b16 %v3951
        %v4006 = vunpack.c.l.b16 %v3952
        %v4007 = vunpack.c.h.b16 %v3952
        %v4008 = vunpack.c.l.b16 %v3953
        %v4009 = vunpack.c.h.b16 %v3953
        %v4010 = vunpack.c.l.b16 %v3954
        %v4011 = vunpack.c.h.b16 %v3954
        %v4012 = vunpack.c.l.b16 %v3955
        %v4013 = vunpack.c.h.b16 %v3955
        %v4014 = vunpack.c.l.b16 %v3956
        %v4015 = vunpack.c.h.b16 %v3956
        %v4016 = vunpack.c.l.b16 %v3957
        %v4017 = vunpack.c.h.b16 %v3957
        %v4018 = vunpack.c.l.b16 %v3958
        %v4019 = vunpack.c.h.b16 %v3958
        %v4020 = vunpack.c.l.b16 %v3959
        %v4021 = vunpack.c.h.b16 %v3959
        %v4022 = vunpack.c.l.b16 %v3960
        %v4023 = vunpack.c.h.b16 %v3960
        %v4024 = vunpack.c.l.b16 %v3961
        %v4025 = vunpack.c.h.b16 %v3961
        %v4026 = vunpack.c.l.b16 %v3962
        %v4027 = vunpack.c.h.b16 %v3962
        %v4028 = vunpack.c.l.b16 %v3963
        %v4029 = vunpack.c.h.b16 %v3963
        %v4030 = vunpack.c.l.b16 %v3964
        %v4031 = vunpack.c.h.b16 %v3964
        %v4032 = vunpack.c.l.b16 %v3965
        %v4033 = vunpack.c.h.b16 %v3965
        %v4034 = vunpack.c.l.b16 %v3966
        %v4035 = vunpack.c.h.b16 %v3966
        %v4036 = vunpack.c.l.b16 %v3967
        %v4037 = vunpack.c.h.b16 %v3967
        %v4038 = vunpack.c.l.b16 %v3968
        %v4039 = vunpack.c.h.b16 %v3968
        %v4040 = vunpack.c.l.b16 %v3969
        %v4041 = vunpack.c.h.b16 %v3969
        %v4042 = vpack.c.b16 %v3996, %v3994
        %v4043 = vpack.c.b16 %v3997, %v3995
        %v4044 = vpack.c.b16 %v4000, %v3998
        %v4045 = vpack.c.b16 %v4001, %v3999
        %v4046 = vpack.c.b16 %v4004, %v4002
        %v4047 = vpack.c.b16 %v4005, %v4003
        %v4048 = vpack.c.b16 %v4008, %v4006
        %v4049 = vpack.c.b16 %v4009, %v4007
        %v4050 = vpack.c.b16 %v4012, %v4010
        %v4051 = vpack.c.b16 %v4013, %v4011
        %v4052 = vpack.c.b16 %v4016, %v4014
        %v4053 = vpack.c.b16 %v4017, %v4015
        %v4054 = vpack.c.b16 %v4020, %v4018
        %v4055 = vpack.c.b16 %v4021, %v4019
        %v4056 = vpack.c.b16 %v4024, %v4022
        %v4057 = vpack.c.b16 %v4025, %v4023
        %v4058 = vpack.c.b16 %v4028, %v4026
        %v4059 = vpack.c.b16 %v4029, %v4027
        %v4060 = vpack.c.b16 %v4032, %v4030
        %v4061 = vpack.c.b16 %v4033, %v4031
        %v4062 = vpack.c.b16 %v4036, %v4034
        %v4063 = vpack.c.b16 %v4037, %v4035
        %v4064 = vpack.c.b16 %v4040, %v4038
        %v4065 = vpack.c.b16 %v4041, %v4039
        %v4091 = vsel %vm1459, %v3944, 0
        %4093 = vmatpush.bf16.msra.mxu0 %v4056
        %4094 = vmatpush.bf16.msra.mxu0 %v4054
        %4095 = vmatpush.bf16.msra.mxu0 %v4052
        %4096 = vmatpush.bf16.msra.mxu0 %v4050
        %4097 = vmatpush.bf16.msra.mxu0 %v4048
        %4098 = vmatpush.bf16.msra.mxu0 %v4046
        %4099 = vmatpush.bf16.msra.mxu0 %v4044
        %4100 = vmatpush.bf16.msra.mxu0 %v4042
        %4101 = vmatmul.bf16.gmra.mxu0 %v3943
        %v4102 = vpop.f32.mrf.mxu0
        %v4103 = vadd.f32 0.0, %v4102
        %v4104 = vpop.f32.mrf.mxu0
        %4105 = vdwg.mxu0
        %4106 = vmatpush.bf16.msra.mxu0 0
        %4107 = vmatpush.bf16.msra.mxu0 0
        %4108 = vmatpush.bf16.msra.mxu0 0
        %4109 = vmatpush.bf16.msra.mxu0 0
        %4110 = vmatpush.bf16.msra.mxu0 %v4064
        %4111 = vmatpush.bf16.msra.mxu0 %v4062
        %4112 = vmatpush.bf16.msra.mxu0 %v4060
        %4113 = vmatpush.bf16.msra.mxu0 %v4058
        %4114 = vmatmul.bf16.gmra.mxu0 %v4091
        %v4115 = vpop.f32.mrf.mxu0
        %v4116 = vadd.f32 %v4103, %v4115
        %v4117 = vpop.f32.mrf.mxu0
        %4118 = vdwg.mxu0
        %4119 = vmatpush.bf16.msra.mxu0 %v4057
        %4120 = vmatpush.bf16.msra.mxu0 %v4055
        %4121 = vmatpush.bf16.msra.mxu0 %v4053
        %4122 = vmatpush.bf16.msra.mxu0 %v4051
        %4123 = vmatpush.bf16.msra.mxu0 %v4049
        %4124 = vmatpush.bf16.msra.mxu0 %v4047
        %4125 = vmatpush.bf16.msra.mxu0 %v4045
        %4126 = vmatpush.bf16.msra.mxu0 %v4043
        %4127 = vmatmul.bf16.gmra.mxu0 %v3943
        %v4128 = vpop.f32.mrf.mxu0
        %v4129 = vadd.f32 0.0, %v4128
        %v4130 = vpop.f32.mrf.mxu0
        %4131 = vdwg.mxu0
        %4132 = vmatpush.bf16.msra.mxu0 0
        %4133 = vmatpush.bf16.msra.mxu0 0
        %4134 = vmatpush.bf16.msra.mxu0 0
        %4135 = vmatpush.bf16.msra.mxu0 0
        %4136 = vmatpush.bf16.msra.mxu0 %v4065
        %4137 = vmatpush.bf16.msra.mxu0 %v4063
        %4138 = vmatpush.bf16.msra.mxu0 %v4061
        %4139 = vmatpush.bf16.msra.mxu0 %v4059
        %4140 = vmatmul.bf16.gmra.mxu0 %v4091
        %v4141 = vpop.f32.mrf.mxu0
        %v4142 = vadd.f32 %v4129, %v4141
        %v4143 = vpop.f32.mrf.mxu0
        %4144 = vdwg.mxu0
        %v4145 = vadd.f32 %v3910, %v4116
        %v4146 = vadd.f32 %v3911, %v4142
        %v4147 = vmax.f32 %v4145, 0.0
        %v4148 = vmax.f32 %v4146, 0.0
        %v4149 = vpack.c.bf16 %v4147, %v4147
        %v4150 = vpack.c.bf16 %v4148, %v4148
        %v4151 = vld [vmem:[%s15] sm:$0x3]
        %v4152 = vld [vmem:[%s13] sm:$0xf]
        %v4153 = vld [vmem:[%s13 + $0x4] sm:$0xf]
        %v4156 = vunpack.c.l.b16 %v4152
        %v4157 = vunpack.c.l.b16 %v4153
        %v4158 = vpack.c.b16 %v4157, %v4156
        %v4160 = vsel %vm2233, %v4158, 0
        %v4163 = vsel %vm2237, %v4149, 0
        %v4166 = vsel %vm2237, %v4150, 0
        %4168 = vmatpush.bf16.msra.mxu0 0
        %4169 = vmatpush.bf16.msra.mxu0 0
        %4170 = vmatpush.bf16.msra.mxu0 0
        %4171 = vmatpush.bf16.msra.mxu0 0
        %4172 = vmatpush.bf16.msra.mxu0 0
        %4173 = vmatpush.bf16.msra.mxu0 0
        %4174 = vmatpush.bf16.msra.mxu0 0
        %4175 = vmatpush.bf16.msra.mxu0 %v4163
        %4176 = vmatmul.bf16.gmra.mxu0 %v4160
        %v4177 = vpop.f32.mrf.mxu0
        %v4178 = vadd.f32 0.0, %v4177
        %v4179 = vpop.f32.mrf.mxu0
        %v4180 = vadd.f32 0.0, %v4179
        %4181 = vdwg.mxu0
        %4182 = vmatpush.bf16.msra.mxu0 0
        %4183 = vmatpush.bf16.msra.mxu0 0
        %4184 = vmatpush.bf16.msra.mxu0 0
        %4185 = vmatpush.bf16.msra.mxu0 0
        %4186 = vmatpush.bf16.msra.mxu0 0
        %4187 = vmatpush.bf16.msra.mxu0 0
        %4188 = vmatpush.bf16.msra.mxu0 0
        %4189 = vmatpush.bf16.msra.mxu0 %v4166
        %4190 = vmatmul.bf16.gmra.mxu0 %v4160
        %v4191 = vpop.f32.mrf.mxu0
        %v4192 = vadd.f32 0.0, %v4191
        %v4193 = vpop.f32.mrf.mxu0
        %v4194 = vadd.f32 0.0, %v4193
        %4195 = vdwg.mxu0
        %v4196 = vpack.c.bf16 %v4180, %v4178
        %v4197 = vpack.c.bf16 %v4194, %v4192
        %v4198 = vld [vmem:[#allocation7] sm:$0xff]
        %v4199 = vld [vmem:[#allocation7 + $0x8] sm:$0xff]
        %v4200 = vld [vmem:[#allocation7 + $0x10] sm:$0xff]
        %v4201 = vld [vmem:[#allocation7 + $0x18] sm:$0xff]
        %v4202 = vld [vmem:[#allocation7 + $0x20] sm:$0xff]
        %v4203 = vld [vmem:[#allocation7 + $0x28] sm:$0xff]
        %v4204 = vld [vmem:[#allocation7 + $0x30] sm:$0xff]
        %v4205 = vld [vmem:[#allocation7 + $0x38] sm:$0xff]
        %v4206 = vld [vmem:[#allocation7 + $0x40] sm:$0xff]
        %v4207 = vld [vmem:[#allocation7 + $0x48] sm:$0xff]
        %v4208 = vld [vmem:[#allocation7 + $0x50] sm:$0xff]
        %v4209 = vld [vmem:[#allocation7 + $0x58] sm:$0xff]
        %v4210 = vld [vmem:[#allocation7 + $0x60] sm:$0xff]
        %v4211 = vld [vmem:[#allocation7 + $0x68] sm:$0xff]
        %v4212 = vld [vmem:[#allocation7 + $0x70] sm:$0xff]
        %v4213 = vld [vmem:[#allocation7 + $0x78] sm:$0xff]
        %v4214 = vld [vmem:[#allocation7 + $0x80] sm:$0xff]
        %v4215 = vld [vmem:[#allocation7 + $0x88] sm:$0xff]
        %v4216 = vld [vmem:[#allocation7 + $0x90] sm:$0xff]
        %v4217 = vld [vmem:[#allocation7 + $0x98] sm:$0xff]
        %v4218 = vld [vmem:[#allocation7 + $0xa0] sm:$0xff]
        %v4219 = vld [vmem:[#allocation7 + $0xa8] sm:$0xff]
        %v4220 = vld [vmem:[#allocation7 + $0xb0] sm:$0xff]
        %v4221 = vld [vmem:[#allocation7 + $0xb8] sm:$0xff]
        %v4246 = vunpack.c.l.b16 %v4198
        %v4247 = vunpack.c.h.b16 %v4198
        %v4248 = vunpack.c.l.b16 %v4199
        %v4249 = vunpack.c.h.b16 %v4199
        %v4250 = vunpack.c.l.b16 %v4200
        %v4251 = vunpack.c.h.b16 %v4200
        %v4252 = vunpack.c.l.b16 %v4201
        %v4253 = vunpack.c.h.b16 %v4201
        %v4254 = vunpack.c.l.b16 %v4202
        %v4255 = vunpack.c.h.b16 %v4202
        %v4256 = vunpack.c.l.b16 %v4203
        %v4257 = vunpack.c.h.b16 %v4203
        %v4258 = vunpack.c.l.b16 %v4204
        %v4259 = vunpack.c.h.b16 %v4204
        %v4260 = vunpack.c.l.b16 %v4205
        %v4261 = vunpack.c.h.b16 %v4205
        %v4262 = vunpack.c.l.b16 %v4206
        %v4263 = vunpack.c.h.b16 %v4206
        %v4264 = vunpack.c.l.b16 %v4207
        %v4265 = vunpack.c.h.b16 %v4207
        %v4266 = vunpack.c.l.b16 %v4208
        %v4267 = vunpack.c.h.b16 %v4208
        %v4268 = vunpack.c.l.b16 %v4209
        %v4269 = vunpack.c.h.b16 %v4209
        %v4270 = vunpack.c.l.b16 %v4210
        %v4271 = vunpack.c.h.b16 %v4210
        %v4272 = vunpack.c.l.b16 %v4211
        %v4273 = vunpack.c.h.b16 %v4211
        %v4274 = vunpack.c.l.b16 %v4212
        %v4275 = vunpack.c.h.b16 %v4212
        %v4276 = vunpack.c.l.b16 %v4213
        %v4277 = vunpack.c.h.b16 %v4213
        %v4278 = vunpack.c.l.b16 %v4214
        %v4279 = vunpack.c.h.b16 %v4214
        %v4280 = vunpack.c.l.b16 %v4215
        %v4281 = vunpack.c.h.b16 %v4215
        %v4282 = vunpack.c.l.b16 %v4216
        %v4283 = vunpack.c.h.b16 %v4216
        %v4284 = vunpack.c.l.b16 %v4217
        %v4285 = vunpack.c.h.b16 %v4217
        %v4286 = vunpack.c.l.b16 %v4218
        %v4287 = vunpack.c.h.b16 %v4218
        %v4288 = vunpack.c.l.b16 %v4219
        %v4289 = vunpack.c.h.b16 %v4219
        %v4290 = vunpack.c.l.b16 %v4220
        %v4291 = vunpack.c.h.b16 %v4220
        %v4292 = vunpack.c.l.b16 %v4221
        %v4293 = vunpack.c.h.b16 %v4221
        %v4294 = vpack.c.b16 %v4248, %v4246
        %v4295 = vpack.c.b16 %v4249, %v4247
        %v4296 = vpack.c.b16 %v4252, %v4250
        %v4297 = vpack.c.b16 %v4253, %v4251
        %v4298 = vpack.c.b16 %v4256, %v4254
        %v4299 = vpack.c.b16 %v4257, %v4255
        %v4300 = vpack.c.b16 %v4260, %v4258
        %v4301 = vpack.c.b16 %v4261, %v4259
        %v4302 = vpack.c.b16 %v4264, %v4262
        %v4303 = vpack.c.b16 %v4265, %v4263
        %v4304 = vpack.c.b16 %v4268, %v4266
        %v4305 = vpack.c.b16 %v4269, %v4267
        %v4306 = vpack.c.b16 %v4272, %v4270
        %v4307 = vpack.c.b16 %v4273, %v4271
        %v4308 = vpack.c.b16 %v4276, %v4274
        %v4309 = vpack.c.b16 %v4277, %v4275
        %v4310 = vpack.c.b16 %v4280, %v4278
        %v4311 = vpack.c.b16 %v4281, %v4279
        %v4312 = vpack.c.b16 %v4284, %v4282
        %v4313 = vpack.c.b16 %v4285, %v4283
        %v4314 = vpack.c.b16 %v4288, %v4286
        %v4315 = vpack.c.b16 %v4289, %v4287
        %v4316 = vpack.c.b16 %v4292, %v4290
        %v4317 = vpack.c.b16 %v4293, %v4291
        %v4343 = vsel %vm1459, %v4197, 0
        %4345 = vmatpush.bf16.msra.mxu0 %v4308
        %4346 = vmatpush.bf16.msra.mxu0 %v4306
        %4347 = vmatpush.bf16.msra.mxu0 %v4304
        %4348 = vmatpush.bf16.msra.mxu0 %v4302
        %4349 = vmatpush.bf16.msra.mxu0 %v4300
        %4350 = vmatpush.bf16.msra.mxu0 %v4298
        %4351 = vmatpush.bf16.msra.mxu0 %v4296
        %4352 = vmatpush.bf16.msra.mxu0 %v4294
        %4353 = vmatmul.bf16.gmra.mxu0 %v4196
        %v4354 = vpop.f32.mrf.mxu0
        %v4355 = vadd.f32 0.0, %v4354
        %v4356 = vpop.f32.mrf.mxu0
        %v4357 = vadd.f32 0.0, %v4356
        %4358 = vdwg.mxu0
        %4359 = vmatpush.bf16.msra.mxu0 0
        %4360 = vmatpush.bf16.msra.mxu0 0
        %4361 = vmatpush.bf16.msra.mxu0 0
        %4362 = vmatpush.bf16.msra.mxu0 0
        %4363 = vmatpush.bf16.msra.mxu0 %v4316
        %4364 = vmatpush.bf16.msra.mxu0 %v4314
        %4365 = vmatpush.bf16.msra.mxu0 %v4312
        %4366 = vmatpush.bf16.msra.mxu0 %v4310
        %4367 = vmatmul.bf16.gmra.mxu0 %v4343
        %v4368 = vpop.f32.mrf.mxu0
        %v4369 = vadd.f32 %v4355, %v4368
        %v4370 = vpop.f32.mrf.mxu0
        %v4371 = vadd.f32 %v4357, %v4370
        %4372 = vdwg.mxu0
        %4373 = vmatpush.bf16.msra.mxu0 %v4309
        %4374 = vmatpush.bf16.msra.mxu0 %v4307
        %4375 = vmatpush.bf16.msra.mxu0 %v4305
        %4376 = vmatpush.bf16.msra.mxu0 %v4303
        %4377 = vmatpush.bf16.msra.mxu0 %v4301
        %4378 = vmatpush.bf16.msra.mxu0 %v4299
        %4379 = vmatpush.bf16.msra.mxu0 %v4297
        %4380 = vmatpush.bf16.msra.mxu0 %v4295
        %4381 = vmatmul.bf16.gmra.mxu0 %v4196
        %v4382 = vpop.f32.mrf.mxu0
        %v4383 = vadd.f32 0.0, %v4382
        %v4384 = vpop.f32.mrf.mxu0
        %v4385 = vadd.f32 0.0, %v4384
        %4386 = vdwg.mxu0
        %4387 = vmatpush.bf16.msra.mxu0 0
        %4388 = vmatpush.bf16.msra.mxu0 0
        %4389 = vmatpush.bf16.msra.mxu0 0
        %4390 = vmatpush.bf16.msra.mxu0 0
        %4391 = vmatpush.bf16.msra.mxu0 %v4317
        %4392 = vmatpush.bf16.msra.mxu0 %v4315
        %4393 = vmatpush.bf16.msra.mxu0 %v4313
        %4394 = vmatpush.bf16.msra.mxu0 %v4311
        %4395 = vmatmul.bf16.gmra.mxu0 %v4343
        %v4396 = vpop.f32.mrf.mxu0
        %v4397 = vadd.f32 %v4383, %v4396
        %v4398 = vpop.f32.mrf.mxu0
        %v4399 = vadd.f32 %v4385, %v4398
        %4400 = vdwg.mxu0
        %v4402 = vperm.slane %v4151, 0
        %v4403 = vperm.slane %v4151, 1
        %v4406 = vadd.f32 %v4402, %v4369
        %v4407 = vadd.f32 %v4403, %v4397
        %v4408 = vadd.f32 %v4402, %v4371
        %v4409 = vadd.f32 %v4403, %v4399
        %s4410 = scalar_lea.vmem %s13, 8
        %v4411 = vld [vmem:[%s4410] sm:$0xf]
        %v4412 = vld [vmem:[%s4410 + $0x4] sm:$0xf]
        %v4415 = vunpack.c.l.b16 %v4411
        %v4416 = vunpack.c.l.b16 %v4412
        %v4417 = vpack.c.b16 %v4416, %v4415
        %v4419 = vsel %vm2233, %v4417, 0
        %4421 = vmatpush.bf16.msra.mxu0 0
        %4422 = vmatpush.bf16.msra.mxu0 0
        %4423 = vmatpush.bf16.msra.mxu0 0
        %4424 = vmatpush.bf16.msra.mxu0 0
        %4425 = vmatpush.bf16.msra.mxu0 0
        %4426 = vmatpush.bf16.msra.mxu0 0
        %4427 = vmatpush.bf16.msra.mxu0 0
        %4428 = vmatpush.bf16.msra.mxu0 %v4163
        %4429 = vmatmul.bf16.gmra.mxu0 %v4419
        %v4430 = vpop.f32.mrf.mxu0
        %v4431 = vadd.f32 0.0, %v4430
        %v4432 = vpop.f32.mrf.mxu0
        %v4433 = vadd.f32 0.0, %v4432
        %4434 = vdwg.mxu0
        %4435 = vmatpush.bf16.msra.mxu0 0
        %4436 = vmatpush.bf16.msra.mxu0 0
        %4437 = vmatpush.bf16.msra.mxu0 0
        %4438 = vmatpush.bf16.msra.mxu0 0
        %4439 = vmatpush.bf16.msra.mxu0 0
        %4440 = vmatpush.bf16.msra.mxu0 0
        %4441 = vmatpush.bf16.msra.mxu0 0
        %4442 = vmatpush.bf16.msra.mxu0 %v4166
        %4443 = vmatmul.bf16.gmra.mxu0 %v4419
        %v4444 = vpop.f32.mrf.mxu0
        %v4445 = vadd.f32 0.0, %v4444
        %v4446 = vpop.f32.mrf.mxu0
        %v4447 = vadd.f32 0.0, %v4446
        %4448 = vdwg.mxu0
        %v4449 = vpack.c.bf16 %v4433, %v4431
        %v4450 = vpack.c.bf16 %v4447, %v4445
        %s4451 = scalar_lea.vmem [#allocation7], 192
        %v4452 = vld [vmem:[%s4451] sm:$0xff]
        %v4453 = vld [vmem:[%s4451 + $0x8] sm:$0xff]
        %v4454 = vld [vmem:[%s4451 + $0x10] sm:$0xff]
        %v4455 = vld [vmem:[%s4451 + $0x18] sm:$0xff]
        %v4456 = vld [vmem:[%s4451 + $0x20] sm:$0xff]
        %v4457 = vld [vmem:[%s4451 + $0x28] sm:$0xff]
        %v4458 = vld [vmem:[%s4451 + $0x30] sm:$0xff]
        %v4459 = vld [vmem:[%s4451 + $0x38] sm:$0xff]
        %v4460 = vld [vmem:[%s4451 + $0x40] sm:$0xff]
        %v4461 = vld [vmem:[%s4451 + $0x48] sm:$0xff]
        %v4462 = vld [vmem:[%s4451 + $0x50] sm:$0xff]
        %v4463 = vld [vmem:[%s4451 + $0x58] sm:$0xff]
        %v4464 = vld [vmem:[%s4451 + $0x60] sm:$0xff]
        %v4465 = vld [vmem:[%s4451 + $0x68] sm:$0xff]
        %v4466 = vld [vmem:[%s4451 + $0x70] sm:$0xff]
        %v4467 = vld [vmem:[%s4451 + $0x78] sm:$0xff]
        %v4468 = vld [vmem:[%s4451 + $0x80] sm:$0xff]
        %v4469 = vld [vmem:[%s4451 + $0x88] sm:$0xff]
        %v4470 = vld [vmem:[%s4451 + $0x90] sm:$0xff]
        %v4471 = vld [vmem:[%s4451 + $0x98] sm:$0xff]
        %v4472 = vld [vmem:[%s4451 + $0xa0] sm:$0xff]
        %v4473 = vld [vmem:[%s4451 + $0xa8] sm:$0xff]
        %v4474 = vld [vmem:[%s4451 + $0xb0] sm:$0xff]
        %v4475 = vld [vmem:[%s4451 + $0xb8] sm:$0xff]
        %v4500 = vunpack.c.l.b16 %v4452
        %v4501 = vunpack.c.h.b16 %v4452
        %v4502 = vunpack.c.l.b16 %v4453
        %v4503 = vunpack.c.h.b16 %v4453
        %v4504 = vunpack.c.l.b16 %v4454
        %v4505 = vunpack.c.h.b16 %v4454
        %v4506 = vunpack.c.l.b16 %v4455
        %v4507 = vunpack.c.h.b16 %v4455
        %v4508 = vunpack.c.l.b16 %v4456
        %v4509 = vunpack.c.h.b16 %v4456
        %v4510 = vunpack.c.l.b16 %v4457
        %v4511 = vunpack.c.h.b16 %v4457
        %v4512 = vunpack.c.l.b16 %v4458
        %v4513 = vunpack.c.h.b16 %v4458
        %v4514 = vunpack.c.l.b16 %v4459
        %v4515 = vunpack.c.h.b16 %v4459
        %v4516 = vunpack.c.l.b16 %v4460
        %v4517 = vunpack.c.h.b16 %v4460
        %v4518 = vunpack.c.l.b16 %v4461
        %v4519 = vunpack.c.h.b16 %v4461
        %v4520 = vunpack.c.l.b16 %v4462
        %v4521 = vunpack.c.h.b16 %v4462
        %v4522 = vunpack.c.l.b16 %v4463
        %v4523 = vunpack.c.h.b16 %v4463
        %v4524 = vunpack.c.l.b16 %v4464
        %v4525 = vunpack.c.h.b16 %v4464
        %v4526 = vunpack.c.l.b16 %v4465
        %v4527 = vunpack.c.h.b16 %v4465
        %v4528 = vunpack.c.l.b16 %v4466
        %v4529 = vunpack.c.h.b16 %v4466
        %v4530 = vunpack.c.l.b16 %v4467
        %v4531 = vunpack.c.h.b16 %v4467
        %v4532 = vunpack.c.l.b16 %v4468
        %v4533 = vunpack.c.h.b16 %v4468
        %v4534 = vunpack.c.l.b16 %v4469
        %v4535 = vunpack.c.h.b16 %v4469
        %v4536 = vunpack.c.l.b16 %v4470
        %v4537 = vunpack.c.h.b16 %v4470
        %v4538 = vunpack.c.l.b16 %v4471
        %v4539 = vunpack.c.h.b16 %v4471
        %v4540 = vunpack.c.l.b16 %v4472
        %v4541 = vunpack.c.h.b16 %v4472
        %v4542 = vunpack.c.l.b16 %v4473
        %v4543 = vunpack.c.h.b16 %v4473
        %v4544 = vunpack.c.l.b16 %v4474
        %v4545 = vunpack.c.h.b16 %v4474
        %v4546 = vunpack.c.l.b16 %v4475
        %v4547 = vunpack.c.h.b16 %v4475
        %v4548 = vpack.c.b16 %v4502, %v4500
        %v4549 = vpack.c.b16 %v4503, %v4501
        %v4550 = vpack.c.b16 %v4506, %v4504
        %v4551 = vpack.c.b16 %v4507, %v4505
        %v4552 = vpack.c.b16 %v4510, %v4508
        %v4553 = vpack.c.b16 %v4511, %v4509
        %v4554 = vpack.c.b16 %v4514, %v4512
        %v4555 = vpack.c.b16 %v4515, %v4513
        %v4556 = vpack.c.b16 %v4518, %v4516
        %v4557 = vpack.c.b16 %v4519, %v4517
        %v4558 = vpack.c.b16 %v4522, %v4520
        %v4559 = vpack.c.b16 %v4523, %v4521
        %v4560 = vpack.c.b16 %v4526, %v4524
        %v4561 = vpack.c.b16 %v4527, %v4525
        %v4562 = vpack.c.b16 %v4530, %v4528
        %v4563 = vpack.c.b16 %v4531, %v4529
        %v4564 = vpack.c.b16 %v4534, %v4532
        %v4565 = vpack.c.b16 %v4535, %v4533
        %v4566 = vpack.c.b16 %v4538, %v4536
        %v4567 = vpack.c.b16 %v4539, %v4537
        %v4568 = vpack.c.b16 %v4542, %v4540
        %v4569 = vpack.c.b16 %v4543, %v4541
        %v4570 = vpack.c.b16 %v4546, %v4544
        %v4571 = vpack.c.b16 %v4547, %v4545
        %v4597 = vsel %vm1459, %v4450, 0
        %4599 = vmatpush.bf16.msra.mxu0 %v4562
        %4600 = vmatpush.bf16.msra.mxu0 %v4560
        %4601 = vmatpush.bf16.msra.mxu0 %v4558
        %4602 = vmatpush.bf16.msra.mxu0 %v4556
        %4603 = vmatpush.bf16.msra.mxu0 %v4554
        %4604 = vmatpush.bf16.msra.mxu0 %v4552
        %4605 = vmatpush.bf16.msra.mxu0 %v4550
        %4606 = vmatpush.bf16.msra.mxu0 %v4548
        %4607 = vmatmul.bf16.gmra.mxu0 %v4449
        %v4608 = vpop.f32.mrf.mxu0
        %v4609 = vadd.f32 0.0, %v4608
        %v4610 = vpop.f32.mrf.mxu0
        %v4611 = vadd.f32 0.0, %v4610
        %4612 = vdwg.mxu0
        %4613 = vmatpush.bf16.msra.mxu0 0
        %4614 = vmatpush.bf16.msra.mxu0 0
        %4615 = vmatpush.bf16.msra.mxu0 0
        %4616 = vmatpush.bf16.msra.mxu0 0
        %4617 = vmatpush.bf16.msra.mxu0 %v4570
        %4618 = vmatpush.bf16.msra.mxu0 %v4568
        %4619 = vmatpush.bf16.msra.mxu0 %v4566
        %4620 = vmatpush.bf16.msra.mxu0 %v4564
        %4621 = vmatmul.bf16.gmra.mxu0 %v4597
        %v4622 = vpop.f32.mrf.mxu0
        %v4623 = vadd.f32 %v4609, %v4622
        %v4624 = vpop.f32.mrf.mxu0
        %v4625 = vadd.f32 %v4611, %v4624
        %4626 = vdwg.mxu0
        %4627 = vmatpush.bf16.msra.mxu0 %v4563
        %4628 = vmatpush.bf16.msra.mxu0 %v4561
        %4629 = vmatpush.bf16.msra.mxu0 %v4559
        %4630 = vmatpush.bf16.msra.mxu0 %v4557
        %4631 = vmatpush.bf16.msra.mxu0 %v4555
        %4632 = vmatpush.bf16.msra.mxu0 %v4553
        %4633 = vmatpush.bf16.msra.mxu0 %v4551
        %4634 = vmatpush.bf16.msra.mxu0 %v4549
        %4635 = vmatmul.bf16.gmra.mxu0 %v4449
        %v4636 = vpop.f32.mrf.mxu0
        %v4637 = vadd.f32 0.0, %v4636
        %v4638 = vpop.f32.mrf.mxu0
        %v4639 = vadd.f32 0.0, %v4638
        %4640 = vdwg.mxu0
        %4641 = vmatpush.bf16.msra.mxu0 0
        %4642 = vmatpush.bf16.msra.mxu0 0
        %4643 = vmatpush.bf16.msra.mxu0 0
        %4644 = vmatpush.bf16.msra.mxu0 0
        %4645 = vmatpush.bf16.msra.mxu0 %v4571
        %4646 = vmatpush.bf16.msra.mxu0 %v4569
        %4647 = vmatpush.bf16.msra.mxu0 %v4567
        %4648 = vmatpush.bf16.msra.mxu0 %v4565
        %4649 = vmatmul.bf16.gmra.mxu0 %v4597
        %v4650 = vpop.f32.mrf.mxu0
        %v4651 = vadd.f32 %v4637, %v4650
        %v4652 = vpop.f32.mrf.mxu0
        %v4653 = vadd.f32 %v4639, %v4652
        %4654 = vdwg.mxu0
        %v4655 = vadd.f32 %v4406, %v4623
        %v4656 = vadd.f32 %v4407, %v4651
        %v4657 = vadd.f32 %v4408, %v4625
        %v4658 = vadd.f32 %v4409, %v4653
        %s4659 = scalar_lea.vmem %s13, 16
        %v4660 = vld [vmem:[%s4659] sm:$0xf]
        %v4661 = vld [vmem:[%s4659 + $0x4] sm:$0xf]
        %v4664 = vunpack.c.l.b16 %v4660
        %v4665 = vunpack.c.l.b16 %v4661
        %v4666 = vpack.c.b16 %v4665, %v4664
        %v4668 = vsel %vm2233, %v4666, 0
        %4670 = vmatpush.bf16.msra.mxu0 0
        %4671 = vmatpush.bf16.msra.mxu0 0
        %4672 = vmatpush.bf16.msra.mxu0 0
        %4673 = vmatpush.bf16.msra.mxu0 0
        %4674 = vmatpush.bf16.msra.mxu0 0
        %4675 = vmatpush.bf16.msra.mxu0 0
        %4676 = vmatpush.bf16.msra.mxu0 0
        %4677 = vmatpush.bf16.msra.mxu0 %v4163
        %4678 = vmatmul.bf16.gmra.mxu0 %v4668
        %v4679 = vpop.f32.mrf.mxu0
        %v4680 = vadd.f32 0.0, %v4679
        %v4681 = vpop.f32.mrf.mxu0
        %v4682 = vadd.f32 0.0, %v4681
        %4683 = vdwg.mxu0
        %4684 = vmatpush.bf16.msra.mxu0 0
        %4685 = vmatpush.bf16.msra.mxu0 0
        %4686 = vmatpush.bf16.msra.mxu0 0
        %4687 = vmatpush.bf16.msra.mxu0 0
        %4688 = vmatpush.bf16.msra.mxu0 0
        %4689 = vmatpush.bf16.msra.mxu0 0
        %4690 = vmatpush.bf16.msra.mxu0 0
        %4691 = vmatpush.bf16.msra.mxu0 %v4166
        %4692 = vmatmul.bf16.gmra.mxu0 %v4668
        %v4693 = vpop.f32.mrf.mxu0
        %v4694 = vadd.f32 0.0, %v4693
        %v4695 = vpop.f32.mrf.mxu0
        %v4696 = vadd.f32 0.0, %v4695
        %4697 = vdwg.mxu0
        %v4698 = vpack.c.bf16 %v4682, %v4680
        %v4699 = vpack.c.bf16 %v4696, %v4694
        %s4700 = scalar_lea.vmem [#allocation7], 384
        %v4701 = vld [vmem:[%s4700] sm:$0xff]
        %v4702 = vld [vmem:[%s4700 + $0x8] sm:$0xff]
        %v4703 = vld [vmem:[%s4700 + $0x10] sm:$0xff]
        %v4704 = vld [vmem:[%s4700 + $0x18] sm:$0xff]
        %v4705 = vld [vmem:[%s4700 + $0x20] sm:$0xff]
        %v4706 = vld [vmem:[%s4700 + $0x28] sm:$0xff]
        %v4707 = vld [vmem:[%s4700 + $0x30] sm:$0xff]
        %v4708 = vld [vmem:[%s4700 + $0x38] sm:$0xff]
        %v4709 = vld [vmem:[%s4700 + $0x40] sm:$0xff]
        %v4710 = vld [vmem:[%s4700 + $0x48] sm:$0xff]
        %v4711 = vld [vmem:[%s4700 + $0x50] sm:$0xff]
        %v4712 = vld [vmem:[%s4700 + $0x58] sm:$0xff]
        %v4713 = vld [vmem:[%s4700 + $0x60] sm:$0xff]
        %v4714 = vld [vmem:[%s4700 + $0x68] sm:$0xff]
        %v4715 = vld [vmem:[%s4700 + $0x70] sm:$0xff]
        %v4716 = vld [vmem:[%s4700 + $0x78] sm:$0xff]
        %v4717 = vld [vmem:[%s4700 + $0x80] sm:$0xff]
        %v4718 = vld [vmem:[%s4700 + $0x88] sm:$0xff]
        %v4719 = vld [vmem:[%s4700 + $0x90] sm:$0xff]
        %v4720 = vld [vmem:[%s4700 + $0x98] sm:$0xff]
        %v4721 = vld [vmem:[%s4700 + $0xa0] sm:$0xff]
        %v4722 = vld [vmem:[%s4700 + $0xa8] sm:$0xff]
        %v4723 = vld [vmem:[%s4700 + $0xb0] sm:$0xff]
        %v4724 = vld [vmem:[%s4700 + $0xb8] sm:$0xff]
        %v4749 = vunpack.c.l.b16 %v4701
        %v4750 = vunpack.c.h.b16 %v4701
        %v4751 = vunpack.c.l.b16 %v4702
        %v4752 = vunpack.c.h.b16 %v4702
        %v4753 = vunpack.c.l.b16 %v4703
        %v4754 = vunpack.c.h.b16 %v4703
        %v4755 = vunpack.c.l.b16 %v4704
        %v4756 = vunpack.c.h.b16 %v4704
        %v4757 = vunpack.c.l.b16 %v4705
        %v4758 = vunpack.c.h.b16 %v4705
        %v4759 = vunpack.c.l.b16 %v4706
        %v4760 = vunpack.c.h.b16 %v4706
        %v4761 = vunpack.c.l.b16 %v4707
        %v4762 = vunpack.c.h.b16 %v4707
        %v4763 = vunpack.c.l.b16 %v4708
        %v4764 = vunpack.c.h.b16 %v4708
        %v4765 = vunpack.c.l.b16 %v4709
        %v4766 = vunpack.c.h.b16 %v4709
        %v4767 = vunpack.c.l.b16 %v4710
        %v4768 = vunpack.c.h.b16 %v4710
        %v4769 = vunpack.c.l.b16 %v4711
        %v4770 = vunpack.c.h.b16 %v4711
        %v4771 = vunpack.c.l.b16 %v4712
        %v4772 = vunpack.c.h.b16 %v4712
        %v4773 = vunpack.c.l.b16 %v4713
        %v4774 = vunpack.c.h.b16 %v4713
        %v4775 = vunpack.c.l.b16 %v4714
        %v4776 = vunpack.c.h.b16 %v4714
        %v4777 = vunpack.c.l.b16 %v4715
        %v4778 = vunpack.c.h.b16 %v4715
        %v4779 = vunpack.c.l.b16 %v4716
        %v4780 = vunpack.c.h.b16 %v4716
        %v4781 = vunpack.c.l.b16 %v4717
        %v4782 = vunpack.c.h.b16 %v4717
        %v4783 = vunpack.c.l.b16 %v4718
        %v4784 = vunpack.c.h.b16 %v4718
        %v4785 = vunpack.c.l.b16 %v4719
        %v4786 = vunpack.c.h.b16 %v4719
        %v4787 = vunpack.c.l.b16 %v4720
        %v4788 = vunpack.c.h.b16 %v4720
        %v4789 = vunpack.c.l.b16 %v4721
        %v4790 = vunpack.c.h.b16 %v4721
        %v4791 = vunpack.c.l.b16 %v4722
        %v4792 = vunpack.c.h.b16 %v4722
        %v4793 = vunpack.c.l.b16 %v4723
        %v4794 = vunpack.c.h.b16 %v4723
        %v4795 = vunpack.c.l.b16 %v4724
        %v4796 = vunpack.c.h.b16 %v4724
        %v4797 = vpack.c.b16 %v4751, %v4749
        %v4798 = vpack.c.b16 %v4752, %v4750
        %v4799 = vpack.c.b16 %v4755, %v4753
        %v4800 = vpack.c.b16 %v4756, %v4754
        %v4801 = vpack.c.b16 %v4759, %v4757
        %v4802 = vpack.c.b16 %v4760, %v4758
        %v4803 = vpack.c.b16 %v4763, %v4761
        %v4804 = vpack.c.b16 %v4764, %v4762
        %v4805 = vpack.c.b16 %v4767, %v4765
        %v4806 = vpack.c.b16 %v4768, %v4766
        %v4807 = vpack.c.b16 %v4771, %v4769
        %v4808 = vpack.c.b16 %v4772, %v4770
        %v4809 = vpack.c.b16 %v4775, %v4773
        %v4810 = vpack.c.b16 %v4776, %v4774
        %v4811 = vpack.c.b16 %v4779, %v4777
        %v4812 = vpack.c.b16 %v4780, %v4778
        %v4813 = vpack.c.b16 %v4783, %v4781
        %v4814 = vpack.c.b16 %v4784, %v4782
        %v4815 = vpack.c.b16 %v4787, %v4785
        %v4816 = vpack.c.b16 %v4788, %v4786
        %v4817 = vpack.c.b16 %v4791, %v4789
        %v4818 = vpack.c.b16 %v4792, %v4790
        %v4819 = vpack.c.b16 %v4795, %v4793
        %v4820 = vpack.c.b16 %v4796, %v4794
        %v4846 = vsel %vm1459, %v4699, 0
        %4848 = vmatpush.bf16.msra.mxu0 %v4811
        %4849 = vmatpush.bf16.msra.mxu0 %v4809
        %4850 = vmatpush.bf16.msra.mxu0 %v4807
        %4851 = vmatpush.bf16.msra.mxu0 %v4805
        %4852 = vmatpush.bf16.msra.mxu0 %v4803
        %4853 = vmatpush.bf16.msra.mxu0 %v4801
        %4854 = vmatpush.bf16.msra.mxu0 %v4799
        %4855 = vmatpush.bf16.msra.mxu0 %v4797
        %4856 = vmatmul.bf16.gmra.mxu0 %v4698
        %v4857 = vpop.f32.mrf.mxu0
        %v4858 = vadd.f32 0.0, %v4857
        %v4859 = vpop.f32.mrf.mxu0
        %v4860 = vadd.f32 0.0, %v4859
        %4861 = vdwg.mxu0
        %4862 = vmatpush.bf16.msra.mxu0 0
        %4863 = vmatpush.bf16.msra.mxu0 0
        %4864 = vmatpush.bf16.msra.mxu0 0
        %4865 = vmatpush.bf16.msra.mxu0 0
        %4866 = vmatpush.bf16.msra.mxu0 %v4819
        %4867 = vmatpush.bf16.msra.mxu0 %v4817
        %4868 = vmatpush.bf16.msra.mxu0 %v4815
        %4869 = vmatpush.bf16.msra.mxu0 %v4813
        %4870 = vmatmul.bf16.gmra.mxu0 %v4846
        %v4871 = vpop.f32.mrf.mxu0
        %v4872 = vadd.f32 %v4858, %v4871
        %v4873 = vpop.f32.mrf.mxu0
        %v4874 = vadd.f32 %v4860, %v4873
        %4875 = vdwg.mxu0
        %4876 = vmatpush.bf16.msra.mxu0 %v4812
        %4877 = vmatpush.bf16.msra.mxu0 %v4810
        %4878 = vmatpush.bf16.msra.mxu0 %v4808
        %4879 = vmatpush.bf16.msra.mxu0 %v4806
        %4880 = vmatpush.bf16.msra.mxu0 %v4804
        %4881 = vmatpush.bf16.msra.mxu0 %v4802
        %4882 = vmatpush.bf16.msra.mxu0 %v4800
        %4883 = vmatpush.bf16.msra.mxu0 %v4798
        %4884 = vmatmul.bf16.gmra.mxu0 %v4698
        %v4885 = vpop.f32.mrf.mxu0
        %v4886 = vadd.f32 0.0, %v4885
        %v4887 = vpop.f32.mrf.mxu0
        %v4888 = vadd.f32 0.0, %v4887
        %4889 = vdwg.mxu0
        %4890 = vmatpush.bf16.msra.mxu0 0
        %4891 = vmatpush.bf16.msra.mxu0 0
        %4892 = vmatpush.bf16.msra.mxu0 0
        %4893 = vmatpush.bf16.msra.mxu0 0
        %4894 = vmatpush.bf16.msra.mxu0 %v4820
        %4895 = vmatpush.bf16.msra.mxu0 %v4818
        %4896 = vmatpush.bf16.msra.mxu0 %v4816
        %4897 = vmatpush.bf16.msra.mxu0 %v4814
        %4898 = vmatmul.bf16.gmra.mxu0 %v4846
        %v4899 = vpop.f32.mrf.mxu0
        %v4900 = vadd.f32 %v4886, %v4899
        %v4901 = vpop.f32.mrf.mxu0
        %v4902 = vadd.f32 %v4888, %v4901
        %4903 = vdwg.mxu0
        %v4904 = vadd.f32 %v4655, %v4872
        %v4905 = vadd.f32 %v4656, %v4900
        %v4906 = vadd.f32 %v4657, %v4874
        %v4907 = vadd.f32 %v4658, %v4902
        %s4908 = scalar_lea.vmem %s13, 24
        %v4909 = vld [vmem:[%s4908] sm:$0xf]
        %v4910 = vld [vmem:[%s4908 + $0x4] sm:$0xf]
        %v4913 = vunpack.c.l.b16 %v4909
        %v4914 = vunpack.c.l.b16 %v4910
        %v4915 = vpack.c.b16 %v4914, %v4913
        %v4917 = vsel %vm2233, %v4915, 0
        %4919 = vmatpush.bf16.msra.mxu0 0
        %4920 = vmatpush.bf16.msra.mxu0 0
        %4921 = vmatpush.bf16.msra.mxu0 0
        %4922 = vmatpush.bf16.msra.mxu0 0
        %4923 = vmatpush.bf16.msra.mxu0 0
        %4924 = vmatpush.bf16.msra.mxu0 0
        %4925 = vmatpush.bf16.msra.mxu0 0
        %4926 = vmatpush.bf16.msra.mxu0 %v4163
        %4927 = vmatmul.bf16.gmra.mxu0 %v4917
        %v4928 = vpop.f32.mrf.mxu0
        %v4929 = vadd.f32 0.0, %v4928
        %v4930 = vpop.f32.mrf.mxu0
        %v4931 = vadd.f32 0.0, %v4930
        %4932 = vdwg.mxu0
        %4933 = vmatpush.bf16.msra.mxu0 0
        %4934 = vmatpush.bf16.msra.mxu0 0
        %4935 = vmatpush.bf16.msra.mxu0 0
        %4936 = vmatpush.bf16.msra.mxu0 0
        %4937 = vmatpush.bf16.msra.mxu0 0
        %4938 = vmatpush.bf16.msra.mxu0 0
        %4939 = vmatpush.bf16.msra.mxu0 0
        %4940 = vmatpush.bf16.msra.mxu0 %v4166
        %4941 = vmatmul.bf16.gmra.mxu0 %v4917
        %v4942 = vpop.f32.mrf.mxu0
        %v4943 = vadd.f32 0.0, %v4942
        %v4944 = vpop.f32.mrf.mxu0
        %v4945 = vadd.f32 0.0, %v4944
        %4946 = vdwg.mxu0
        %v4947 = vpack.c.bf16 %v4931, %v4929
        %v4948 = vpack.c.bf16 %v4945, %v4943
        %s4949 = scalar_lea.vmem [#allocation7], 576
        %v4950 = vld [vmem:[%s4949] sm:$0xff]
        %v4951 = vld [vmem:[%s4949 + $0x8] sm:$0xff]
        %v4952 = vld [vmem:[%s4949 + $0x10] sm:$0xff]
        %v4953 = vld [vmem:[%s4949 + $0x18] sm:$0xff]
        %v4954 = vld [vmem:[%s4949 + $0x20] sm:$0xff]
        %v4955 = vld [vmem:[%s4949 + $0x28] sm:$0xff]
        %v4956 = vld [vmem:[%s4949 + $0x30] sm:$0xff]
        %v4957 = vld [vmem:[%s4949 + $0x38] sm:$0xff]
        %v4958 = vld [vmem:[%s4949 + $0x40] sm:$0xff]
        %v4959 = vld [vmem:[%s4949 + $0x48] sm:$0xff]
        %v4960 = vld [vmem:[%s4949 + $0x50] sm:$0xff]
        %v4961 = vld [vmem:[%s4949 + $0x58] sm:$0xff]
        %v4962 = vld [vmem:[%s4949 + $0x60] sm:$0xff]
        %v4963 = vld [vmem:[%s4949 + $0x68] sm:$0xff]
        %v4964 = vld [vmem:[%s4949 + $0x70] sm:$0xff]
        %v4965 = vld [vmem:[%s4949 + $0x78] sm:$0xff]
        %v4966 = vld [vmem:[%s4949 + $0x80] sm:$0xff]
        %v4967 = vld [vmem:[%s4949 + $0x88] sm:$0xff]
        %v4968 = vld [vmem:[%s4949 + $0x90] sm:$0xff]
        %v4969 = vld [vmem:[%s4949 + $0x98] sm:$0xff]
        %v4970 = vld [vmem:[%s4949 + $0xa0] sm:$0xff]
        %v4971 = vld [vmem:[%s4949 + $0xa8] sm:$0xff]
        %v4972 = vld [vmem:[%s4949 + $0xb0] sm:$0xff]
        %v4973 = vld [vmem:[%s4949 + $0xb8] sm:$0xff]
        %v4998 = vunpack.c.l.b16 %v4950
        %v4999 = vunpack.c.h.b16 %v4950
        %v5000 = vunpack.c.l.b16 %v4951
        %v5001 = vunpack.c.h.b16 %v4951
        %v5002 = vunpack.c.l.b16 %v4952
        %v5003 = vunpack.c.h.b16 %v4952
        %v5004 = vunpack.c.l.b16 %v4953
        %v5005 = vunpack.c.h.b16 %v4953
        %v5006 = vunpack.c.l.b16 %v4954
        %v5007 = vunpack.c.h.b16 %v4954
        %v5008 = vunpack.c.l.b16 %v4955
        %v5009 = vunpack.c.h.b16 %v4955
        %v5010 = vunpack.c.l.b16 %v4956
        %v5011 = vunpack.c.h.b16 %v4956
        %v5012 = vunpack.c.l.b16 %v4957
        %v5013 = vunpack.c.h.b16 %v4957
        %v5014 = vunpack.c.l.b16 %v4958
        %v5015 = vunpack.c.h.b16 %v4958
        %v5016 = vunpack.c.l.b16 %v4959
        %v5017 = vunpack.c.h.b16 %v4959
        %v5018 = vunpack.c.l.b16 %v4960
        %v5019 = vunpack.c.h.b16 %v4960
        %v5020 = vunpack.c.l.b16 %v4961
        %v5021 = vunpack.c.h.b16 %v4961
        %v5022 = vunpack.c.l.b16 %v4962
        %v5023 = vunpack.c.h.b16 %v4962
        %v5024 = vunpack.c.l.b16 %v4963
        %v5025 = vunpack.c.h.b16 %v4963
        %v5026 = vunpack.c.l.b16 %v4964
        %v5027 = vunpack.c.h.b16 %v4964
        %v5028 = vunpack.c.l.b16 %v4965
        %v5029 = vunpack.c.h.b16 %v4965
        %v5030 = vunpack.c.l.b16 %v4966
        %v5031 = vunpack.c.h.b16 %v4966
        %v5032 = vunpack.c.l.b16 %v4967
        %v5033 = vunpack.c.h.b16 %v4967
        %v5034 = vunpack.c.l.b16 %v4968
        %v5035 = vunpack.c.h.b16 %v4968
        %v5036 = vunpack.c.l.b16 %v4969
        %v5037 = vunpack.c.h.b16 %v4969
        %v5038 = vunpack.c.l.b16 %v4970
        %v5039 = vunpack.c.h.b16 %v4970
        %v5040 = vunpack.c.l.b16 %v4971
        %v5041 = vunpack.c.h.b16 %v4971
        %v5042 = vunpack.c.l.b16 %v4972
        %v5043 = vunpack.c.h.b16 %v4972
        %v5044 = vunpack.c.l.b16 %v4973
        %v5045 = vunpack.c.h.b16 %v4973
        %v5046 = vpack.c.b16 %v5000, %v4998
        %v5047 = vpack.c.b16 %v5001, %v4999
        %v5048 = vpack.c.b16 %v5004, %v5002
        %v5049 = vpack.c.b16 %v5005, %v5003
        %v5050 = vpack.c.b16 %v5008, %v5006
        %v5051 = vpack.c.b16 %v5009, %v5007
        %v5052 = vpack.c.b16 %v5012, %v5010
        %v5053 = vpack.c.b16 %v5013, %v5011
        %v5054 = vpack.c.b16 %v5016, %v5014
        %v5055 = vpack.c.b16 %v5017, %v5015
        %v5056 = vpack.c.b16 %v5020, %v5018
        %v5057 = vpack.c.b16 %v5021, %v5019
        %v5058 = vpack.c.b16 %v5024, %v5022
        %v5059 = vpack.c.b16 %v5025, %v5023
        %v5060 = vpack.c.b16 %v5028, %v5026
        %v5061 = vpack.c.b16 %v5029, %v5027
        %v5062 = vpack.c.b16 %v5032, %v5030
        %v5063 = vpack.c.b16 %v5033, %v5031
        %v5064 = vpack.c.b16 %v5036, %v5034
        %v5065 = vpack.c.b16 %v5037, %v5035
        %v5066 = vpack.c.b16 %v5040, %v5038
        %v5067 = vpack.c.b16 %v5041, %v5039
        %v5068 = vpack.c.b16 %v5044, %v5042
        %v5069 = vpack.c.b16 %v5045, %v5043
        %v5095 = vsel %vm1459, %v4948, 0
        %5097 = vmatpush.bf16.msra.mxu0 %v5060
        %5098 = vmatpush.bf16.msra.mxu0 %v5058
        %5099 = vmatpush.bf16.msra.mxu0 %v5056
        %5100 = vmatpush.bf16.msra.mxu0 %v5054
        %5101 = vmatpush.bf16.msra.mxu0 %v5052
        %5102 = vmatpush.bf16.msra.mxu0 %v5050
        %5103 = vmatpush.bf16.msra.mxu0 %v5048
        %5104 = vmatpush.bf16.msra.mxu0 %v5046
        %5105 = vmatmul.bf16.gmra.mxu0 %v4947
        %v5106 = vpop.f32.mrf.mxu0
        %v5107 = vadd.f32 0.0, %v5106
        %v5108 = vpop.f32.mrf.mxu0
        %v5109 = vadd.f32 0.0, %v5108
        %5110 = vdwg.mxu0
        %5111 = vmatpush.bf16.msra.mxu0 0
        %5112 = vmatpush.bf16.msra.mxu0 0
        %5113 = vmatpush.bf16.msra.mxu0 0
        %5114 = vmatpush.bf16.msra.mxu0 0
        %5115 = vmatpush.bf16.msra.mxu0 %v5068
        %5116 = vmatpush.bf16.msra.mxu0 %v5066
        %5117 = vmatpush.bf16.msra.mxu0 %v5064
        %5118 = vmatpush.bf16.msra.mxu0 %v5062
        %5119 = vmatmul.bf16.gmra.mxu0 %v5095
        %v5120 = vpop.f32.mrf.mxu0
        %v5121 = vadd.f32 %v5107, %v5120
        %v5122 = vpop.f32.mrf.mxu0
        %v5123 = vadd.f32 %v5109, %v5122
        %5124 = vdwg.mxu0
        %5125 = vmatpush.bf16.msra.mxu0 %v5061
        %5126 = vmatpush.bf16.msra.mxu0 %v5059
        %5127 = vmatpush.bf16.msra.mxu0 %v5057
        %5128 = vmatpush.bf16.msra.mxu0 %v5055
        %5129 = vmatpush.bf16.msra.mxu0 %v5053
        %5130 = vmatpush.bf16.msra.mxu0 %v5051
        %5131 = vmatpush.bf16.msra.mxu0 %v5049
        %5132 = vmatpush.bf16.msra.mxu0 %v5047
        %5133 = vmatmul.bf16.gmra.mxu0 %v4947
        %v5134 = vpop.f32.mrf.mxu0
        %v5135 = vadd.f32 0.0, %v5134
        %v5136 = vpop.f32.mrf.mxu0
        %v5137 = vadd.f32 0.0, %v5136
        %5138 = vdwg.mxu0
        %5139 = vmatpush.bf16.msra.mxu0 0
        %5140 = vmatpush.bf16.msra.mxu0 0
        %5141 = vmatpush.bf16.msra.mxu0 0
        %5142 = vmatpush.bf16.msra.mxu0 0
        %5143 = vmatpush.bf16.msra.mxu0 %v5069
        %5144 = vmatpush.bf16.msra.mxu0 %v5067
        %5145 = vmatpush.bf16.msra.mxu0 %v5065
        %5146 = vmatpush.bf16.msra.mxu0 %v5063
        %5147 = vmatmul.bf16.gmra.mxu0 %v5095
        %v5148 = vpop.f32.mrf.mxu0
        %v5149 = vadd.f32 %v5135, %v5148
        %v5150 = vpop.f32.mrf.mxu0
        %v5151 = vadd.f32 %v5137, %v5150
        %5152 = vdwg.mxu0
        %v5153 = vadd.f32 %v4904, %v5121
        %v5154 = vadd.f32 %v4905, %v5149
        %v5155 = vadd.f32 %v4906, %v5123
        %v5156 = vadd.f32 %v4907, %v5151
        %v5157 = vmax.f32 %v5153, 0.0
        %v5158 = vmax.f32 %v5154, 0.0
        %v5159 = vmax.f32 %v5155, 0.0
        %v5160 = vmax.f32 %v5156, 0.0
        %v5161 = vpack.c.bf16 %v5159, %v5157
        %v5162 = vpack.c.bf16 %v5160, %v5158
        %v5163 = vld [vmem:[%s18] sm:$0x1]
        %v5164 = vld [vmem:[%s16] sm:$0xf]
        %v5165 = vld [vmem:[%s16 + $0x4] sm:$0xf]
        %v5166 = vld [vmem:[%s16 + $0x8] sm:$0xf]
        %v5167 = vld [vmem:[%s16 + $0xc] sm:$0xf]
        %v5172 = vunpack.c.l.b16 %v5164
        %v5173 = vunpack.c.l.b16 %v5165
        %v5174 = vunpack.c.l.b16 %v5166
        %v5175 = vunpack.c.l.b16 %v5167
        %v5176 = vpack.c.b16 %v5173, %v5172
        %v5177 = vpack.c.b16 %v5175, %v5174
        %v5179 = vsel %vm1283, %v5176, 0
        %v5182 = vsel %vm1283, %v5177, 0
        %5184 = vmatpush.bf16.msra.mxu0 0
        %5185 = vmatpush.bf16.msra.mxu0 0
        %5186 = vmatpush.bf16.msra.mxu0 0
        %5187 = vmatpush.bf16.msra.mxu0 0
        %5188 = vmatpush.bf16.msra.mxu0 0
        %5189 = vmatpush.bf16.msra.mxu0 0
        %5190 = vmatpush.bf16.msra.mxu0 0
        %5191 = vmatpush.bf16.msra.mxu0 %v5161
        %5192 = vmatmul.bf16.gmra.mxu0 %v5179
        %v5193 = vpop.f32.mrf.mxu0
        %v5194 = vadd.f32 0.0, %v5193
        %v5195 = vpop.f32.mrf.mxu0
        %v5196 = vadd.f32 0.0, %v5195
        %5197 = vmatmul.bf16.gmra.mxu0 %v5182
        %v5198 = vpop.f32.mrf.mxu0
        %v5199 = vadd.f32 0.0, %v5198
        %v5200 = vpop.f32.mrf.mxu0
        %v5201 = vadd.f32 0.0, %v5200
        %5202 = vdwg.mxu0
        %5203 = vmatpush.bf16.msra.mxu0 0
        %5204 = vmatpush.bf16.msra.mxu0 0
        %5205 = vmatpush.bf16.msra.mxu0 0
        %5206 = vmatpush.bf16.msra.mxu0 0
        %5207 = vmatpush.bf16.msra.mxu0 0
        %5208 = vmatpush.bf16.msra.mxu0 0
        %5209 = vmatpush.bf16.msra.mxu0 0
        %5210 = vmatpush.bf16.msra.mxu0 %v5162
        %5211 = vmatmul.bf16.gmra.mxu0 %v5179
        %v5212 = vpop.f32.mrf.mxu0
        %v5213 = vadd.f32 0.0, %v5212
        %v5214 = vpop.f32.mrf.mxu0
        %v5215 = vadd.f32 0.0, %v5214
        %5216 = vmatmul.bf16.gmra.mxu0 %v5182
        %v5217 = vpop.f32.mrf.mxu0
        %v5218 = vadd.f32 0.0, %v5217
        %v5219 = vpop.f32.mrf.mxu0
        %v5220 = vadd.f32 0.0, %v5219
        %5221 = vdwg.mxu0
        %v5222 = vpack.c.bf16 %v5196, %v5194
        %v5223 = vpack.c.bf16 %v5215, %v5213
        %v5224 = vpack.c.bf16 %v5201, %v5199
        %v5225 = vpack.c.bf16 %v5220, %v5218
        %v5226 = vld [vmem:[#allocation9] sm:$0xf]
        %v5227 = vld [vmem:[#allocation9 + $0x4] sm:$0xf]
        %v5228 = vld [vmem:[#allocation9 + $0x8] sm:$0xf]
        %v5229 = vld [vmem:[#allocation9 + $0xc] sm:$0xf]
        %v5230 = vld [vmem:[#allocation9 + $0x10] sm:$0xf]
        %v5231 = vld [vmem:[#allocation9 + $0x14] sm:$0xf]
        %v5232 = vld [vmem:[#allocation9 + $0x18] sm:$0xf]
        %v5233 = vld [vmem:[#allocation9 + $0x1c] sm:$0xf]
        %v5234 = vld [vmem:[#allocation9 + $0x20] sm:$0xf]
        %v5235 = vld [vmem:[#allocation9 + $0x24] sm:$0xf]
        %v5236 = vld [vmem:[#allocation9 + $0x28] sm:$0xf]
        %v5237 = vld [vmem:[#allocation9 + $0x2c] sm:$0xf]
        %v5238 = vld [vmem:[#allocation9 + $0x30] sm:$0xf]
        %v5239 = vld [vmem:[#allocation9 + $0x34] sm:$0xf]
        %v5240 = vld [vmem:[#allocation9 + $0x38] sm:$0xf]
        %v5241 = vld [vmem:[#allocation9 + $0x3c] sm:$0xf]
        %v5242 = vld [vmem:[#allocation9 + $0x40] sm:$0xf]
        %v5243 = vld [vmem:[#allocation9 + $0x44] sm:$0xf]
        %v5244 = vld [vmem:[#allocation9 + $0x48] sm:$0xf]
        %v5245 = vld [vmem:[#allocation9 + $0x4c] sm:$0xf]
        %v5246 = vld [vmem:[#allocation9 + $0x50] sm:$0xf]
        %v5247 = vld [vmem:[#allocation9 + $0x54] sm:$0xf]
        %v5248 = vld [vmem:[#allocation9 + $0x58] sm:$0xf]
        %v5249 = vld [vmem:[#allocation9 + $0x5c] sm:$0xf]
        %v5274 = vunpack.c.l.b16 %v5226
        %v5275 = vunpack.c.l.b16 %v5227
        %v5276 = vunpack.c.l.b16 %v5228
        %v5277 = vunpack.c.l.b16 %v5229
        %v5278 = vunpack.c.l.b16 %v5230
        %v5279 = vunpack.c.l.b16 %v5231
        %v5280 = vunpack.c.l.b16 %v5232
        %v5281 = vunpack.c.l.b16 %v5233
        %v5282 = vunpack.c.l.b16 %v5234
        %v5283 = vunpack.c.l.b16 %v5235
        %v5284 = vunpack.c.l.b16 %v5236
        %v5285 = vunpack.c.l.b16 %v5237
        %v5286 = vunpack.c.l.b16 %v5238
        %v5287 = vunpack.c.l.b16 %v5239
        %v5288 = vunpack.c.l.b16 %v5240
        %v5289 = vunpack.c.l.b16 %v5241
        %v5290 = vunpack.c.l.b16 %v5242
        %v5291 = vunpack.c.l.b16 %v5243
        %v5292 = vunpack.c.l.b16 %v5244
        %v5293 = vunpack.c.l.b16 %v5245
        %v5294 = vunpack.c.l.b16 %v5246
        %v5295 = vunpack.c.l.b16 %v5247
        %v5296 = vunpack.c.l.b16 %v5248
        %v5297 = vunpack.c.l.b16 %v5249
        %v5298 = vpack.c.b16 %v5275, %v5274
        %v5299 = vpack.c.b16 %v5277, %v5276
        %v5300 = vpack.c.b16 %v5279, %v5278
        %v5301 = vpack.c.b16 %v5281, %v5280
        %v5302 = vpack.c.b16 %v5283, %v5282
        %v5303 = vpack.c.b16 %v5285, %v5284
        %v5304 = vpack.c.b16 %v5287, %v5286
        %v5305 = vpack.c.b16 %v5289, %v5288
        %v5306 = vpack.c.b16 %v5291, %v5290
        %v5307 = vpack.c.b16 %v5293, %v5292
        %v5308 = vpack.c.b16 %v5295, %v5294
        %v5309 = vpack.c.b16 %v5297, %v5296
        %v5323 = vsel %vm1459, %v5223, 0
        %v5326 = vsel %vm1459, %v5225, 0
        %5328 = vmatpush.bf16.msra.mxu0 %v5305
        %5329 = vmatpush.bf16.msra.mxu0 %v5304
        %5330 = vmatpush.bf16.msra.mxu0 %v5303
        %5331 = vmatpush.bf16.msra.mxu0 %v5302
        %5332 = vmatpush.bf16.msra.mxu0 %v5301
        %5333 = vmatpush.bf16.msra.mxu0 %v5300
        %5334 = vmatpush.bf16.msra.mxu0 %v5299
        %5335 = vmatpush.bf16.msra.mxu0 %v5298
        %5336 = vmatmul.bf16.gmra.mxu0 %v5222
        %v5337 = vpop.f32.mrf.mxu0
        %v5338 = vadd.f32 0.0, %v5337
        %v5339 = vpop.f32.mrf.mxu0
        %v5340 = vadd.f32 0.0, %v5339
        %5341 = vmatmul.bf16.gmra.mxu0 %v5224
        %v5342 = vpop.f32.mrf.mxu0
        %v5343 = vadd.f32 0.0, %v5342
        %v5344 = vpop.f32.mrf.mxu0
        %v5345 = vadd.f32 0.0, %v5344
        %5346 = vdwg.mxu0
        %5347 = vmatpush.bf16.msra.mxu0 0
        %5348 = vmatpush.bf16.msra.mxu0 0
        %5349 = vmatpush.bf16.msra.mxu0 0
        %5350 = vmatpush.bf16.msra.mxu0 0
        %5351 = vmatpush.bf16.msra.mxu0 %v5309
        %5352 = vmatpush.bf16.msra.mxu0 %v5308
        %5353 = vmatpush.bf16.msra.mxu0 %v5307
        %5354 = vmatpush.bf16.msra.mxu0 %v5306
        %5355 = vmatmul.bf16.gmra.mxu0 %v5323
        %v5356 = vpop.f32.mrf.mxu0
        %v5357 = vadd.f32 %v5338, %v5356
        %v5358 = vpop.f32.mrf.mxu0
        %v5359 = vadd.f32 %v5340, %v5358
        %5360 = vmatmul.bf16.gmra.mxu0 %v5326
        %v5361 = vpop.f32.mrf.mxu0
        %v5362 = vadd.f32 %v5343, %v5361
        %v5363 = vpop.f32.mrf.mxu0
        %v5364 = vadd.f32 %v5345, %v5363
        %5365 = vdwg.mxu0
        %v5367 = vperm.slane %v5163, 0
        %v5369 = vadd.f32 %v5367, %v5357
        %v5370 = vadd.f32 %v5367, %v5359
        %v5371 = vadd.f32 %v5367, %v5362
        %v5372 = vadd.f32 %v5367, %v5364
        %s5373 = scalar_lea.vmem %s16, 16
        %v5374 = vld [vmem:[%s5373] sm:$0xf]
        %v5375 = vld [vmem:[%s5373 + $0x4] sm:$0xf]
        %v5376 = vld [vmem:[%s5373 + $0x8] sm:$0xf]
        %v5377 = vld [vmem:[%s5373 + $0xc] sm:$0xf]
        %v5382 = vunpack.c.l.b16 %v5374
        %v5383 = vunpack.c.l.b16 %v5375
        %v5384 = vunpack.c.l.b16 %v5376
        %v5385 = vunpack.c.l.b16 %v5377
        %v5386 = vpack.c.b16 %v5383, %v5382
        %v5387 = vpack.c.b16 %v5385, %v5384
        %v5389 = vsel %vm1283, %v5386, 0
        %v5392 = vsel %vm1283, %v5387, 0
        %5394 = vmatpush.bf16.msra.mxu0 0
        %5395 = vmatpush.bf16.msra.mxu0 0
        %5396 = vmatpush.bf16.msra.mxu0 0
        %5397 = vmatpush.bf16.msra.mxu0 0
        %5398 = vmatpush.bf16.msra.mxu0 0
        %5399 = vmatpush.bf16.msra.mxu0 0
        %5400 = vmatpush.bf16.msra.mxu0 0
        %5401 = vmatpush.bf16.msra.mxu0 %v5161
        %5402 = vmatmul.bf16.gmra.mxu0 %v5389
        %v5403 = vpop.f32.mrf.mxu0
        %v5404 = vadd.f32 0.0, %v5403
        %v5405 = vpop.f32.mrf.mxu0
        %v5406 = vadd.f32 0.0, %v5405
        %5407 = vmatmul.bf16.gmra.mxu0 %v5392
        %v5408 = vpop.f32.mrf.mxu0
        %v5409 = vadd.f32 0.0, %v5408
        %v5410 = vpop.f32.mrf.mxu0
        %v5411 = vadd.f32 0.0, %v5410
        %5412 = vdwg.mxu0
        %5413 = vmatpush.bf16.msra.mxu0 0
        %5414 = vmatpush.bf16.msra.mxu0 0
        %5415 = vmatpush.bf16.msra.mxu0 0
        %5416 = vmatpush.bf16.msra.mxu0 0
        %5417 = vmatpush.bf16.msra.mxu0 0
        %5418 = vmatpush.bf16.msra.mxu0 0
        %5419 = vmatpush.bf16.msra.mxu0 0
        %5420 = vmatpush.bf16.msra.mxu0 %v5162
        %5421 = vmatmul.bf16.gmra.mxu0 %v5389
        %v5422 = vpop.f32.mrf.mxu0
        %v5423 = vadd.f32 0.0, %v5422
        %v5424 = vpop.f32.mrf.mxu0
        %v5425 = vadd.f32 0.0, %v5424
        %5426 = vmatmul.bf16.gmra.mxu0 %v5392
        %v5427 = vpop.f32.mrf.mxu0
        %v5428 = vadd.f32 0.0, %v5427
        %v5429 = vpop.f32.mrf.mxu0
        %v5430 = vadd.f32 0.0, %v5429
        %5431 = vdwg.mxu0
        %v5432 = vpack.c.bf16 %v5406, %v5404
        %v5433 = vpack.c.bf16 %v5425, %v5423
        %v5434 = vpack.c.bf16 %v5411, %v5409
        %v5435 = vpack.c.bf16 %v5430, %v5428
        %s5436 = scalar_lea.vmem [#allocation9], 96
        %v5437 = vld [vmem:[%s5436] sm:$0xf]
        %v5438 = vld [vmem:[%s5436 + $0x4] sm:$0xf]
        %v5439 = vld [vmem:[%s5436 + $0x8] sm:$0xf]
        %v5440 = vld [vmem:[%s5436 + $0xc] sm:$0xf]
        %v5441 = vld [vmem:[%s5436 + $0x10] sm:$0xf]
        %v5442 = vld [vmem:[%s5436 + $0x14] sm:$0xf]
        %v5443 = vld [vmem:[%s5436 + $0x18] sm:$0xf]
        %v5444 = vld [vmem:[%s5436 + $0x1c] sm:$0xf]
        %v5445 = vld [vmem:[%s5436 + $0x20] sm:$0xf]
        %v5446 = vld [vmem:[%s5436 + $0x24] sm:$0xf]
        %v5447 = vld [vmem:[%s5436 + $0x28] sm:$0xf]
        %v5448 = vld [vmem:[%s5436 + $0x2c] sm:$0xf]
        %v5449 = vld [vmem:[%s5436 + $0x30] sm:$0xf]
        %v5450 = vld [vmem:[%s5436 + $0x34] sm:$0xf]
        %v5451 = vld [vmem:[%s5436 + $0x38] sm:$0xf]
        %v5452 = vld [vmem:[%s5436 + $0x3c] sm:$0xf]
        %v5453 = vld [vmem:[%s5436 + $0x40] sm:$0xf]
        %v5454 = vld [vmem:[%s5436 + $0x44] sm:$0xf]
        %v5455 = vld [vmem:[%s5436 + $0x48] sm:$0xf]
        %v5456 = vld [vmem:[%s5436 + $0x4c] sm:$0xf]
        %v5457 = vld [vmem:[%s5436 + $0x50] sm:$0xf]
        %v5458 = vld [vmem:[%s5436 + $0x54] sm:$0xf]
        %v5459 = vld [vmem:[%s5436 + $0x58] sm:$0xf]
        %v5460 = vld [vmem:[%s5436 + $0x5c] sm:$0xf]
        %v5485 = vunpack.c.l.b16 %v5437
        %v5486 = vunpack.c.l.b16 %v5438
        %v5487 = vunpack.c.l.b16 %v5439
        %v5488 = vunpack.c.l.b16 %v5440
        %v5489 = vunpack.c.l.b16 %v5441
        %v5490 = vunpack.c.l.b16 %v5442
        %v5491 = vunpack.c.l.b16 %v5443
        %v5492 = vunpack.c.l.b16 %v5444
        %v5493 = vunpack.c.l.b16 %v5445
        %v5494 = vunpack.c.l.b16 %v5446
        %v5495 = vunpack.c.l.b16 %v5447
        %v5496 = vunpack.c.l.b16 %v5448
        %v5497 = vunpack.c.l.b16 %v5449
        %v5498 = vunpack.c.l.b16 %v5450
        %v5499 = vunpack.c.l.b16 %v5451
        %v5500 = vunpack.c.l.b16 %v5452
        %v5501 = vunpack.c.l.b16 %v5453
        %v5502 = vunpack.c.l.b16 %v5454
        %v5503 = vunpack.c.l.b16 %v5455
        %v5504 = vunpack.c.l.b16 %v5456
        %v5505 = vunpack.c.l.b16 %v5457
        %v5506 = vunpack.c.l.b16 %v5458
        %v5507 = vunpack.c.l.b16 %v5459
        %v5508 = vunpack.c.l.b16 %v5460
        %v5509 = vpack.c.b16 %v5486, %v5485
        %v5510 = vpack.c.b16 %v5488, %v5487
        %v5511 = vpack.c.b16 %v5490, %v5489
        %v5512 = vpack.c.b16 %v5492, %v5491
        %v5513 = vpack.c.b16 %v5494, %v5493
        %v5514 = vpack.c.b16 %v5496, %v5495
        %v5515 = vpack.c.b16 %v5498, %v5497
        %v5516 = vpack.c.b16 %v5500, %v5499
        %v5517 = vpack.c.b16 %v5502, %v5501
        %v5518 = vpack.c.b16 %v5504, %v5503
        %v5519 = vpack.c.b16 %v5506, %v5505
        %v5520 = vpack.c.b16 %v5508, %v5507
        %v5534 = vsel %vm1459, %v5433, 0
        %v5537 = vsel %vm1459, %v5435, 0
        %5539 = vmatpush.bf16.msra.mxu0 %v5516
        %5540 = vmatpush.bf16.msra.mxu0 %v5515
        %5541 = vmatpush.bf16.msra.mxu0 %v5514
        %5542 = vmatpush.bf16.msra.mxu0 %v5513
        %5543 = vmatpush.bf16.msra.mxu0 %v5512
        %5544 = vmatpush.bf16.msra.mxu0 %v5511
        %5545 = vmatpush.bf16.msra.mxu0 %v5510
        %5546 = vmatpush.bf16.msra.mxu0 %v5509
        %5547 = vmatmul.bf16.gmra.mxu0 %v5432
        %v5548 = vpop.f32.mrf.mxu0
        %v5549 = vadd.f32 0.0, %v5548
        %v5550 = vpop.f32.mrf.mxu0
        %v5551 = vadd.f32 0.0, %v5550
        %5552 = vmatmul.bf16.gmra.mxu0 %v5434
        %v5553 = vpop.f32.mrf.mxu0
        %v5554 = vadd.f32 0.0, %v5553
        %v5555 = vpop.f32.mrf.mxu0
        %v5556 = vadd.f32 0.0, %v5555
        %5557 = vdwg.mxu0
        %5558 = vmatpush.bf16.msra.mxu0 0
        %5559 = vmatpush.bf16.msra.mxu0 0
        %5560 = vmatpush.bf16.msra.mxu0 0
        %5561 = vmatpush.bf16.msra.mxu0 0
        %5562 = vmatpush.bf16.msra.mxu0 %v5520
        %5563 = vmatpush.bf16.msra.mxu0 %v5519
        %5564 = vmatpush.bf16.msra.mxu0 %v5518
        %5565 = vmatpush.bf16.msra.mxu0 %v5517
        %5566 = vmatmul.bf16.gmra.mxu0 %v5534
        %v5567 = vpop.f32.mrf.mxu0
        %v5568 = vadd.f32 %v5549, %v5567
        %v5569 = vpop.f32.mrf.mxu0
        %v5570 = vadd.f32 %v5551, %v5569
        %5571 = vmatmul.bf16.gmra.mxu0 %v5537
        %v5572 = vpop.f32.mrf.mxu0
        %v5573 = vadd.f32 %v5554, %v5572
        %v5574 = vpop.f32.mrf.mxu0
        %v5575 = vadd.f32 %v5556, %v5574
        %5576 = vdwg.mxu0
        %v5577 = vadd.f32 %v5369, %v5568
        %v5578 = vadd.f32 %v5370, %v5570
        %v5579 = vadd.f32 %v5371, %v5573
        %v5580 = vadd.f32 %v5372, %v5575
        %s5581 = scalar_lea.vmem %s16, 32
        %v5582 = vld [vmem:[%s5581] sm:$0xf]
        %v5583 = vld [vmem:[%s5581 + $0x4] sm:$0xf]
        %v5584 = vld [vmem:[%s5581 + $0x8] sm:$0xf]
        %v5585 = vld [vmem:[%s5581 + $0xc] sm:$0xf]
        %v5590 = vunpack.c.l.b16 %v5582
        %v5591 = vunpack.c.l.b16 %v5583
        %v5592 = vunpack.c.l.b16 %v5584
        %v5593 = vunpack.c.l.b16 %v5585
        %v5594 = vpack.c.b16 %v5591, %v5590
        %v5595 = vpack.c.b16 %v5593, %v5592
        %v5597 = vsel %vm1283, %v5594, 0
        %v5600 = vsel %vm1283, %v5595, 0
        %5602 = vmatpush.bf16.msra.mxu0 0
        %5603 = vmatpush.bf16.msra.mxu0 0
        %5604 = vmatpush.bf16.msra.mxu0 0
        %5605 = vmatpush.bf16.msra.mxu0 0
        %5606 = vmatpush.bf16.msra.mxu0 0
        %5607 = vmatpush.bf16.msra.mxu0 0
        %5608 = vmatpush.bf16.msra.mxu0 0
        %5609 = vmatpush.bf16.msra.mxu0 %v5161
        %5610 = vmatmul.bf16.gmra.mxu0 %v5597
        %v5611 = vpop.f32.mrf.mxu0
        %v5612 = vadd.f32 0.0, %v5611
        %v5613 = vpop.f32.mrf.mxu0
        %v5614 = vadd.f32 0.0, %v5613
        %5615 = vmatmul.bf16.gmra.mxu0 %v5600
        %v5616 = vpop.f32.mrf.mxu0
        %v5617 = vadd.f32 0.0, %v5616
        %v5618 = vpop.f32.mrf.mxu0
        %v5619 = vadd.f32 0.0, %v5618
        %5620 = vdwg.mxu0
        %5621 = vmatpush.bf16.msra.mxu0 0
        %5622 = vmatpush.bf16.msra.mxu0 0
        %5623 = vmatpush.bf16.msra.mxu0 0
        %5624 = vmatpush.bf16.msra.mxu0 0
        %5625 = vmatpush.bf16.msra.mxu0 0
        %5626 = vmatpush.bf16.msra.mxu0 0
        %5627 = vmatpush.bf16.msra.mxu0 0
        %5628 = vmatpush.bf16.msra.mxu0 %v5162
        %5629 = vmatmul.bf16.gmra.mxu0 %v5597
        %v5630 = vpop.f32.mrf.mxu0
        %v5631 = vadd.f32 0.0, %v5630
        %v5632 = vpop.f32.mrf.mxu0
        %v5633 = vadd.f32 0.0, %v5632
        %5634 = vmatmul.bf16.gmra.mxu0 %v5600
        %v5635 = vpop.f32.mrf.mxu0
        %v5636 = vadd.f32 0.0, %v5635
        %v5637 = vpop.f32.mrf.mxu0
        %v5638 = vadd.f32 0.0, %v5637
        %5639 = vdwg.mxu0
        %v5640 = vpack.c.bf16 %v5614, %v5612
        %v5641 = vpack.c.bf16 %v5633, %v5631
        %v5642 = vpack.c.bf16 %v5619, %v5617
        %v5643 = vpack.c.bf16 %v5638, %v5636
        %s5644 = scalar_lea.vmem [#allocation9], 192
        %v5645 = vld [vmem:[%s5644] sm:$0xf]
        %v5646 = vld [vmem:[%s5644 + $0x4] sm:$0xf]
        %v5647 = vld [vmem:[%s5644 + $0x8] sm:$0xf]
        %v5648 = vld [vmem:[%s5644 + $0xc] sm:$0xf]
        %v5649 = vld [vmem:[%s5644 + $0x10] sm:$0xf]
        %v5650 = vld [vmem:[%s5644 + $0x14] sm:$0xf]
        %v5651 = vld [vmem:[%s5644 + $0x18] sm:$0xf]
        %v5652 = vld [vmem:[%s5644 + $0x1c] sm:$0xf]
        %v5653 = vld [vmem:[%s5644 + $0x20] sm:$0xf]
        %v5654 = vld [vmem:[%s5644 + $0x24] sm:$0xf]
        %v5655 = vld [vmem:[%s5644 + $0x28] sm:$0xf]
        %v5656 = vld [vmem:[%s5644 + $0x2c] sm:$0xf]
        %v5657 = vld [vmem:[%s5644 + $0x30] sm:$0xf]
        %v5658 = vld [vmem:[%s5644 + $0x34] sm:$0xf]
        %v5659 = vld [vmem:[%s5644 + $0x38] sm:$0xf]
        %v5660 = vld [vmem:[%s5644 + $0x3c] sm:$0xf]
        %v5661 = vld [vmem:[%s5644 + $0x40] sm:$0xf]
        %v5662 = vld [vmem:[%s5644 + $0x44] sm:$0xf]
        %v5663 = vld [vmem:[%s5644 + $0x48] sm:$0xf]
        %v5664 = vld [vmem:[%s5644 + $0x4c] sm:$0xf]
        %v5665 = vld [vmem:[%s5644 + $0x50] sm:$0xf]
        %v5666 = vld [vmem:[%s5644 + $0x54] sm:$0xf]
        %v5667 = vld [vmem:[%s5644 + $0x58] sm:$0xf]
        %v5668 = vld [vmem:[%s5644 + $0x5c] sm:$0xf]
        %v5693 = vunpack.c.l.b16 %v5645
        %v5694 = vunpack.c.l.b16 %v5646
        %v5695 = vunpack.c.l.b16 %v5647
        %v5696 = vunpack.c.l.b16 %v5648
        %v5697 = vunpack.c.l.b16 %v5649
        %v5698 = vunpack.c.l.b16 %v5650
        %v5699 = vunpack.c.l.b16 %v5651
        %v5700 = vunpack.c.l.b16 %v5652
        %v5701 = vunpack.c.l.b16 %v5653
        %v5702 = vunpack.c.l.b16 %v5654
        %v5703 = vunpack.c.l.b16 %v5655
        %v5704 = vunpack.c.l.b16 %v5656
        %v5705 = vunpack.c.l.b16 %v5657
        %v5706 = vunpack.c.l.b16 %v5658
        %v5707 = vunpack.c.l.b16 %v5659
        %v5708 = vunpack.c.l.b16 %v5660
        %v5709 = vunpack.c.l.b16 %v5661
        %v5710 = vunpack.c.l.b16 %v5662
        %v5711 = vunpack.c.l.b16 %v5663
        %v5712 = vunpack.c.l.b16 %v5664
        %v5713 = vunpack.c.l.b16 %v5665
        %v5714 = vunpack.c.l.b16 %v5666
        %v5715 = vunpack.c.l.b16 %v5667
        %v5716 = vunpack.c.l.b16 %v5668
        %v5717 = vpack.c.b16 %v5694, %v5693
        %v5718 = vpack.c.b16 %v5696, %v5695
        %v5719 = vpack.c.b16 %v5698, %v5697
        %v5720 = vpack.c.b16 %v5700, %v5699
        %v5721 = vpack.c.b16 %v5702, %v5701
        %v5722 = vpack.c.b16 %v5704, %v5703
        %v5723 = vpack.c.b16 %v5706, %v5705
        %v5724 = vpack.c.b16 %v5708, %v5707
        %v5725 = vpack.c.b16 %v5710, %v5709
        %v5726 = vpack.c.b16 %v5712, %v5711
        %v5727 = vpack.c.b16 %v5714, %v5713
        %v5728 = vpack.c.b16 %v5716, %v5715
        %v5742 = vsel %vm1459, %v5641, 0
        %v5745 = vsel %vm1459, %v5643, 0
        %5747 = vmatpush.bf16.msra.mxu0 %v5724
        %5748 = vmatpush.bf16.msra.mxu0 %v5723
        %5749 = vmatpush.bf16.msra.mxu0 %v5722
        %5750 = vmatpush.bf16.msra.mxu0 %v5721
        %5751 = vmatpush.bf16.msra.mxu0 %v5720
        %5752 = vmatpush.bf16.msra.mxu0 %v5719
        %5753 = vmatpush.bf16.msra.mxu0 %v5718
        %5754 = vmatpush.bf16.msra.mxu0 %v5717
        %5755 = vmatmul.bf16.gmra.mxu0 %v5640
        %v5756 = vpop.f32.mrf.mxu0
        %v5757 = vadd.f32 0.0, %v5756
        %v5758 = vpop.f32.mrf.mxu0
        %v5759 = vadd.f32 0.0, %v5758
        %5760 = vmatmul.bf16.gmra.mxu0 %v5642
        %v5761 = vpop.f32.mrf.mxu0
        %v5762 = vadd.f32 0.0, %v5761
        %v5763 = vpop.f32.mrf.mxu0
        %v5764 = vadd.f32 0.0, %v5763
        %5765 = vdwg.mxu0
        %5766 = vmatpush.bf16.msra.mxu0 0
        %5767 = vmatpush.bf16.msra.mxu0 0
        %5768 = vmatpush.bf16.msra.mxu0 0
        %5769 = vmatpush.bf16.msra.mxu0 0
        %5770 = vmatpush.bf16.msra.mxu0 %v5728
        %5771 = vmatpush.bf16.msra.mxu0 %v5727
        %5772 = vmatpush.bf16.msra.mxu0 %v5726
        %5773 = vmatpush.bf16.msra.mxu0 %v5725
        %5774 = vmatmul.bf16.gmra.mxu0 %v5742
        %v5775 = vpop.f32.mrf.mxu0
        %v5776 = vadd.f32 %v5757, %v5775
        %v5777 = vpop.f32.mrf.mxu0
        %v5778 = vadd.f32 %v5759, %v5777
        %5779 = vmatmul.bf16.gmra.mxu0 %v5745
        %v5780 = vpop.f32.mrf.mxu0
        %v5781 = vadd.f32 %v5762, %v5780
        %v5782 = vpop.f32.mrf.mxu0
        %v5783 = vadd.f32 %v5764, %v5782
        %5784 = vdwg.mxu0
        %v5785 = vadd.f32 %v5577, %v5776
        %v5786 = vadd.f32 %v5578, %v5778
        %v5787 = vadd.f32 %v5579, %v5781
        %v5788 = vadd.f32 %v5580, %v5783
        %s5789 = scalar_lea.vmem %s16, 48
        %v5790 = vld [vmem:[%s5789] sm:$0xf]
        %v5791 = vld [vmem:[%s5789 + $0x4] sm:$0xf]
        %v5792 = vld [vmem:[%s5789 + $0x8] sm:$0xf]
        %v5793 = vld [vmem:[%s5789 + $0xc] sm:$0xf]
        %v5798 = vunpack.c.l.b16 %v5790
        %v5799 = vunpack.c.l.b16 %v5791
        %v5800 = vunpack.c.l.b16 %v5792
        %v5801 = vunpack.c.l.b16 %v5793
        %v5802 = vpack.c.b16 %v5799, %v5798
        %v5803 = vpack.c.b16 %v5801, %v5800
        %v5805 = vsel %vm1283, %v5802, 0
        %v5808 = vsel %vm1283, %v5803, 0
        %5810 = vmatpush.bf16.msra.mxu0 0
        %5811 = vmatpush.bf16.msra.mxu0 0
        %5812 = vmatpush.bf16.msra.mxu0 0
        %5813 = vmatpush.bf16.msra.mxu0 0
        %5814 = vmatpush.bf16.msra.mxu0 0
        %5815 = vmatpush.bf16.msra.mxu0 0
        %5816 = vmatpush.bf16.msra.mxu0 0
        %5817 = vmatpush.bf16.msra.mxu0 %v5161
        %5818 = vmatmul.bf16.gmra.mxu0 %v5805
        %v5819 = vpop.f32.mrf.mxu0
        %v5820 = vadd.f32 0.0, %v5819
        %v5821 = vpop.f32.mrf.mxu0
        %v5822 = vadd.f32 0.0, %v5821
        %5823 = vmatmul.bf16.gmra.mxu0 %v5808
        %v5824 = vpop.f32.mrf.mxu0
        %v5825 = vadd.f32 0.0, %v5824
        %v5826 = vpop.f32.mrf.mxu0
        %v5827 = vadd.f32 0.0, %v5826
        %5828 = vdwg.mxu0
        %5829 = vmatpush.bf16.msra.mxu0 0
        %5830 = vmatpush.bf16.msra.mxu0 0
        %5831 = vmatpush.bf16.msra.mxu0 0
        %5832 = vmatpush.bf16.msra.mxu0 0
        %5833 = vmatpush.bf16.msra.mxu0 0
        %5834 = vmatpush.bf16.msra.mxu0 0
        %5835 = vmatpush.bf16.msra.mxu0 0
        %5836 = vmatpush.bf16.msra.mxu0 %v5162
        %5837 = vmatmul.bf16.gmra.mxu0 %v5805
        %v5838 = vpop.f32.mrf.mxu0
        %v5839 = vadd.f32 0.0, %v5838
        %v5840 = vpop.f32.mrf.mxu0
        %v5841 = vadd.f32 0.0, %v5840
        %5842 = vmatmul.bf16.gmra.mxu0 %v5808
        %v5843 = vpop.f32.mrf.mxu0
        %v5844 = vadd.f32 0.0, %v5843
        %v5845 = vpop.f32.mrf.mxu0
        %v5846 = vadd.f32 0.0, %v5845
        %5847 = vdwg.mxu0
        %v5848 = vpack.c.bf16 %v5822, %v5820
        %v5849 = vpack.c.bf16 %v5841, %v5839
        %v5850 = vpack.c.bf16 %v5827, %v5825
        %v5851 = vpack.c.bf16 %v5846, %v5844
        %s5852 = scalar_lea.vmem [#allocation9], 288
        %v5853 = vld [vmem:[%s5852] sm:$0xf]
        %v5854 = vld [vmem:[%s5852 + $0x4] sm:$0xf]
        %v5855 = vld [vmem:[%s5852 + $0x8] sm:$0xf]
        %v5856 = vld [vmem:[%s5852 + $0xc] sm:$0xf]
        %v5857 = vld [vmem:[%s5852 + $0x10] sm:$0xf]
        %v5858 = vld [vmem:[%s5852 + $0x14] sm:$0xf]
        %v5859 = vld [vmem:[%s5852 + $0x18] sm:$0xf]
        %v5860 = vld [vmem:[%s5852 + $0x1c] sm:$0xf]
        %v5861 = vld [vmem:[%s5852 + $0x20] sm:$0xf]
        %v5862 = vld [vmem:[%s5852 + $0x24] sm:$0xf]
        %v5863 = vld [vmem:[%s5852 + $0x28] sm:$0xf]
        %v5864 = vld [vmem:[%s5852 + $0x2c] sm:$0xf]
        %v5865 = vld [vmem:[%s5852 + $0x30] sm:$0xf]
        %v5866 = vld [vmem:[%s5852 + $0x34] sm:$0xf]
        %v5867 = vld [vmem:[%s5852 + $0x38] sm:$0xf]
        %v5868 = vld [vmem:[%s5852 + $0x3c] sm:$0xf]
        %v5869 = vld [vmem:[%s5852 + $0x40] sm:$0xf]
        %v5870 = vld [vmem:[%s5852 + $0x44] sm:$0xf]
        %v5871 = vld [vmem:[%s5852 + $0x48] sm:$0xf]
        %v5872 = vld [vmem:[%s5852 + $0x4c] sm:$0xf]
        %v5873 = vld [vmem:[%s5852 + $0x50] sm:$0xf]
        %v5874 = vld [vmem:[%s5852 + $0x54] sm:$0xf]
        %v5875 = vld [vmem:[%s5852 + $0x58] sm:$0xf]
        %v5876 = vld [vmem:[%s5852 + $0x5c] sm:$0xf]
        %v5901 = vunpack.c.l.b16 %v5853
        %v5902 = vunpack.c.l.b16 %v5854
        %v5903 = vunpack.c.l.b16 %v5855
        %v5904 = vunpack.c.l.b16 %v5856
        %v5905 = vunpack.c.l.b16 %v5857
        %v5906 = vunpack.c.l.b16 %v5858
        %v5907 = vunpack.c.l.b16 %v5859
        %v5908 = vunpack.c.l.b16 %v5860
        %v5909 = vunpack.c.l.b16 %v5861
        %v5910 = vunpack.c.l.b16 %v5862
        %v5911 = vunpack.c.l.b16 %v5863
        %v5912 = vunpack.c.l.b16 %v5864
        %v5913 = vunpack.c.l.b16 %v5865
        %v5914 = vunpack.c.l.b16 %v5866
        %v5915 = vunpack.c.l.b16 %v5867
        %v5916 = vunpack.c.l.b16 %v5868
        %v5917 = vunpack.c.l.b16 %v5869
        %v5918 = vunpack.c.l.b16 %v5870
        %v5919 = vunpack.c.l.b16 %v5871
        %v5920 = vunpack.c.l.b16 %v5872
        %v5921 = vunpack.c.l.b16 %v5873
        %v5922 = vunpack.c.l.b16 %v5874
        %v5923 = vunpack.c.l.b16 %v5875
        %v5924 = vunpack.c.l.b16 %v5876
        %v5925 = vpack.c.b16 %v5902, %v5901
        %v5926 = vpack.c.b16 %v5904, %v5903
        %v5927 = vpack.c.b16 %v5906, %v5905
        %v5928 = vpack.c.b16 %v5908, %v5907
        %v5929 = vpack.c.b16 %v5910, %v5909
        %v5930 = vpack.c.b16 %v5912, %v5911
        %v5931 = vpack.c.b16 %v5914, %v5913
        %v5932 = vpack.c.b16 %v5916, %v5915
        %v5933 = vpack.c.b16 %v5918, %v5917
        %v5934 = vpack.c.b16 %v5920, %v5919
        %v5935 = vpack.c.b16 %v5922, %v5921
        %v5936 = vpack.c.b16 %v5924, %v5923
        %v5950 = vsel %vm1459, %v5849, 0
        %v5953 = vsel %vm1459, %v5851, 0
        %5955 = vmatpush.bf16.msra.mxu0 %v5932
        %5956 = vmatpush.bf16.msra.mxu0 %v5931
        %5957 = vmatpush.bf16.msra.mxu0 %v5930
        %5958 = vmatpush.bf16.msra.mxu0 %v5929
        %5959 = vmatpush.bf16.msra.mxu0 %v5928
        %5960 = vmatpush.bf16.msra.mxu0 %v5927
        %5961 = vmatpush.bf16.msra.mxu0 %v5926
        %5962 = vmatpush.bf16.msra.mxu0 %v5925
        %5963 = vmatmul.bf16.gmra.mxu0 %v5848
        %v5964 = vpop.f32.mrf.mxu0
        %v5965 = vadd.f32 0.0, %v5964
        %v5966 = vpop.f32.mrf.mxu0
        %v5967 = vadd.f32 0.0, %v5966
        %5968 = vmatmul.bf16.gmra.mxu0 %v5850
        %v5969 = vpop.f32.mrf.mxu0
        %v5970 = vadd.f32 0.0, %v5969
        %v5971 = vpop.f32.mrf.mxu0
        %v5972 = vadd.f32 0.0, %v5971
        %5973 = vdwg.mxu0
        %5974 = vmatpush.bf16.msra.mxu0 0
        %5975 = vmatpush.bf16.msra.mxu0 0
        %5976 = vmatpush.bf16.msra.mxu0 0
        %5977 = vmatpush.bf16.msra.mxu0 0
        %5978 = vmatpush.bf16.msra.mxu0 %v5936
        %5979 = vmatpush.bf16.msra.mxu0 %v5935
        %5980 = vmatpush.bf16.msra.mxu0 %v5934
        %5981 = vmatpush.bf16.msra.mxu0 %v5933
        %5982 = vmatmul.bf16.gmra.mxu0 %v5950
        %v5983 = vpop.f32.mrf.mxu0
        %v5984 = vadd.f32 %v5965, %v5983
        %v5985 = vpop.f32.mrf.mxu0
        %v5986 = vadd.f32 %v5967, %v5985
        %5987 = vmatmul.bf16.gmra.mxu0 %v5953
        %v5988 = vpop.f32.mrf.mxu0
        %v5989 = vadd.f32 %v5970, %v5988
        %v5990 = vpop.f32.mrf.mxu0
        %v5991 = vadd.f32 %v5972, %v5990
        %5992 = vdwg.mxu0
        %v5993 = vadd.f32 %v5785, %v5984
        %v5994 = vadd.f32 %v5786, %v5986
        %v5995 = vadd.f32 %v5787, %v5989
        %v5996 = vadd.f32 %v5788, %v5991
        %v5997 = vtanh.pop %v5993
        %v5998 = vtanh.pop %v5994
        %v5999 = vtanh.pop %v5995
        %v6000 = vtanh.pop %v5996
        %6001 = vst.msk [vmem:[%s725] sm:$0xff] %vm832, %v5997
        %6002 = vst.msk [vmem:[%s725 + $0x8] sm:$0xff] %vm832, %v5998
        %6003 = vst.msk [vmem:[%s725 + $0x10] sm:$0xff] %vm832, %v5999
        %6004 = vst.msk [vmem:[%s725 + $0x18] sm:$0xff] %vm832, %v6000
        %p6005 = scmp.lt.s32.totalorder %s35, 1
        %s6006 = scalar_select %p6005, %s35, 1
        %s6007 = smul.addr %s6006, 2
        %s6008 = smul.addr %s6007, 4
        %s6009 = scalar_lea.vmem %s19, %s6008
        %p6010 = scmp.lt.s32.totalorder %s35, 1
        %s6011 = scalar_select %p6010, %s35, 1
        %s6012 = smul.addr %s6011, 4
        %s6013 = smul.addr %s6012, 8
        %s6014 = scalar_lea.vmem %s20, %s6013
        // Predicated region
        $region117: #{aucifar_forward.1} parent=95 // pred_check
          %p6015 = pneg %p457
        $region118: #{aucifar_forward.1} parent=95 // pred_check_branch
          %6017 = sbr.rel (%p6015) target = $region120
        $region119: #{aucifar_forward.1} parent=95 // pred_region
          _
        $region120: #{aucifar_forward.1} parent=95 // pred_fallthru
          _
        // Predicated region
        $region121: #{aucifar_forward.1} parent=95 // pred_check
          %p6018 = pneg %p483
        $region122: #{aucifar_forward.1} parent=95 // pred_check_branch
          %6020 = sbr.rel (%p6018) target = $region124
        $region123: #{aucifar_forward.1} parent=95 // pred_region
          _
        $region124: #{aucifar_forward.1} parent=95 // pred_fallthru
          _
      $region96: #{aucifar_forward.1} parent=5 // pred_fallthru
        _
      %p6021 = scmp.le.s32.totalorder 2, %s30
      // Predicated region
      $region125: #{aucifar_forward.1} parent=5 // pred_check
        %p6022 = pneg %p6021
      $region126: #{aucifar_forward.1} parent=5 // pred_check_branch
        %6024 = sbr.rel (%p6022) target = $region128
      $region127: #{aucifar_forward.1} parent=5 // pred_region
        %s6025 = ssub.s32 %s30, 2
        // Predicated region
        $region129: #{aucifar_forward.1} parent=127 // pred_check
          %p6026 = pneg %p463
        $region130: #{aucifar_forward.1} parent=127 // pred_check_branch
          %6028 = sbr.rel (%p6026) target = $region132
        $region131: #{aucifar_forward.1} parent=127 // pred_region
          %p6029 = scmp.lt.s32.totalorder %s36, 1
          %s6030 = scalar_select %p6029, %s36, 1
          %s6031 = smul.addr %s6030, 2
          %s6032 = smul.addr %s6031, 4
          %s6033 = scalar_lea.vmem %s19, %s6032
        $region132: #{aucifar_forward.1} parent=127 // pred_fallthru
          _
        // Predicated region
        $region133: #{aucifar_forward.1} parent=127 // pred_check
          %p6034 = pneg %p489
        $region134: #{aucifar_forward.1} parent=127 // pred_check_branch
          %6036 = sbr.rel (%p6034) target = $region136
        $region135: #{aucifar_forward.1} parent=127 // pred_region
          %p6037 = scmp.lt.s32.totalorder %s36, 1
          %s6038 = scalar_select %p6037, %s36, 1
          %s6039 = smul.addr %s6038, 4
          %s6040 = smul.addr %s6039, 8
          %s6041 = scalar_lea.vmem %s20, %s6040
        $region136: #{aucifar_forward.1} parent=127 // pred_fallthru
          _
      $region128: #{aucifar_forward.1} parent=5 // pred_fallthru
        _
    $region6: #{aucifar_forward.1} parent=1 // loop_footer
      %s34 = sadd.s32 1, %s30
    $region7: #{aucifar_forward.1} parent=1 // loop_footer_branch
      %29 = sbr.rel target = $region3
    $region8: #{aucifar_forward.1} parent=1 // loop_exit
      _
    %6042 = vsyncpa [#allocation3], 1
    %s6043 = scalar_lea.sflag [#allocation3], 1
    %6044 = vsyncpa %s6043, 1
    %6045 = vsyncpa [#allocation5], 1
    %6046 = vsyncpa [#allocation8], 1

</llo_original>
